<compile_context>
chip_gen: v7x
topology: tpu7x:2x2x1
jax: 0.10.0
libtpu: 0.0.40
codegen_flags: <defaults>
</compile_context>

<pallas_src>
import functools
import math

import numpy as np
import jax
import jax.numpy as jnp
from jax import lax
from jax.experimental import pallas as pl
from jax.experimental.pallas import tpu as pltpu

VMEM_SPEC = pl.BlockSpec(memory_space=pltpu.MemorySpace.VMEM)
SMEM_SPEC = pl.BlockSpec(memory_space=pltpu.MemorySpace.SMEM)

MXU_DTYPE = jnp.bfloat16   # matmul operand dtype (f32 accumulate / elementwise)


def _round_up(x, m):
    return ((x + m - 1) // m) * m


# ----------------------------------------------------------------------------
# Fused PolicyNet kernel: one invocation runs the whole sequential placement.
# ----------------------------------------------------------------------------
def _policy_kernel(has_up_ref, smax_ref, xpre_ref, colsum_ref, h0_ref, c0_ref,
                   big_ref, ac_ref, ops_ref, ups_ref, gum_ref,
                   place_ref, logp_ref,
                   c_sc, gh_sc, psm_sc,
                   *, dim, num_ops, num_slots, tanh_clip, off_e, off_u):
    f32 = jnp.float32
    d4 = 4 * dim

    # ---------------------- prologue: runs exactly once ----------------------
    c_sc[...] = c0_ref[...]                     # cell <- self.cell_state param
    psm_sc[...] = jnp.zeros_like(psm_sc)        # slot-max of already placed ops

    big = big_ref[...]        # [D, W] bf16 : [W_hh^T | ops^T | A_h] (padded)
    ops_bf = ops_ref[...]     # [N, D] bf16 (cast hoisted to the wrapper)
    ac = ac_ref[...]          # [D, S] bf16 : A_c (1/sqrt(D) folded in)
    colsum = colsum_ref[...]  # [1, 4D] f32 : ones @ W_ih^T (scalar-input term)

    # h0 @ W_hh^T for step 0 comes from the same fused RHS (extra lanes unused).
    big0 = jnp.dot(h0_ref[...].astype(big.dtype), big, preferred_element_type=f32)
    gh_sc[...] = big0[:, 0:d4]

    iota_ops = lax.broadcasted_iota(jnp.int32, (1, num_ops), 1)
    iota_slot = lax.broadcasted_iota(jnp.int32, (1, num_slots), 1)

    # ---------------------- sequential placement loop ------------------------
    # num_ops is small & static -> full unroll; recurrent state lives in VMEM.
    # TODO(synk): for large num_ops switch this Python unroll to lax.fori_loop.
    for i in range(num_ops):
        # Upstream-slot feedback. NOTE: matches the torch reference exactly —
        # torch.max over the *concatenated 1-D* upstream slot embeddings is a
        # single scalar (max over upstream ops AND embedding dims).
        mask = ups_ref[pl.ds(i, 1), :]                               # [1, N]
        masked = jnp.where(mask > 0.0, psm_sc[...], -jnp.inf)
        last = jnp.where(has_up_ref[i] > 0, jnp.max(masked), 0.0)    # scalar

        # LSTMCell with hoisted input projection (x = ops[i] + last*ones):
        #   gates = X_pre[i] (+bias) + last * colsum + h_{i-1} @ W_hh^T
        gates = xpre_ref[pl.ds(i, 1), :] + last * colsum + gh_sc[...]  # [1,4D]
        # Single sigmoid pass for all gates; g-block was pre-scaled by 2 so
        # tanh(g) == 2*sigmoid(2g) - 1.
        s = jax.nn.sigmoid(gates)
        i_g = s[:, 0:dim]
        f_g = s[:, dim:2 * dim]
        g_g = 2.0 * s[:, 2 * dim:3 * dim] - 1.0
        o_g = s[:, 3 * dim:4 * dim]
        c_new = f_g * c_sc[...] + i_g * g_g
        h_new = o_g * jnp.tanh(c_new)
        c_sc[...] = c_new

        # ONE fused MXU matmul for everything that consumes h:
        #   [ h @ W_hh^T (used next step) | attention scores e | u_h = h @ A_h ]
        fused = jnp.dot(h_new.astype(big.dtype), big, preferred_element_type=f32)
        gh_sc[...] = fused[:, 0:d4]
        e = fused[:, off_e:off_e + num_ops]                          # [1, N]
        u_h = fused[:, off_u:off_u + num_slots]                      # [1, S]

        # Temporal attention softmax along lanes; ctx on the MXU.
        ex = jnp.exp(e - jnp.max(e, axis=1, keepdims=True))
        alpha = ex / jnp.sum(ex, axis=1, keepdims=True)
        ctx = jnp.dot(alpha.astype(big.dtype), ops_bf,
                      preferred_element_type=f32)                    # [1, D]

        # LogProb head: Wq / Wk pre-composed into A_h / A_c (exact, linear).
        u = u_h + jnp.dot(ctx.astype(big.dtype), ac,
                          preferred_element_type=f32)                # [1, S]
        if tanh_clip > 0:
            u = tanh_clip * jnp.tanh(u)
            # |u| <= tanh_clip, so logsumexp is safe in f32 without the max.
            logp = u - jnp.log(jnp.sum(jnp.exp(u), axis=1, keepdims=True))
        else:
            um = jnp.max(u, axis=1, keepdims=True)
            logp = u - (um + jnp.log(jnp.sum(jnp.exp(u - um), axis=1,
                                             keepdims=True)))

        # Categorical sample via Gumbel-max with pre-generated noise.
        # TODO(synk): same distribution as torch.distributions.Categorical but
        # a different random stream (jax.random.gumbel, generated per forward).
        z = u + gum_ref[pl.ds(i, 1), :]
        action = jnp.min(jnp.where(z >= jnp.max(z, axis=1, keepdims=True),
                                   iota_slot, num_slots))            # int32
        chosen_logp = jnp.sum(jnp.where(iota_slot == action, logp, 0.0))

        # Commit step i fully on-device: scalar SMEM stores for the outputs,
        # scalar SMEM gather for the chosen slot's embedding-max.
        psm_sc[...] = jnp.where(iota_ops == i, smax_ref[action], psm_sc[...])
        place_ref[i] = action
        logp_ref[i] = chosen_logp


# ----------------------------------------------------------------------------
# Parameters / cached preprocessing (all hoisted out of the per-step loop).
# ----------------------------------------------------------------------------
def init_policy_params(key, dim):
    """PyTorch-style init: nn.LSTMCell, LogProb.w_q / w_k, cell_state param."""
    ks = jax.random.split(key, 6)

    def unif(k, shape, fan_in):
        b = 1.0 / math.sqrt(fan_in)
        return jax.random.uniform(k, shape, jnp.float32, -b, b)

    return {
        "W_ih": unif(ks[0], (4 * dim, dim), dim),
        "W_hh": unif(ks[1], (4 * dim, dim), dim),
        "b_ih": unif(ks[2], (4 * dim,), dim),
        "b_hh": unif(ks[3], (4 * dim,), dim),
        "Wq":   unif(ks[4], (dim, 2 * dim), 2 * dim),   # LogProb.w_q  [D, 2D]
        "Wk":   unif(ks[5], (dim, dim), dim),           # LogProb.w_k  [D, D]
        "cell_state": jnp.zeros((1, dim), jnp.float32),  # nn.Parameter(zeros)
    }


def prepare_policy_params(params):
    """One-time layout prep: transposes, fused gate bias, g-gate 2x pre-scale
    (enables the single-sigmoid gate pass), Wq split into h/ctx halves."""
    dim = params["Wk"].shape[0]
    # Scale the g-gate block by 2:  tanh(x) = 2*sigmoid(2x) - 1.
    scale = jnp.concatenate([jnp.ones((2 * dim,), jnp.float32),
                             2.0 * jnp.ones((dim,), jnp.float32),
                             jnp.ones((dim,), jnp.float32)])
    wih_t = jnp.asarray(params["W_ih"], jnp.float32).T * scale[None, :]  # [D,4D]
    whh_t = jnp.asarray(params["W_hh"], jnp.float32).T * scale[None, :]  # [D,4D]
    bias = ((params["b_ih"] + params["b_hh"]) * scale).reshape(1, 4 * dim)
    wq_t = jnp.asarray(params["Wq"], jnp.float32).T                       # [2D,D]
    return {
        "wih_t": wih_t,
        "whh_t": whh_t,
        "bias": bias.astype(jnp.float32),
        "wq_h": wq_t[:dim],                      # multiplies h
        "wq_c": wq_t[dim:],                      # multiplies ctx
        "wk": jnp.asarray(params["Wk"], jnp.float32),
        "c0": jnp.asarray(params["cell_state"], jnp.float32),
    }


def upstream_mask_from_edge_index(edge_index, num_ops):
    """mask[i, j] = 1 iff edge j -> i exists (op j is upstream of op i).
    Built once per graph on the host (cached preprocessing)."""
    src = np.asarray(edge_index[0]).astype(np.int64)
    dst = np.asarray(edge_index[1]).astype(np.int64)
    mask = np.zeros((num_ops, num_ops), np.float32)
    mask[dst, src] = 1.0
    return jnp.asarray(mask)


# ----------------------------------------------------------------------------
# PolicyNet forward: ONE fused pallas_call for the whole placement loop.
# ----------------------------------------------------------------------------
@functools.partial(jax.jit, static_argnames=("tanh_clip", "is_train"))
def policy_net_forward(prep, ops_embed, graph_embed, ups_mask, slots_embed,
                       rng_key, *, tanh_clip=10.0, is_train=True):
    """Returns (placement int32[num_ops], log_probs f32[num_ops]) on device.
    `is_train` is accepted for interface parity (sampling happens either way)."""
    del is_train
    num_ops, dim = ops_embed.shape
    num_slots = slots_embed.shape[0]
    f32 = jnp.float32

    ops = ops_embed.astype(f32)                              # [N, D]
    slots = slots_embed.astype(f32)                          # [S, D]
    h0 = graph_embed.reshape(1, dim).astype(f32)
    ups = ups_mask.astype(f32)

    # ---- once-per-forward hoisted precompute (XLA, outside the serial loop) --
    xpre = ops @ prep["wih_t"] + prep["bias"]                # [N, 4D] (bias fused)
    colsum = jnp.sum(prep["wih_t"], axis=0, keepdims=True)   # [1, 4D]
    kT = prep["wk"] @ slots.T                                # [D, S] = Wk @ slots^T
    inv_sqrt_d = 1.0 / math.sqrt(dim)
    a_h = (prep["wq_h"] @ kT) * inv_sqrt_d                   # [D, S]
    a_c = (prep["wq_c"] @ kT) * inv_sqrt_d                   # [D, S]

    # Fused RHS for the single per-step h-matmul; sections padded to 128 lanes.
    gp = _round_up(4 * dim, 128)
    npad = _round_up(num_ops, 128)
    spad = _round_up(num_slots, 128)

    def _pad(x, w):
        return jnp.pad(x, ((0, 0), (0, w - x.shape[1])))

    big = jnp.concatenate([_pad(prep["whh_t"], gp),
                           _pad(ops.T, npad),
                           _pad(a_h, spad)], axis=1).astype(MXU_DTYPE)

    smax = jnp.max(slots, axis=1)                            # [S] per-slot max
    has_up = (jnp.sum(ups, axis=1) > 0).astype(jnp.int32)    # [N]
    gumbel = jax.random.gumbel(rng_key, (num_ops, num_slots), f32)

    kernel = functools.partial(
        _policy_kernel, dim=dim, num_ops=num_ops, num_slots=num_slots,
        tanh_clip=float(tanh_clip), off_e=gp, off_u=gp + npad)

    place, logp = pl.pallas_call(
        kernel,
        out_shape=(jax.ShapeDtypeStruct((num_ops,), jnp.int32),
                   jax.ShapeDtypeStruct((num_ops,), jnp.float32)),
        in_specs=[SMEM_SPEC, SMEM_SPEC] + [VMEM_SPEC] * 9,
        out_specs=(SMEM_SPEC, SMEM_SPEC),
        scratch_shapes=[
            pltpu.VMEM((1, dim), jnp.float32),          # c (recurrent cell)
            pltpu.VMEM((1, 4 * dim), jnp.float32),      # h @ W_hh^T carry
            pltpu.VMEM((1, num_ops), jnp.float32),      # slot-max of placed ops
        ],
    )(has_up, smax, xpre, colsum, h0, prep["c0"], big,
      a_c.astype(MXU_DTYPE), ops.astype(MXU_DTYPE), ups, gumbel)
    return place, logp


# ----------------------------------------------------------------------------
if __name__ == "__main__":
    dim, num_ops, num_slots = 32, 8, 4
    tanh_clip = 10.0

    root = jax.random.PRNGKey(0)
    k_param, k_ops, k_graph, k_slots, k_gumbel = jax.random.split(root, 5)

    params = init_policy_params(k_param, dim)
    prep = prepare_policy_params(params)

    # PolicyNet.forward inputs: per-op embeddings, pooled graph embedding,
    # the op DAG's edge_index, per-slot embeddings.
    ops_embed = jax.random.normal(k_ops, (num_ops, dim), jnp.float32)
    graph_embed = jax.random.normal(k_graph, (dim,), jnp.float32)
    slots_embed = jax.random.normal(k_slots, (num_slots, dim), jnp.float32)
    # DAG with src < dst so every op's upstreams are already placed.
    edge_index = np.array([[0, 0, 1, 2, 3, 4, 4, 5, 6],
                           [1, 2, 3, 3, 4, 5, 6, 7, 7]], dtype=np.int32)
    ups_mask = upstream_mask_from_edge_index(edge_index, num_ops)  # cached once

    placement, log_probs = policy_net_forward(
        prep, ops_embed, graph_embed, ups_mask, slots_embed, k_gumbel,
        tanh_clip=tanh_clip)
    placement, log_probs = jax.block_until_ready((placement, log_probs))

    placement = np.asarray(placement)
    log_probs = np.asarray(log_probs)
    assert placement.shape == (num_ops,) and log_probs.shape == (num_ops,)
    assert np.all((placement >= 0) & (placement < num_slots))
    assert np.all(np.isfinite(log_probs)) and np.all(log_probs <= 1e-4)
    print("KERNEL_OK")
</pallas_src>

<mosaic_0001>
module attributes {stable_mosaic.version = 11 : i64} {
  func.func @_policy_kernel(%arg0: memref<8xi32, #tpu.memory_space<smem>>, %arg1: memref<4xf32, #tpu.memory_space<smem>>, %arg2: memref<8x128xf32, #tpu.memory_space<vmem>>, %arg3: memref<1x128xf32, #tpu.memory_space<vmem>>, %arg4: memref<1x32xf32, #tpu.memory_space<vmem>>, %arg5: memref<1x32xf32, #tpu.memory_space<vmem>>, %arg6: memref<32x384xbf16, #tpu.memory_space<vmem>>, %arg7: memref<32x4xbf16, #tpu.memory_space<vmem>>, %arg8: memref<8x32xbf16, #tpu.memory_space<vmem>>, %arg9: memref<8x8xf32, #tpu.memory_space<vmem>>, %arg10: memref<8x4xf32, #tpu.memory_space<vmem>>, %arg11: memref<8xi32, #tpu.memory_space<smem>>, %arg12: memref<8xf32, #tpu.memory_space<smem>>, %arg13: memref<1x32xf32, #tpu.memory_space<vmem>>, %arg14: memref<1x128xf32, #tpu.memory_space<vmem>>, %arg15: memref<1x8xf32, #tpu.memory_space<vmem>>) attributes {dimension_semantics = [], scalar_prefetch = 0 : i64, scratch_operands = 3 : i64, tpu.core_type = #tpu.core_type<tc>} {
    %c0 = arith.constant 0 : index
    %c0_0 = arith.constant 0 : index
    %0 = vector.load %arg5[%c0, %c0_0] : memref<1x32xf32, #tpu.memory_space<vmem>>, vector<1x32xf32>
    %c0_1 = arith.constant 0 : index
    %c0_2 = arith.constant 0 : index
    %1 = vector.load %arg13[%c0_1, %c0_2] : memref<1x32xf32, #tpu.memory_space<vmem>>, vector<1x32xf32>
    tpu.vector_store %arg13[%c0_1, %c0_2], %0 {strides = array<i32>} : memref<1x32xf32, #tpu.memory_space<vmem>>, vector<1x32xf32>,
    %cst = arith.constant 0.000000e+00 : f32
    %2 = vector.broadcast %cst : f32 to vector<1x8xf32>
    %c0_3 = arith.constant 0 : index
    %c0_4 = arith.constant 0 : index
    %3 = vector.load %arg15[%c0_3, %c0_4] : memref<1x8xf32, #tpu.memory_space<vmem>>, vector<1x8xf32>
    tpu.vector_store %arg15[%c0_3, %c0_4], %2 {strides = array<i32>} : memref<1x8xf32, #tpu.memory_space<vmem>>, vector<1x8xf32>,
    %c0_5 = arith.constant 0 : index
    %c0_6 = arith.constant 0 : index
    %4 = vector.load %arg6[%c0_5, %c0_6] : memref<32x384xbf16, #tpu.memory_space<vmem>>, vector<32x384xbf16>
    %c0_7 = arith.constant 0 : index
    %c0_8 = arith.constant 0 : index
    %5 = vector.load %arg8[%c0_7, %c0_8] : memref<8x32xbf16, #tpu.memory_space<vmem>>, vector<8x32xbf16>
    %c0_9 = arith.constant 0 : index
    %c0_10 = arith.constant 0 : index
    %6 = vector.load %arg7[%c0_9, %c0_10] : memref<32x4xbf16, #tpu.memory_space<vmem>>, vector<32x4xbf16>
    %c0_11 = arith.constant 0 : index
    %c0_12 = arith.constant 0 : index
    %7 = vector.load %arg3[%c0_11, %c0_12] : memref<1x128xf32, #tpu.memory_space<vmem>>, vector<1x128xf32>
    %c0_13 = arith.constant 0 : index
    %c0_14 = arith.constant 0 : index
    %8 = vector.load %arg4[%c0_13, %c0_14] : memref<1x32xf32, #tpu.memory_space<vmem>>, vector<1x32xf32>
    %9 = arith.truncf %8 : vector<1x32xf32> to vector<1x32xbf16>
    %cst_15 = arith.constant dense<0.000000e+00> : vector<1x384xf32>
    %10 = tpu.matmul %9, %4, %cst_15 {dimension_numbers = #tpu.dot_dimension_numbers<[1], [0], [0], [1], [0, 0, 1, 1], [], []>} : vector<1x32xbf16>, vector<32x384xbf16>, vector<1x384xf32> -> vector<1x384xf32>
    %11 = vector.extract_strided_slice %10 {offsets = [0, 0], sizes = [1, 128], strides = [1, 1]} : vector<1x384xf32> to vector<1x128xf32>
    %c0_16 = arith.constant 0 : index
    %c0_17 = arith.constant 0 : index
    %12 = vector.load %arg14[%c0_16, %c0_17] : memref<1x128xf32, #tpu.memory_space<vmem>>, vector<1x128xf32>
    tpu.vector_store %arg14[%c0_16, %c0_17], %11 {strides = array<i32>} : memref<1x128xf32, #tpu.memory_space<vmem>>, vector<1x128xf32>,
    %13 = tpu.iota {dimensions = array<i32: 1>} : vector<1x8xi32>
    %14 = tpu.iota {dimensions = array<i32: 1>} : vector<1x4xi32>
    %c0_18 = arith.constant 0 : index
    %c0_19 = arith.constant 0 : index
    %15 = vector.load %arg9[%c0_18, %c0_19] : memref<8x8xf32, #tpu.memory_space<vmem>>, vector<1x8xf32>
    %cst_20 = arith.constant 0.000000e+00 : f32
    %16 = vector.broadcast %cst_20 : f32 to vector<1x8xf32>
    %17 = arith.cmpf ogt, %15, %16 : vector<1x8xf32>
    %c0_21 = arith.constant 0 : index
    %c0_22 = arith.constant 0 : index
    %18 = vector.load %arg15[%c0_21, %c0_22] : memref<1x8xf32, #tpu.memory_space<vmem>>, vector<1x8xf32>
    %cst_23 = arith.constant 0xFF800000 : f32
    %19 = vector.broadcast %cst_23 : f32 to vector<1x8xf32>
    %20 = arith.select %17, %18, %19 : vector<1x8xi1>, vector<1x8xf32>
    %c0_24 = arith.constant 0 : index
    %21 = memref.load %arg0[%c0_24] : memref<8xi32, #tpu.memory_space<smem>>
    %c0_i32 = arith.constant 0 : i32
    %22 = arith.cmpi sgt, %21, %c0_i32 : i32
    %23 = vector.shape_cast %20 : vector<1x8xf32> to vector<1x1x8xf32>
    %cst_25 = arith.constant dense<0xFF800000> : vector<1xf32>
    %24 = vector.multi_reduction <maximumf>, %23, %cst_25 [1, 2] : vector<1x1x8xf32> to vector<1xf32>
    %25 = vector.shape_cast %24 : vector<1xf32> to vector<1x1x1xf32>
    %26 = vector.extract %25[0, 0, 0] : f32 from vector<1x1x1xf32>
    %cst_26 = arith.constant 0.000000e+00 : f32
    %27 = arith.select %22, %26, %cst_26 : f32
    %c0_27 = arith.constant 0 : index
    %c0_28 = arith.constant 0 : index
    %28 = vector.load %arg2[%c0_27, %c0_28] : memref<8x128xf32, #tpu.memory_space<vmem>>, vector<1x128xf32>
    %29 = vector.broadcast %27 : f32 to vector<1x128xf32>
    %30 = arith.mulf %29, %7 : vector<1x128xf32>
    %31 = arith.addf %28, %30 : vector<1x128xf32>
    %c0_29 = arith.constant 0 : index
    %c0_30 = arith.constant 0 : index
    %32 = vector.load %arg14[%c0_29, %c0_30] : memref<1x128xf32, #tpu.memory_space<vmem>>, vector<1x128xf32>
    %33 = arith.addf %31, %32 : vector<1x128xf32>
    %34 = arith.negf %33 : vector<1x128xf32>
    %35 = math.exp %34 : vector<1x128xf32>
    %cst_31 = arith.constant 1.000000e+00 : f32
    %36 = vector.broadcast %cst_31 : f32 to vector<1x128xf32>
    %37 = arith.addf %36, %35 : vector<1x128xf32>
    %38 = arith.divf %36, %37 : vector<1x128xf32>
    %39 = vector.extract_strided_slice %38 {offsets = [0, 0], sizes = [1, 32], strides = [1, 1]} : vector<1x128xf32> to vector<1x32xf32>
    %40 = vector.extract_strided_slice %38 {offsets = [0, 32], sizes = [1, 32], strides = [1, 1]} : vector<1x128xf32> to vector<1x32xf32>
    %41 = vector.extract_strided_slice %38 {offsets = [0, 64], sizes = [1, 32], strides = [1, 1]} : vector<1x128xf32> to vector<1x32xf32>
    %cst_32 = arith.constant 2.000000e+00 : f32
    %42 = vector.broadcast %cst_32 : f32 to vector<1x32xf32>
    %43 = arith.mulf %42, %41 : vector<1x32xf32>
    %cst_33 = arith.constant 1.000000e+00 : f32
    %44 = vector.broadcast %cst_33 : f32 to vector<1x32xf32>
    %45 = arith.subf %43, %44 : vector<1x32xf32>
    %46 = vector.extract_strided_slice %38 {offsets = [0, 96], sizes = [1, 32], strides = [1, 1]} : vector<1x128xf32> to vector<1x32xf32>
    %c0_34 = arith.constant 0 : index
    %c0_35 = arith.constant 0 : index
    %47 = vector.load %arg13[%c0_34, %c0_35] : memref<1x32xf32, #tpu.memory_space<vmem>>, vector<1x32xf32>
    %48 = arith.mulf %40, %47 : vector<1x32xf32>
    %49 = arith.mulf %39, %45 : vector<1x32xf32>
    %50 = arith.addf %48, %49 : vector<1x32xf32>
    %51 = math.tanh %50 : vector<1x32xf32>
    %52 = arith.mulf %46, %51 : vector<1x32xf32>
    %c0_36 = arith.constant 0 : index
    %c0_37 = arith.constant 0 : index
    %53 = vector.load %arg13[%c0_36, %c0_37] : memref<1x32xf32, #tpu.memory_space<vmem>>, vector<1x32xf32>
    tpu.vector_store %arg13[%c0_36, %c0_37], %50 {strides = array<i32>} : memref<1x32xf32, #tpu.memory_space<vmem>>, vector<1x32xf32>,
    %54 = arith.truncf %52 : vector<1x32xf32> to vector<1x32xbf16>
    %cst_38 = arith.constant dense<0.000000e+00> : vector<1x384xf32>
    %55 = tpu.matmul %54, %4, %cst_38 {dimension_numbers = #tpu.dot_dimension_numbers<[1], [0], [0], [1], [0, 0, 1, 1], [], []>} : vector<1x32xbf16>, vector<32x384xbf16>, vector<1x384xf32> -> vector<1x384xf32>
    %56 = vector.extract_strided_slice %55 {offsets = [0, 0], sizes = [1, 128], strides = [1, 1]} : vector<1x384xf32> to vector<1x128xf32>
    %c0_39 = arith.constant 0 : index
    %c0_40 = arith.constant 0 : index
    %57 = vector.load %arg14[%c0_39, %c0_40] : memref<1x128xf32, #tpu.memory_space<vmem>>, vector<1x128xf32>
    tpu.vector_store %arg14[%c0_39, %c0_40], %56 {strides = array<i32>} : memref<1x128xf32, #tpu.memory_space<vmem>>, vector<1x128xf32>,
    %58 = vector.extract_strided_slice %55 {offsets = [0, 128], sizes = [1, 8], strides = [1, 1]} : vector<1x384xf32> to vector<1x8xf32>
    %59 = vector.extract_strided_slice %55 {offsets = [0, 256], sizes = [1, 4], strides = [1, 1]} : vector<1x384xf32> to vector<1x4xf32>
    %cst_41 = arith.constant dense<0xFF800000> : vector<1xf32>
    %60 = vector.multi_reduction <maximumf>, %58, %cst_41 [1] : vector<1x8xf32> to vector<1xf32>
    %61 = vector.shape_cast %60 : vector<1xf32> to vector<1x1xf32>
    %62 = vector.broadcast %61 : vector<1x1xf32> to vector<1x8xf32>
    %63 = arith.subf %58, %62 : vector<1x8xf32>
    %64 = math.exp %63 : vector<1x8xf32>
    %cst_42 = arith.constant dense<0.000000e+00> : vector<1xf32>
    %65 = vector.multi_reduction <add>, %64, %cst_42 [1] : vector<1x8xf32> to vector<1xf32>
    %66 = vector.shape_cast %65 : vector<1xf32> to vector<1x1xf32>
    %67 = vector.broadcast %66 : vector<1x1xf32> to vector<1x8xf32>
    %68 = arith.divf %64, %67 : vector<1x8xf32>
    %69 = arith.truncf %68 : vector<1x8xf32> to vector<1x8xbf16>
    %cst_43 = arith.constant dense<0.000000e+00> : vector<1x32xf32>
    %70 = tpu.matmul %69, %5, %cst_43 {dimension_numbers = #tpu.dot_dimension_numbers<[1], [0], [0], [1], [0, 0, 1, 1], [], []>} : vector<1x8xbf16>, vector<8x32xbf16>, vector<1x32xf32> -> vector<1x32xf32>
    %71 = arith.truncf %70 : vector<1x32xf32> to vector<1x32xbf16>
    %cst_44 = arith.constant dense<0.000000e+00> : vector<1x4xf32>
    %72 = tpu.matmul %71, %6, %cst_44 {dimension_numbers = #tpu.dot_dimension_numbers<[1], [0], [0], [1], [0, 0, 1, 1], [], []>} : vector<1x32xbf16>, vector<32x4xbf16>, vector<1x4xf32> -> vector<1x4xf32>
    %73 = arith.addf %59, %72 : vector<1x4xf32>
    %74 = math.tanh %73 : vector<1x4xf32>
    %cst_45 = arith.constant 1.000000e+01 : f32
    %75 = vector.broadcast %cst_45 : f32 to vector<1x4xf32>
    %76 = arith.mulf %75, %74 : vector<1x4xf32>
    %77 = math.exp %76 : vector<1x4xf32>
    %cst_46 = arith.constant dense<0.000000e+00> : vector<1xf32>
    %78 = vector.multi_reduction <add>, %77, %cst_46 [1] : vector<1x4xf32> to vector<1xf32>
    %79 = vector.shape_cast %78 : vector<1xf32> to vector<1x1xf32>
    %80 = math.log %79 : vector<1x1xf32>
    %81 = vector.broadcast %80 : vector<1x1xf32> to vector<1x4xf32>
    %82 = arith.subf %76, %81 : vector<1x4xf32>
    %c0_47 = arith.constant 0 : index
    %c0_48 = arith.constant 0 : index
    %83 = vector.load %arg10[%c0_47, %c0_48] : memref<8x4xf32, #tpu.memory_space<vmem>>, vector<1x4xf32>
    %84 = arith.addf %76, %83 : vector<1x4xf32>
    %cst_49 = arith.constant dense<0xFF800000> : vector<1xf32>
    %85 = vector.multi_reduction <maximumf>, %84, %cst_49 [1] : vector<1x4xf32> to vector<1xf32>
    %86 = vector.shape_cast %85 : vector<1xf32> to vector<1x1xf32>
    %87 = vector.broadcast %86 : vector<1x1xf32> to vector<1x4xf32>
    %88 = arith.cmpf oge, %84, %87 : vector<1x4xf32>
    %c4_i32 = arith.constant 4 : i32
    %89 = vector.broadcast %c4_i32 : i32 to vector<1x4xi32>
    %90 = arith.select %88, %14, %89 : vector<1x4xi1>, vector<1x4xi32>
    %91 = vector.shape_cast %90 : vector<1x4xi32> to vector<1x1x4xi32>
    %cst_50 = arith.constant dense<2147483647> : vector<1xi32>
    %92 = vector.multi_reduction <minsi>, %91, %cst_50 [1, 2] : vector<1x1x4xi32> to vector<1xi32>
    %93 = vector.shape_cast %92 : vector<1xi32> to vector<1x1x1xi32>
    %94 = vector.extract %93[0, 0, 0] : i32 from vector<1x1x1xi32>
    %95 = vector.broadcast %94 : i32 to vector<1x4xi32>
    %96 = arith.cmpi eq, %14, %95 : vector<1x4xi32>
    %cst_51 = arith.constant 0.000000e+00 : f32
    %97 = vector.broadcast %cst_51 : f32 to vector<1x4xf32>
    %98 = arith.select %96, %82, %97 : vector<1x4xi1>, vector<1x4xf32>
    %99 = vector.shape_cast %98 : vector<1x4xf32> to vector<1x1x4xf32>
    %cst_52 = arith.constant dense<0.000000e+00> : vector<1xf32>
    %100 = vector.multi_reduction <add>, %99, %cst_52 [1, 2] : vector<1x1x4xf32> to vector<1xf32>
    %101 = vector.shape_cast %100 : vector<1xf32> to vector<1x1x1xf32>
    %102 = vector.extract %101[0, 0, 0] : f32 from vector<1x1x1xf32>
    %c0_i32_53 = arith.constant 0 : i32
    %103 = vector.broadcast %c0_i32_53 : i32 to vector<1x8xi32>
    %104 = arith.cmpi eq, %13, %103 : vector<1x8xi32>
    %105 = arith.index_cast %94 : i32 to index
    %106 = memref.load %arg1[%105] : memref<4xf32, #tpu.memory_space<smem>>
    %c0_54 = arith.constant 0 : index
    %c0_55 = arith.constant 0 : index
    %107 = vector.load %arg15[%c0_54, %c0_55] : memref<1x8xf32, #tpu.memory_space<vmem>>, vector<1x8xf32>
    %108 = vector.broadcast %106 : f32 to vector<1x8xf32>
    %109 = arith.select %104, %108, %107 : vector<1x8xi1>, vector<1x8xf32>
    %c0_56 = arith.constant 0 : index
    %c0_57 = arith.constant 0 : index
    %110 = vector.load %arg15[%c0_56, %c0_57] : memref<1x8xf32, #tpu.memory_space<vmem>>, vector<1x8xf32>
    tpu.vector_store %arg15[%c0_56, %c0_57], %109 {strides = array<i32>} : memref<1x8xf32, #tpu.memory_space<vmem>>, vector<1x8xf32>,
    %c0_58 = arith.constant 0 : index
    %111 = memref.load %arg11[%c0_58] : memref<8xi32, #tpu.memory_space<smem>>
    memref.store %94, %arg11[%c0_58] : memref<8xi32, #tpu.memory_space<smem>>
    %c0_59 = arith.constant 0 : index
    %112 = memref.load %arg12[%c0_59] : memref<8xf32, #tpu.memory_space<smem>>
    memref.store %102, %arg12[%c0_59] : memref<8xf32, #tpu.memory_space<smem>>
    %c1 = arith.constant 1 : index
    %c0_60 = arith.constant 0 : index
    %113 = vector.load %arg9[%c1, %c0_60] : memref<8x8xf32, #tpu.memory_space<vmem>>, vector<1x8xf32>
    %cst_61 = arith.constant 0.000000e+00 : f32
    %114 = vector.broadcast %cst_61 : f32 to vector<1x8xf32>
    %115 = arith.cmpf ogt, %113, %114 : vector<1x8xf32>
    %c0_62 = arith.constant 0 : index
    %c0_63 = arith.constant 0 : index
    %116 = vector.load %arg15[%c0_62, %c0_63] : memref<1x8xf32, #tpu.memory_space<vmem>>, vector<1x8xf32>
    %cst_64 = arith.constant 0xFF800000 : f32
    %117 = vector.broadcast %cst_64 : f32 to vector<1x8xf32>
    %118 = arith.select %115, %116, %117 : vector<1x8xi1>, vector<1x8xf32>
    %c1_65 = arith.constant 1 : index
    %119 = memref.load %arg0[%c1_65] : memref<8xi32, #tpu.memory_space<smem>>
    %c0_i32_66 = arith.constant 0 : i32
    %120 = arith.cmpi sgt, %119, %c0_i32_66 : i32
    %121 = vector.shape_cast %118 : vector<1x8xf32> to vector<1x1x8xf32>
    %cst_67 = arith.constant dense<0xFF800000> : vector<1xf32>
    %122 = vector.multi_reduction <maximumf>, %121, %cst_67 [1, 2] : vector<1x1x8xf32> to vector<1xf32>
    %123 = vector.shape_cast %122 : vector<1xf32> to vector<1x1x1xf32>
    %124 = vector.extract %123[0, 0, 0] : f32 from vector<1x1x1xf32>
    %cst_68 = arith.constant 0.000000e+00 : f32
    %125 = arith.select %120, %124, %cst_68 : f32
    %c1_69 = arith.constant 1 : index
    %c0_70 = arith.constant 0 : index
    %126 = vector.load %arg2[%c1_69, %c0_70] : memref<8x128xf32, #tpu.memory_space<vmem>>, vector<1x128xf32>
    %127 = vector.broadcast %125 : f32 to vector<1x128xf32>
    %128 = arith.mulf %127, %7 : vector<1x128xf32>
    %129 = arith.addf %126, %128 : vector<1x128xf32>
    %c0_71 = arith.constant 0 : index
    %c0_72 = arith.constant 0 : index
    %130 = vector.load %arg14[%c0_71, %c0_72] : memref<1x128xf32, #tpu.memory_space<vmem>>, vector<1x128xf32>
    %131 = arith.addf %129, %130 : vector<1x128xf32>
    %132 = arith.negf %131 : vector<1x128xf32>
    %133 = math.exp %132 : vector<1x128xf32>
    %cst_73 = arith.constant 1.000000e+00 : f32
    %134 = vector.broadcast %cst_73 : f32 to vector<1x128xf32>
    %135 = arith.addf %134, %133 : vector<1x128xf32>
    %136 = arith.divf %134, %135 : vector<1x128xf32>
    %137 = vector.extract_strided_slice %136 {offsets = [0, 0], sizes = [1, 32], strides = [1, 1]} : vector<1x128xf32> to vector<1x32xf32>
    %138 = vector.extract_strided_slice %136 {offsets = [0, 32], sizes = [1, 32], strides = [1, 1]} : vector<1x128xf32> to vector<1x32xf32>
    %139 = vector.extract_strided_slice %136 {offsets = [0, 64], sizes = [1, 32], strides = [1, 1]} : vector<1x128xf32> to vector<1x32xf32>
    %cst_74 = arith.constant 2.000000e+00 : f32
    %140 = vector.broadcast %cst_74 : f32 to vector<1x32xf32>
    %141 = arith.mulf %140, %139 : vector<1x32xf32>
    %cst_75 = arith.constant 1.000000e+00 : f32
    %142 = vector.broadcast %cst_75 : f32 to vector<1x32xf32>
    %143 = arith.subf %141, %142 : vector<1x32xf32>
    %144 = vector.extract_strided_slice %136 {offsets = [0, 96], sizes = [1, 32], strides = [1, 1]} : vector<1x128xf32> to vector<1x32xf32>
    %c0_76 = arith.constant 0 : index
    %c0_77 = arith.constant 0 : index
    %145 = vector.load %arg13[%c0_76, %c0_77] : memref<1x32xf32, #tpu.memory_space<vmem>>, vector<1x32xf32>
    %146 = arith.mulf %138, %145 : vector<1x32xf32>
    %147 = arith.mulf %137, %143 : vector<1x32xf32>
    %148 = arith.addf %146, %147 : vector<1x32xf32>
    %149 = math.tanh %148 : vector<1x32xf32>
    %150 = arith.mulf %144, %149 : vector<1x32xf32>
    %c0_78 = arith.constant 0 : index
    %c0_79 = arith.constant 0 : index
    %151 = vector.load %arg13[%c0_78, %c0_79] : memref<1x32xf32, #tpu.memory_space<vmem>>, vector<1x32xf32>
    tpu.vector_store %arg13[%c0_78, %c0_79], %148 {strides = array<i32>} : memref<1x32xf32, #tpu.memory_space<vmem>>, vector<1x32xf32>,
    %152 = arith.truncf %150 : vector<1x32xf32> to vector<1x32xbf16>
    %cst_80 = arith.constant dense<0.000000e+00> : vector<1x384xf32>
    %153 = tpu.matmul %152, %4, %cst_80 {dimension_numbers = #tpu.dot_dimension_numbers<[1], [0], [0], [1], [0, 0, 1, 1], [], []>} : vector<1x32xbf16>, vector<32x384xbf16>, vector<1x384xf32> -> vector<1x384xf32>
    %154 = vector.extract_strided_slice %153 {offsets = [0, 0], sizes = [1, 128], strides = [1, 1]} : vector<1x384xf32> to vector<1x128xf32>
    %c0_81 = arith.constant 0 : index
    %c0_82 = arith.constant 0 : index
    %155 = vector.load %arg14[%c0_81, %c0_82] : memref<1x128xf32, #tpu.memory_space<vmem>>, vector<1x128xf32>
    tpu.vector_store %arg14[%c0_81, %c0_82], %154 {strides = array<i32>} : memref<1x128xf32, #tpu.memory_space<vmem>>, vector<1x128xf32>,
    %156 = vector.extract_strided_slice %153 {offsets = [0, 128], sizes = [1, 8], strides = [1, 1]} : vector<1x384xf32> to vector<1x8xf32>
    %157 = vector.extract_strided_slice %153 {offsets = [0, 256], sizes = [1, 4], strides = [1, 1]} : vector<1x384xf32> to vector<1x4xf32>
    %cst_83 = arith.constant dense<0xFF800000> : vector<1xf32>
    %158 = vector.multi_reduction <maximumf>, %156, %cst_83 [1] : vector<1x8xf32> to vector<1xf32>
    %159 = vector.shape_cast %158 : vector<1xf32> to vector<1x1xf32>
    %160 = vector.broadcast %159 : vector<1x1xf32> to vector<1x8xf32>
    %161 = arith.subf %156, %160 : vector<1x8xf32>
    %162 = math.exp %161 : vector<1x8xf32>
    %cst_84 = arith.constant dense<0.000000e+00> : vector<1xf32>
    %163 = vector.multi_reduction <add>, %162, %cst_84 [1] : vector<1x8xf32> to vector<1xf32>
    %164 = vector.shape_cast %163 : vector<1xf32> to vector<1x1xf32>
    %165 = vector.broadcast %164 : vector<1x1xf32> to vector<1x8xf32>
    %166 = arith.divf %162, %165 : vector<1x8xf32>
    %167 = arith.truncf %166 : vector<1x8xf32> to vector<1x8xbf16>
    %cst_85 = arith.constant dense<0.000000e+00> : vector<1x32xf32>
    %168 = tpu.matmul %167, %5, %cst_85 {dimension_numbers = #tpu.dot_dimension_numbers<[1], [0], [0], [1], [0, 0, 1, 1], [], []>} : vector<1x8xbf16>, vector<8x32xbf16>, vector<1x32xf32> -> vector<1x32xf32>
    %169 = arith.truncf %168 : vector<1x32xf32> to vector<1x32xbf16>
    %cst_86 = arith.constant dense<0.000000e+00> : vector<1x4xf32>
    %170 = tpu.matmul %169, %6, %cst_86 {dimension_numbers = #tpu.dot_dimension_numbers<[1], [0], [0], [1], [0, 0, 1, 1], [], []>} : vector<1x32xbf16>, vector<32x4xbf16>, vector<1x4xf32> -> vector<1x4xf32>
    %171 = arith.addf %157, %170 : vector<1x4xf32>
    %172 = math.tanh %171 : vector<1x4xf32>
    %cst_87 = arith.constant 1.000000e+01 : f32
    %173 = vector.broadcast %cst_87 : f32 to vector<1x4xf32>
    %174 = arith.mulf %173, %172 : vector<1x4xf32>
    %175 = math.exp %174 : vector<1x4xf32>
    %cst_88 = arith.constant dense<0.000000e+00> : vector<1xf32>
    %176 = vector.multi_reduction <add>, %175, %cst_88 [1] : vector<1x4xf32> to vector<1xf32>
    %177 = vector.shape_cast %176 : vector<1xf32> to vector<1x1xf32>
    %178 = math.log %177 : vector<1x1xf32>
    %179 = vector.broadcast %178 : vector<1x1xf32> to vector<1x4xf32>
    %180 = arith.subf %174, %179 : vector<1x4xf32>
    %c1_89 = arith.constant 1 : index
    %c0_90 = arith.constant 0 : index
    %181 = vector.load %arg10[%c1_89, %c0_90] : memref<8x4xf32, #tpu.memory_space<vmem>>, vector<1x4xf32>
    %182 = arith.addf %174, %181 : vector<1x4xf32>
    %cst_91 = arith.constant dense<0xFF800000> : vector<1xf32>
    %183 = vector.multi_reduction <maximumf>, %182, %cst_91 [1] : vector<1x4xf32> to vector<1xf32>
    %184 = vector.shape_cast %183 : vector<1xf32> to vector<1x1xf32>
    %185 = vector.broadcast %184 : vector<1x1xf32> to vector<1x4xf32>
    %186 = arith.cmpf oge, %182, %185 : vector<1x4xf32>
    %c4_i32_92 = arith.constant 4 : i32
    %187 = vector.broadcast %c4_i32_92 : i32 to vector<1x4xi32>
    %188 = arith.select %186, %14, %187 : vector<1x4xi1>, vector<1x4xi32>
    %189 = vector.shape_cast %188 : vector<1x4xi32> to vector<1x1x4xi32>
    %cst_93 = arith.constant dense<2147483647> : vector<1xi32>
    %190 = vector.multi_reduction <minsi>, %189, %cst_93 [1, 2] : vector<1x1x4xi32> to vector<1xi32>
    %191 = vector.shape_cast %190 : vector<1xi32> to vector<1x1x1xi32>
    %192 = vector.extract %191[0, 0, 0] : i32 from vector<1x1x1xi32>
    %193 = vector.broadcast %192 : i32 to vector<1x4xi32>
    %194 = arith.cmpi eq, %14, %193 : vector<1x4xi32>
    %cst_94 = arith.constant 0.000000e+00 : f32
    %195 = vector.broadcast %cst_94 : f32 to vector<1x4xf32>
    %196 = arith.select %194, %180, %195 : vector<1x4xi1>, vector<1x4xf32>
    %197 = vector.shape_cast %196 : vector<1x4xf32> to vector<1x1x4xf32>
    %cst_95 = arith.constant dense<0.000000e+00> : vector<1xf32>
    %198 = vector.multi_reduction <add>, %197, %cst_95 [1, 2] : vector<1x1x4xf32> to vector<1xf32>
    %199 = vector.shape_cast %198 : vector<1xf32> to vector<1x1x1xf32>
    %200 = vector.extract %199[0, 0, 0] : f32 from vector<1x1x1xf32>
    %c1_i32 = arith.constant 1 : i32
    %201 = vector.broadcast %c1_i32 : i32 to vector<1x8xi32>
    %202 = arith.cmpi eq, %13, %201 : vector<1x8xi32>
    %203 = arith.index_cast %192 : i32 to index
    %204 = memref.load %arg1[%203] : memref<4xf32, #tpu.memory_space<smem>>
    %c0_96 = arith.constant 0 : index
    %c0_97 = arith.constant 0 : index
    %205 = vector.load %arg15[%c0_96, %c0_97] : memref<1x8xf32, #tpu.memory_space<vmem>>, vector<1x8xf32>
    %206 = vector.broadcast %204 : f32 to vector<1x8xf32>
    %207 = arith.select %202, %206, %205 : vector<1x8xi1>, vector<1x8xf32>
    %c0_98 = arith.constant 0 : index
    %c0_99 = arith.constant 0 : index
    %208 = vector.load %arg15[%c0_98, %c0_99] : memref<1x8xf32, #tpu.memory_space<vmem>>, vector<1x8xf32>
    tpu.vector_store %arg15[%c0_98, %c0_99], %207 {strides = array<i32>} : memref<1x8xf32, #tpu.memory_space<vmem>>, vector<1x8xf32>,
    %c1_100 = arith.constant 1 : index
    %209 = memref.load %arg11[%c1_100] : memref<8xi32, #tpu.memory_space<smem>>
    memref.store %192, %arg11[%c1_100] : memref<8xi32, #tpu.memory_space<smem>>
    %c1_101 = arith.constant 1 : index
    %210 = memref.load %arg12[%c1_101] : memref<8xf32, #tpu.memory_space<smem>>
    memref.store %200, %arg12[%c1_101] : memref<8xf32, #tpu.memory_space<smem>>
    %c2 = arith.constant 2 : index
    %c0_102 = arith.constant 0 : index
    %211 = vector.load %arg9[%c2, %c0_102] : memref<8x8xf32, #tpu.memory_space<vmem>>, vector<1x8xf32>
    %cst_103 = arith.constant 0.000000e+00 : f32
    %212 = vector.broadcast %cst_103 : f32 to vector<1x8xf32>
    %213 = arith.cmpf ogt, %211, %212 : vector<1x8xf32>
    %c0_104 = arith.constant 0 : index
    %c0_105 = arith.constant 0 : index
    %214 = vector.load %arg15[%c0_104, %c0_105] : memref<1x8xf32, #tpu.memory_space<vmem>>, vector<1x8xf32>
    %cst_106 = arith.constant 0xFF800000 : f32
    %215 = vector.broadcast %cst_106 : f32 to vector<1x8xf32>
    %216 = arith.select %213, %214, %215 : vector<1x8xi1>, vector<1x8xf32>
    %c2_107 = arith.constant 2 : index
    %217 = memref.load %arg0[%c2_107] : memref<8xi32, #tpu.memory_space<smem>>
    %c0_i32_108 = arith.constant 0 : i32
    %218 = arith.cmpi sgt, %217, %c0_i32_108 : i32
    %219 = vector.shape_cast %216 : vector<1x8xf32> to vector<1x1x8xf32>
    %cst_109 = arith.constant dense<0xFF800000> : vector<1xf32>
    %220 = vector.multi_reduction <maximumf>, %219, %cst_109 [1, 2] : vector<1x1x8xf32> to vector<1xf32>
    %221 = vector.shape_cast %220 : vector<1xf32> to vector<1x1x1xf32>
    %222 = vector.extract %221[0, 0, 0] : f32 from vector<1x1x1xf32>
    %cst_110 = arith.constant 0.000000e+00 : f32
    %223 = arith.select %218, %222, %cst_110 : f32
    %c2_111 = arith.constant 2 : index
    %c0_112 = arith.constant 0 : index
    %224 = vector.load %arg2[%c2_111, %c0_112] : memref<8x128xf32, #tpu.memory_space<vmem>>, vector<1x128xf32>
    %225 = vector.broadcast %223 : f32 to vector<1x128xf32>
    %226 = arith.mulf %225, %7 : vector<1x128xf32>
    %227 = arith.addf %224, %226 : vector<1x128xf32>
    %c0_113 = arith.constant 0 : index
    %c0_114 = arith.constant 0 : index
    %228 = vector.load %arg14[%c0_113, %c0_114] : memref<1x128xf32, #tpu.memory_space<vmem>>, vector<1x128xf32>
    %229 = arith.addf %227, %228 : vector<1x128xf32>
    %230 = arith.negf %229 : vector<1x128xf32>
    %231 = math.exp %230 : vector<1x128xf32>
    %cst_115 = arith.constant 1.000000e+00 : f32
    %232 = vector.broadcast %cst_115 : f32 to vector<1x128xf32>
    %233 = arith.addf %232, %231 : vector<1x128xf32>
    %234 = arith.divf %232, %233 : vector<1x128xf32>
    %235 = vector.extract_strided_slice %234 {offsets = [0, 0], sizes = [1, 32], strides = [1, 1]} : vector<1x128xf32> to vector<1x32xf32>
    %236 = vector.extract_strided_slice %234 {offsets = [0, 32], sizes = [1, 32], strides = [1, 1]} : vector<1x128xf32> to vector<1x32xf32>
    %237 = vector.extract_strided_slice %234 {offsets = [0, 64], sizes = [1, 32], strides = [1, 1]} : vector<1x128xf32> to vector<1x32xf32>
    %cst_116 = arith.constant 2.000000e+00 : f32
    %238 = vector.broadcast %cst_116 : f32 to vector<1x32xf32>
    %239 = arith.mulf %238, %237 : vector<1x32xf32>
    %cst_117 = arith.constant 1.000000e+00 : f32
    %240 = vector.broadcast %cst_117 : f32 to vector<1x32xf32>
    %241 = arith.subf %239, %240 : vector<1x32xf32>
    %242 = vector.extract_strided_slice %234 {offsets = [0, 96], sizes = [1, 32], strides = [1, 1]} : vector<1x128xf32> to vector<1x32xf32>
    %c0_118 = arith.constant 0 : index
    %c0_119 = arith.constant 0 : index
    %243 = vector.load %arg13[%c0_118, %c0_119] : memref<1x32xf32, #tpu.memory_space<vmem>>, vector<1x32xf32>
    %244 = arith.mulf %236, %243 : vector<1x32xf32>
    %245 = arith.mulf %235, %241 : vector<1x32xf32>
    %246 = arith.addf %244, %245 : vector<1x32xf32>
    %247 = math.tanh %246 : vector<1x32xf32>
    %248 = arith.mulf %242, %247 : vector<1x32xf32>
    %c0_120 = arith.constant 0 : index
    %c0_121 = arith.constant 0 : index
    %249 = vector.load %arg13[%c0_120, %c0_121] : memref<1x32xf32, #tpu.memory_space<vmem>>, vector<1x32xf32>
    tpu.vector_store %arg13[%c0_120, %c0_121], %246 {strides = array<i32>} : memref<1x32xf32, #tpu.memory_space<vmem>>, vector<1x32xf32>,
    %250 = arith.truncf %248 : vector<1x32xf32> to vector<1x32xbf16>
    %cst_122 = arith.constant dense<0.000000e+00> : vector<1x384xf32>
    %251 = tpu.matmul %250, %4, %cst_122 {dimension_numbers = #tpu.dot_dimension_numbers<[1], [0], [0], [1], [0, 0, 1, 1], [], []>} : vector<1x32xbf16>, vector<32x384xbf16>, vector<1x384xf32> -> vector<1x384xf32>
    %252 = vector.extract_strided_slice %251 {offsets = [0, 0], sizes = [1, 128], strides = [1, 1]} : vector<1x384xf32> to vector<1x128xf32>
    %c0_123 = arith.constant 0 : index
    %c0_124 = arith.constant 0 : index
    %253 = vector.load %arg14[%c0_123, %c0_124] : memref<1x128xf32, #tpu.memory_space<vmem>>, vector<1x128xf32>
    tpu.vector_store %arg14[%c0_123, %c0_124], %252 {strides = array<i32>} : memref<1x128xf32, #tpu.memory_space<vmem>>, vector<1x128xf32>,
    %254 = vector.extract_strided_slice %251 {offsets = [0, 128], sizes = [1, 8], strides = [1, 1]} : vector<1x384xf32> to vector<1x8xf32>
    %255 = vector.extract_strided_slice %251 {offsets = [0, 256], sizes = [1, 4], strides = [1, 1]} : vector<1x384xf32> to vector<1x4xf32>
    %cst_125 = arith.constant dense<0xFF800000> : vector<1xf32>
    %256 = vector.multi_reduction <maximumf>, %254, %cst_125 [1] : vector<1x8xf32> to vector<1xf32>
    %257 = vector.shape_cast %256 : vector<1xf32> to vector<1x1xf32>
    %258 = vector.broadcast %257 : vector<1x1xf32> to vector<1x8xf32>
    %259 = arith.subf %254, %258 : vector<1x8xf32>
    %260 = math.exp %259 : vector<1x8xf32>
    %cst_126 = arith.constant dense<0.000000e+00> : vector<1xf32>
    %261 = vector.multi_reduction <add>, %260, %cst_126 [1] : vector<1x8xf32> to vector<1xf32>
    %262 = vector.shape_cast %261 : vector<1xf32> to vector<1x1xf32>
    %263 = vector.broadcast %262 : vector<1x1xf32> to vector<1x8xf32>
    %264 = arith.divf %260, %263 : vector<1x8xf32>
    %265 = arith.truncf %264 : vector<1x8xf32> to vector<1x8xbf16>
    %cst_127 = arith.constant dense<0.000000e+00> : vector<1x32xf32>
    %266 = tpu.matmul %265, %5, %cst_127 {dimension_numbers = #tpu.dot_dimension_numbers<[1], [0], [0], [1], [0, 0, 1, 1], [], []>} : vector<1x8xbf16>, vector<8x32xbf16>, vector<1x32xf32> -> vector<1x32xf32>
    %267 = arith.truncf %266 : vector<1x32xf32> to vector<1x32xbf16>
    %cst_128 = arith.constant dense<0.000000e+00> : vector<1x4xf32>
    %268 = tpu.matmul %267, %6, %cst_128 {dimension_numbers = #tpu.dot_dimension_numbers<[1], [0], [0], [1], [0, 0, 1, 1], [], []>} : vector<1x32xbf16>, vector<32x4xbf16>, vector<1x4xf32> -> vector<1x4xf32>
    %269 = arith.addf %255, %268 : vector<1x4xf32>
    %270 = math.tanh %269 : vector<1x4xf32>
    %cst_129 = arith.constant 1.000000e+01 : f32
    %271 = vector.broadcast %cst_129 : f32 to vector<1x4xf32>
    %272 = arith.mulf %271, %270 : vector<1x4xf32>
    %273 = math.exp %272 : vector<1x4xf32>
    %cst_130 = arith.constant dense<0.000000e+00> : vector<1xf32>
    %274 = vector.multi_reduction <add>, %273, %cst_130 [1] : vector<1x4xf32> to vector<1xf32>
    %275 = vector.shape_cast %274 : vector<1xf32> to vector<1x1xf32>
    %276 = math.log %275 : vector<1x1xf32>
    %277 = vector.broadcast %276 : vector<1x1xf32> to vector<1x4xf32>
    %278 = arith.subf %272, %277 : vector<1x4xf32>
    %c2_131 = arith.constant 2 : index
    %c0_132 = arith.constant 0 : index
    %279 = vector.load %arg10[%c2_131, %c0_132] : memref<8x4xf32, #tpu.memory_space<vmem>>, vector<1x4xf32>
    %280 = arith.addf %272, %279 : vector<1x4xf32>
    %cst_133 = arith.constant dense<0xFF800000> : vector<1xf32>
    %281 = vector.multi_reduction <maximumf>, %280, %cst_133 [1] : vector<1x4xf32> to vector<1xf32>
    %282 = vector.shape_cast %281 : vector<1xf32> to vector<1x1xf32>
    %283 = vector.broadcast %282 : vector<1x1xf32> to vector<1x4xf32>
    %284 = arith.cmpf oge, %280, %283 : vector<1x4xf32>
    %c4_i32_134 = arith.constant 4 : i32
    %285 = vector.broadcast %c4_i32_134 : i32 to vector<1x4xi32>
    %286 = arith.select %284, %14, %285 : vector<1x4xi1>, vector<1x4xi32>
    %287 = vector.shape_cast %286 : vector<1x4xi32> to vector<1x1x4xi32>
    %cst_135 = arith.constant dense<2147483647> : vector<1xi32>
    %288 = vector.multi_reduction <minsi>, %287, %cst_135 [1, 2] : vector<1x1x4xi32> to vector<1xi32>
    %289 = vector.shape_cast %288 : vector<1xi32> to vector<1x1x1xi32>
    %290 = vector.extract %289[0, 0, 0] : i32 from vector<1x1x1xi32>
    %291 = vector.broadcast %290 : i32 to vector<1x4xi32>
    %292 = arith.cmpi eq, %14, %291 : vector<1x4xi32>
    %cst_136 = arith.constant 0.000000e+00 : f32
    %293 = vector.broadcast %cst_136 : f32 to vector<1x4xf32>
    %294 = arith.select %292, %278, %293 : vector<1x4xi1>, vector<1x4xf32>
    %295 = vector.shape_cast %294 : vector<1x4xf32> to vector<1x1x4xf32>
    %cst_137 = arith.constant dense<0.000000e+00> : vector<1xf32>
    %296 = vector.multi_reduction <add>, %295, %cst_137 [1, 2] : vector<1x1x4xf32> to vector<1xf32>
    %297 = vector.shape_cast %296 : vector<1xf32> to vector<1x1x1xf32>
    %298 = vector.extract %297[0, 0, 0] : f32 from vector<1x1x1xf32>
    %c2_i32 = arith.constant 2 : i32
    %299 = vector.broadcast %c2_i32 : i32 to vector<1x8xi32>
    %300 = arith.cmpi eq, %13, %299 : vector<1x8xi32>
    %301 = arith.index_cast %290 : i32 to index
    %302 = memref.load %arg1[%301] : memref<4xf32, #tpu.memory_space<smem>>
    %c0_138 = arith.constant 0 : index
    %c0_139 = arith.constant 0 : index
    %303 = vector.load %arg15[%c0_138, %c0_139] : memref<1x8xf32, #tpu.memory_space<vmem>>, vector<1x8xf32>
    %304 = vector.broadcast %302 : f32 to vector<1x8xf32>
    %305 = arith.select %300, %304, %303 : vector<1x8xi1>, vector<1x8xf32>
    %c0_140 = arith.constant 0 : index
    %c0_141 = arith.constant 0 : index
    %306 = vector.load %arg15[%c0_140, %c0_141] : memref<1x8xf32, #tpu.memory_space<vmem>>, vector<1x8xf32>
    tpu.vector_store %arg15[%c0_140, %c0_141], %305 {strides = array<i32>} : memref<1x8xf32, #tpu.memory_space<vmem>>, vector<1x8xf32>,
    %c2_142 = arith.constant 2 : index
    %307 = memref.load %arg11[%c2_142] : memref<8xi32, #tpu.memory_space<smem>>
    memref.store %290, %arg11[%c2_142] : memref<8xi32, #tpu.memory_space<smem>>
    %c2_143 = arith.constant 2 : index
    %308 = memref.load %arg12[%c2_143] : memref<8xf32, #tpu.memory_space<smem>>
    memref.store %298, %arg12[%c2_143] : memref<8xf32, #tpu.memory_space<smem>>
    %c3 = arith.constant 3 : index
    %c0_144 = arith.constant 0 : index
    %309 = vector.load %arg9[%c3, %c0_144] : memref<8x8xf32, #tpu.memory_space<vmem>>, vector<1x8xf32>
    %cst_145 = arith.constant 0.000000e+00 : f32
    %310 = vector.broadcast %cst_145 : f32 to vector<1x8xf32>
    %311 = arith.cmpf ogt, %309, %310 : vector<1x8xf32>
    %c0_146 = arith.constant 0 : index
    %c0_147 = arith.constant 0 : index
    %312 = vector.load %arg15[%c0_146, %c0_147] : memref<1x8xf32, #tpu.memory_space<vmem>>, vector<1x8xf32>
    %cst_148 = arith.constant 0xFF800000 : f32
    %313 = vector.broadcast %cst_148 : f32 to vector<1x8xf32>
    %314 = arith.select %311, %312, %313 : vector<1x8xi1>, vector<1x8xf32>
    %c3_149 = arith.constant 3 : index
    %315 = memref.load %arg0[%c3_149] : memref<8xi32, #tpu.memory_space<smem>>
    %c0_i32_150 = arith.constant 0 : i32
    %316 = arith.cmpi sgt, %315, %c0_i32_150 : i32
    %317 = vector.shape_cast %314 : vector<1x8xf32> to vector<1x1x8xf32>
    %cst_151 = arith.constant dense<0xFF800000> : vector<1xf32>
    %318 = vector.multi_reduction <maximumf>, %317, %cst_151 [1, 2] : vector<1x1x8xf32> to vector<1xf32>
    %319 = vector.shape_cast %318 : vector<1xf32> to vector<1x1x1xf32>
    %320 = vector.extract %319[0, 0, 0] : f32 from vector<1x1x1xf32>
    %cst_152 = arith.constant 0.000000e+00 : f32
    %321 = arith.select %316, %320, %cst_152 : f32
    %c3_153 = arith.constant 3 : index
    %c0_154 = arith.constant 0 : index
    %322 = vector.load %arg2[%c3_153, %c0_154] : memref<8x128xf32, #tpu.memory_space<vmem>>, vector<1x128xf32>
    %323 = vector.broadcast %321 : f32 to vector<1x128xf32>
    %324 = arith.mulf %323, %7 : vector<1x128xf32>
    %325 = arith.addf %322, %324 : vector<1x128xf32>
    %c0_155 = arith.constant 0 : index
    %c0_156 = arith.constant 0 : index
    %326 = vector.load %arg14[%c0_155, %c0_156] : memref<1x128xf32, #tpu.memory_space<vmem>>, vector<1x128xf32>
    %327 = arith.addf %325, %326 : vector<1x128xf32>
    %328 = arith.negf %327 : vector<1x128xf32>
    %329 = math.exp %328 : vector<1x128xf32>
    %cst_157 = arith.constant 1.000000e+00 : f32
    %330 = vector.broadcast %cst_157 : f32 to vector<1x128xf32>
    %331 = arith.addf %330, %329 : vector<1x128xf32>
    %332 = arith.divf %330, %331 : vector<1x128xf32>
    %333 = vector.extract_strided_slice %332 {offsets = [0, 0], sizes = [1, 32], strides = [1, 1]} : vector<1x128xf32> to vector<1x32xf32>
    %334 = vector.extract_strided_slice %332 {offsets = [0, 32], sizes = [1, 32], strides = [1, 1]} : vector<1x128xf32> to vector<1x32xf32>
    %335 = vector.extract_strided_slice %332 {offsets = [0, 64], sizes = [1, 32], strides = [1, 1]} : vector<1x128xf32> to vector<1x32xf32>
    %cst_158 = arith.constant 2.000000e+00 : f32
    %336 = vector.broadcast %cst_158 : f32 to vector<1x32xf32>
    %337 = arith.mulf %336, %335 : vector<1x32xf32>
    %cst_159 = arith.constant 1.000000e+00 : f32
    %338 = vector.broadcast %cst_159 : f32 to vector<1x32xf32>
    %339 = arith.subf %337, %338 : vector<1x32xf32>
    %340 = vector.extract_strided_slice %332 {offsets = [0, 96], sizes = [1, 32], strides = [1, 1]} : vector<1x128xf32> to vector<1x32xf32>
    %c0_160 = arith.constant 0 : index
    %c0_161 = arith.constant 0 : index
    %341 = vector.load %arg13[%c0_160, %c0_161] : memref<1x32xf32, #tpu.memory_space<vmem>>, vector<1x32xf32>
    %342 = arith.mulf %334, %341 : vector<1x32xf32>
    %343 = arith.mulf %333, %339 : vector<1x32xf32>
    %344 = arith.addf %342, %343 : vector<1x32xf32>
    %345 = math.tanh %344 : vector<1x32xf32>
    %346 = arith.mulf %340, %345 : vector<1x32xf32>
    %c0_162 = arith.constant 0 : index
    %c0_163 = arith.constant 0 : index
    %347 = vector.load %arg13[%c0_162, %c0_163] : memref<1x32xf32, #tpu.memory_space<vmem>>, vector<1x32xf32>
    tpu.vector_store %arg13[%c0_162, %c0_163], %344 {strides = array<i32>} : memref<1x32xf32, #tpu.memory_space<vmem>>, vector<1x32xf32>,
    %348 = arith.truncf %346 : vector<1x32xf32> to vector<1x32xbf16>
    %cst_164 = arith.constant dense<0.000000e+00> : vector<1x384xf32>
    %349 = tpu.matmul %348, %4, %cst_164 {dimension_numbers = #tpu.dot_dimension_numbers<[1], [0], [0], [1], [0, 0, 1, 1], [], []>} : vector<1x32xbf16>, vector<32x384xbf16>, vector<1x384xf32> -> vector<1x384xf32>
    %350 = vector.extract_strided_slice %349 {offsets = [0, 0], sizes = [1, 128], strides = [1, 1]} : vector<1x384xf32> to vector<1x128xf32>
    %c0_165 = arith.constant 0 : index
    %c0_166 = arith.constant 0 : index
    %351 = vector.load %arg14[%c0_165, %c0_166] : memref<1x128xf32, #tpu.memory_space<vmem>>, vector<1x128xf32>
    tpu.vector_store %arg14[%c0_165, %c0_166], %350 {strides = array<i32>} : memref<1x128xf32, #tpu.memory_space<vmem>>, vector<1x128xf32>,
    %352 = vector.extract_strided_slice %349 {offsets = [0, 128], sizes = [1, 8], strides = [1, 1]} : vector<1x384xf32> to vector<1x8xf32>
    %353 = vector.extract_strided_slice %349 {offsets = [0, 256], sizes = [1, 4], strides = [1, 1]} : vector<1x384xf32> to vector<1x4xf32>
    %cst_167 = arith.constant dense<0xFF800000> : vector<1xf32>
    %354 = vector.multi_reduction <maximumf>, %352, %cst_167 [1] : vector<1x8xf32> to vector<1xf32>
    %355 = vector.shape_cast %354 : vector<1xf32> to vector<1x1xf32>
    %356 = vector.broadcast %355 : vector<1x1xf32> to vector<1x8xf32>
    %357 = arith.subf %352, %356 : vector<1x8xf32>
    %358 = math.exp %357 : vector<1x8xf32>
    %cst_168 = arith.constant dense<0.000000e+00> : vector<1xf32>
    %359 = vector.multi_reduction <add>, %358, %cst_168 [1] : vector<1x8xf32> to vector<1xf32>
    %360 = vector.shape_cast %359 : vector<1xf32> to vector<1x1xf32>
    %361 = vector.broadcast %360 : vector<1x1xf32> to vector<1x8xf32>
    %362 = arith.divf %358, %361 : vector<1x8xf32>
    %363 = arith.truncf %362 : vector<1x8xf32> to vector<1x8xbf16>
    %cst_169 = arith.constant dense<0.000000e+00> : vector<1x32xf32>
    %364 = tpu.matmul %363, %5, %cst_169 {dimension_numbers = #tpu.dot_dimension_numbers<[1], [0], [0], [1], [0, 0, 1, 1], [], []>} : vector<1x8xbf16>, vector<8x32xbf16>, vector<1x32xf32> -> vector<1x32xf32>
    %365 = arith.truncf %364 : vector<1x32xf32> to vector<1x32xbf16>
    %cst_170 = arith.constant dense<0.000000e+00> : vector<1x4xf32>
    %366 = tpu.matmul %365, %6, %cst_170 {dimension_numbers = #tpu.dot_dimension_numbers<[1], [0], [0], [1], [0, 0, 1, 1], [], []>} : vector<1x32xbf16>, vector<32x4xbf16>, vector<1x4xf32> -> vector<1x4xf32>
    %367 = arith.addf %353, %366 : vector<1x4xf32>
    %368 = math.tanh %367 : vector<1x4xf32>
    %cst_171 = arith.constant 1.000000e+01 : f32
    %369 = vector.broadcast %cst_171 : f32 to vector<1x4xf32>
    %370 = arith.mulf %369, %368 : vector<1x4xf32>
    %371 = math.exp %370 : vector<1x4xf32>
    %cst_172 = arith.constant dense<0.000000e+00> : vector<1xf32>
    %372 = vector.multi_reduction <add>, %371, %cst_172 [1] : vector<1x4xf32> to vector<1xf32>
    %373 = vector.shape_cast %372 : vector<1xf32> to vector<1x1xf32>
    %374 = math.log %373 : vector<1x1xf32>
    %375 = vector.broadcast %374 : vector<1x1xf32> to vector<1x4xf32>
    %376 = arith.subf %370, %375 : vector<1x4xf32>
    %c3_173 = arith.constant 3 : index
    %c0_174 = arith.constant 0 : index
    %377 = vector.load %arg10[%c3_173, %c0_174] : memref<8x4xf32, #tpu.memory_space<vmem>>, vector<1x4xf32>
    %378 = arith.addf %370, %377 : vector<1x4xf32>
    %cst_175 = arith.constant dense<0xFF800000> : vector<1xf32>
    %379 = vector.multi_reduction <maximumf>, %378, %cst_175 [1] : vector<1x4xf32> to vector<1xf32>
    %380 = vector.shape_cast %379 : vector<1xf32> to vector<1x1xf32>
    %381 = vector.broadcast %380 : vector<1x1xf32> to vector<1x4xf32>
    %382 = arith.cmpf oge, %378, %381 : vector<1x4xf32>
    %c4_i32_176 = arith.constant 4 : i32
    %383 = vector.broadcast %c4_i32_176 : i32 to vector<1x4xi32>
    %384 = arith.select %382, %14, %383 : vector<1x4xi1>, vector<1x4xi32>
    %385 = vector.shape_cast %384 : vector<1x4xi32> to vector<1x1x4xi32>
    %cst_177 = arith.constant dense<2147483647> : vector<1xi32>
    %386 = vector.multi_reduction <minsi>, %385, %cst_177 [1, 2] : vector<1x1x4xi32> to vector<1xi32>
    %387 = vector.shape_cast %386 : vector<1xi32> to vector<1x1x1xi32>
    %388 = vector.extract %387[0, 0, 0] : i32 from vector<1x1x1xi32>
    %389 = vector.broadcast %388 : i32 to vector<1x4xi32>
    %390 = arith.cmpi eq, %14, %389 : vector<1x4xi32>
    %cst_178 = arith.constant 0.000000e+00 : f32
    %391 = vector.broadcast %cst_178 : f32 to vector<1x4xf32>
    %392 = arith.select %390, %376, %391 : vector<1x4xi1>, vector<1x4xf32>
    %393 = vector.shape_cast %392 : vector<1x4xf32> to vector<1x1x4xf32>
    %cst_179 = arith.constant dense<0.000000e+00> : vector<1xf32>
    %394 = vector.multi_reduction <add>, %393, %cst_179 [1, 2] : vector<1x1x4xf32> to vector<1xf32>
    %395 = vector.shape_cast %394 : vector<1xf32> to vector<1x1x1xf32>
    %396 = vector.extract %395[0, 0, 0] : f32 from vector<1x1x1xf32>
    %c3_i32 = arith.constant 3 : i32
    %397 = vector.broadcast %c3_i32 : i32 to vector<1x8xi32>
    %398 = arith.cmpi eq, %13, %397 : vector<1x8xi32>
    %399 = arith.index_cast %388 : i32 to index
    %400 = memref.load %arg1[%399] : memref<4xf32, #tpu.memory_space<smem>>
    %c0_180 = arith.constant 0 : index
    %c0_181 = arith.constant 0 : index
    %401 = vector.load %arg15[%c0_180, %c0_181] : memref<1x8xf32, #tpu.memory_space<vmem>>, vector<1x8xf32>
    %402 = vector.broadcast %400 : f32 to vector<1x8xf32>
    %403 = arith.select %398, %402, %401 : vector<1x8xi1>, vector<1x8xf32>
    %c0_182 = arith.constant 0 : index
    %c0_183 = arith.constant 0 : index
    %404 = vector.load %arg15[%c0_182, %c0_183] : memref<1x8xf32, #tpu.memory_space<vmem>>, vector<1x8xf32>
    tpu.vector_store %arg15[%c0_182, %c0_183], %403 {strides = array<i32>} : memref<1x8xf32, #tpu.memory_space<vmem>>, vector<1x8xf32>,
    %c3_184 = arith.constant 3 : index
    %405 = memref.load %arg11[%c3_184] : memref<8xi32, #tpu.memory_space<smem>>
    memref.store %388, %arg11[%c3_184] : memref<8xi32, #tpu.memory_space<smem>>
    %c3_185 = arith.constant 3 : index
    %406 = memref.load %arg12[%c3_185] : memref<8xf32, #tpu.memory_space<smem>>
    memref.store %396, %arg12[%c3_185] : memref<8xf32, #tpu.memory_space<smem>>
    %c4 = arith.constant 4 : index
    %c0_186 = arith.constant 0 : index
    %407 = vector.load %arg9[%c4, %c0_186] : memref<8x8xf32, #tpu.memory_space<vmem>>, vector<1x8xf32>
    %cst_187 = arith.constant 0.000000e+00 : f32
    %408 = vector.broadcast %cst_187 : f32 to vector<1x8xf32>
    %409 = arith.cmpf ogt, %407, %408 : vector<1x8xf32>
    %c0_188 = arith.constant 0 : index
    %c0_189 = arith.constant 0 : index
    %410 = vector.load %arg15[%c0_188, %c0_189] : memref<1x8xf32, #tpu.memory_space<vmem>>, vector<1x8xf32>
    %cst_190 = arith.constant 0xFF800000 : f32
    %411 = vector.broadcast %cst_190 : f32 to vector<1x8xf32>
    %412 = arith.select %409, %410, %411 : vector<1x8xi1>, vector<1x8xf32>
    %c4_191 = arith.constant 4 : index
    %413 = memref.load %arg0[%c4_191] : memref<8xi32, #tpu.memory_space<smem>>
    %c0_i32_192 = arith.constant 0 : i32
    %414 = arith.cmpi sgt, %413, %c0_i32_192 : i32
    %415 = vector.shape_cast %412 : vector<1x8xf32> to vector<1x1x8xf32>
    %cst_193 = arith.constant dense<0xFF800000> : vector<1xf32>
    %416 = vector.multi_reduction <maximumf>, %415, %cst_193 [1, 2] : vector<1x1x8xf32> to vector<1xf32>
    %417 = vector.shape_cast %416 : vector<1xf32> to vector<1x1x1xf32>
    %418 = vector.extract %417[0, 0, 0] : f32 from vector<1x1x1xf32>
    %cst_194 = arith.constant 0.000000e+00 : f32
    %419 = arith.select %414, %418, %cst_194 : f32
    %c4_195 = arith.constant 4 : index
    %c0_196 = arith.constant 0 : index
    %420 = vector.load %arg2[%c4_195, %c0_196] : memref<8x128xf32, #tpu.memory_space<vmem>>, vector<1x128xf32>
    %421 = vector.broadcast %419 : f32 to vector<1x128xf32>
    %422 = arith.mulf %421, %7 : vector<1x128xf32>
    %423 = arith.addf %420, %422 : vector<1x128xf32>
    %c0_197 = arith.constant 0 : index
    %c0_198 = arith.constant 0 : index
    %424 = vector.load %arg14[%c0_197, %c0_198] : memref<1x128xf32, #tpu.memory_space<vmem>>, vector<1x128xf32>
    %425 = arith.addf %423, %424 : vector<1x128xf32>
    %426 = arith.negf %425 : vector<1x128xf32>
    %427 = math.exp %426 : vector<1x128xf32>
    %cst_199 = arith.constant 1.000000e+00 : f32
    %428 = vector.broadcast %cst_199 : f32 to vector<1x128xf32>
    %429 = arith.addf %428, %427 : vector<1x128xf32>
    %430 = arith.divf %428, %429 : vector<1x128xf32>
    %431 = vector.extract_strided_slice %430 {offsets = [0, 0], sizes = [1, 32], strides = [1, 1]} : vector<1x128xf32> to vector<1x32xf32>
    %432 = vector.extract_strided_slice %430 {offsets = [0, 32], sizes = [1, 32], strides = [1, 1]} : vector<1x128xf32> to vector<1x32xf32>
    %433 = vector.extract_strided_slice %430 {offsets = [0, 64], sizes = [1, 32], strides = [1, 1]} : vector<1x128xf32> to vector<1x32xf32>
    %cst_200 = arith.constant 2.000000e+00 : f32
    %434 = vector.broadcast %cst_200 : f32 to vector<1x32xf32>
    %435 = arith.mulf %434, %433 : vector<1x32xf32>
    %cst_201 = arith.constant 1.000000e+00 : f32
    %436 = vector.broadcast %cst_201 : f32 to vector<1x32xf32>
    %437 = arith.subf %435, %436 : vector<1x32xf32>
    %438 = vector.extract_strided_slice %430 {offsets = [0, 96], sizes = [1, 32], strides = [1, 1]} : vector<1x128xf32> to vector<1x32xf32>
    %c0_202 = arith.constant 0 : index
    %c0_203 = arith.constant 0 : index
    %439 = vector.load %arg13[%c0_202, %c0_203] : memref<1x32xf32, #tpu.memory_space<vmem>>, vector<1x32xf32>
    %440 = arith.mulf %432, %439 : vector<1x32xf32>
    %441 = arith.mulf %431, %437 : vector<1x32xf32>
    %442 = arith.addf %440, %441 : vector<1x32xf32>
    %443 = math.tanh %442 : vector<1x32xf32>
    %444 = arith.mulf %438, %443 : vector<1x32xf32>
    %c0_204 = arith.constant 0 : index
    %c0_205 = arith.constant 0 : index
    %445 = vector.load %arg13[%c0_204, %c0_205] : memref<1x32xf32, #tpu.memory_space<vmem>>, vector<1x32xf32>
    tpu.vector_store %arg13[%c0_204, %c0_205], %442 {strides = array<i32>} : memref<1x32xf32, #tpu.memory_space<vmem>>, vector<1x32xf32>,
    %446 = arith.truncf %444 : vector<1x32xf32> to vector<1x32xbf16>
    %cst_206 = arith.constant dense<0.000000e+00> : vector<1x384xf32>
    %447 = tpu.matmul %446, %4, %cst_206 {dimension_numbers = #tpu.dot_dimension_numbers<[1], [0], [0], [1], [0, 0, 1, 1], [], []>} : vector<1x32xbf16>, vector<32x384xbf16>, vector<1x384xf32> -> vector<1x384xf32>
    %448 = vector.extract_strided_slice %447 {offsets = [0, 0], sizes = [1, 128], strides = [1, 1]} : vector<1x384xf32> to vector<1x128xf32>
    %c0_207 = arith.constant 0 : index
    %c0_208 = arith.constant 0 : index
    %449 = vector.load %arg14[%c0_207, %c0_208] : memref<1x128xf32, #tpu.memory_space<vmem>>, vector<1x128xf32>
    tpu.vector_store %arg14[%c0_207, %c0_208], %448 {strides = array<i32>} : memref<1x128xf32, #tpu.memory_space<vmem>>, vector<1x128xf32>,
    %450 = vector.extract_strided_slice %447 {offsets = [0, 128], sizes = [1, 8], strides = [1, 1]} : vector<1x384xf32> to vector<1x8xf32>
    %451 = vector.extract_strided_slice %447 {offsets = [0, 256], sizes = [1, 4], strides = [1, 1]} : vector<1x384xf32> to vector<1x4xf32>
    %cst_209 = arith.constant dense<0xFF800000> : vector<1xf32>
    %452 = vector.multi_reduction <maximumf>, %450, %cst_209 [1] : vector<1x8xf32> to vector<1xf32>
    %453 = vector.shape_cast %452 : vector<1xf32> to vector<1x1xf32>
    %454 = vector.broadcast %453 : vector<1x1xf32> to vector<1x8xf32>
    %455 = arith.subf %450, %454 : vector<1x8xf32>
    %456 = math.exp %455 : vector<1x8xf32>
    %cst_210 = arith.constant dense<0.000000e+00> : vector<1xf32>
    %457 = vector.multi_reduction <add>, %456, %cst_210 [1] : vector<1x8xf32> to vector<1xf32>
    %458 = vector.shape_cast %457 : vector<1xf32> to vector<1x1xf32>
    %459 = vector.broadcast %458 : vector<1x1xf32> to vector<1x8xf32>
    %460 = arith.divf %456, %459 : vector<1x8xf32>
    %461 = arith.truncf %460 : vector<1x8xf32> to vector<1x8xbf16>
    %cst_211 = arith.constant dense<0.000000e+00> : vector<1x32xf32>
    %462 = tpu.matmul %461, %5, %cst_211 {dimension_numbers = #tpu.dot_dimension_numbers<[1], [0], [0], [1], [0, 0, 1, 1], [], []>} : vector<1x8xbf16>, vector<8x32xbf16>, vector<1x32xf32> -> vector<1x32xf32>
    %463 = arith.truncf %462 : vector<1x32xf32> to vector<1x32xbf16>
    %cst_212 = arith.constant dense<0.000000e+00> : vector<1x4xf32>
    %464 = tpu.matmul %463, %6, %cst_212 {dimension_numbers = #tpu.dot_dimension_numbers<[1], [0], [0], [1], [0, 0, 1, 1], [], []>} : vector<1x32xbf16>, vector<32x4xbf16>, vector<1x4xf32> -> vector<1x4xf32>
    %465 = arith.addf %451, %464 : vector<1x4xf32>
    %466 = math.tanh %465 : vector<1x4xf32>
    %cst_213 = arith.constant 1.000000e+01 : f32
    %467 = vector.broadcast %cst_213 : f32 to vector<1x4xf32>
    %468 = arith.mulf %467, %466 : vector<1x4xf32>
    %469 = math.exp %468 : vector<1x4xf32>
    %cst_214 = arith.constant dense<0.000000e+00> : vector<1xf32>
    %470 = vector.multi_reduction <add>, %469, %cst_214 [1] : vector<1x4xf32> to vector<1xf32>
    %471 = vector.shape_cast %470 : vector<1xf32> to vector<1x1xf32>
    %472 = math.log %471 : vector<1x1xf32>
    %473 = vector.broadcast %472 : vector<1x1xf32> to vector<1x4xf32>
    %474 = arith.subf %468, %473 : vector<1x4xf32>
    %c4_215 = arith.constant 4 : index
    %c0_216 = arith.constant 0 : index
    %475 = vector.load %arg10[%c4_215, %c0_216] : memref<8x4xf32, #tpu.memory_space<vmem>>, vector<1x4xf32>
    %476 = arith.addf %468, %475 : vector<1x4xf32>
    %cst_217 = arith.constant dense<0xFF800000> : vector<1xf32>
    %477 = vector.multi_reduction <maximumf>, %476, %cst_217 [1] : vector<1x4xf32> to vector<1xf32>
    %478 = vector.shape_cast %477 : vector<1xf32> to vector<1x1xf32>
    %479 = vector.broadcast %478 : vector<1x1xf32> to vector<1x4xf32>
    %480 = arith.cmpf oge, %476, %479 : vector<1x4xf32>
    %c4_i32_218 = arith.constant 4 : i32
    %481 = vector.broadcast %c4_i32_218 : i32 to vector<1x4xi32>
    %482 = arith.select %480, %14, %481 : vector<1x4xi1>, vector<1x4xi32>
    %483 = vector.shape_cast %482 : vector<1x4xi32> to vector<1x1x4xi32>
    %cst_219 = arith.constant dense<2147483647> : vector<1xi32>
    %484 = vector.multi_reduction <minsi>, %483, %cst_219 [1, 2] : vector<1x1x4xi32> to vector<1xi32>
    %485 = vector.shape_cast %484 : vector<1xi32> to vector<1x1x1xi32>
    %486 = vector.extract %485[0, 0, 0] : i32 from vector<1x1x1xi32>
    %487 = vector.broadcast %486 : i32 to vector<1x4xi32>
    %488 = arith.cmpi eq, %14, %487 : vector<1x4xi32>
    %cst_220 = arith.constant 0.000000e+00 : f32
    %489 = vector.broadcast %cst_220 : f32 to vector<1x4xf32>
    %490 = arith.select %488, %474, %489 : vector<1x4xi1>, vector<1x4xf32>
    %491 = vector.shape_cast %490 : vector<1x4xf32> to vector<1x1x4xf32>
    %cst_221 = arith.constant dense<0.000000e+00> : vector<1xf32>
    %492 = vector.multi_reduction <add>, %491, %cst_221 [1, 2] : vector<1x1x4xf32> to vector<1xf32>
    %493 = vector.shape_cast %492 : vector<1xf32> to vector<1x1x1xf32>
    %494 = vector.extract %493[0, 0, 0] : f32 from vector<1x1x1xf32>
    %c4_i32_222 = arith.constant 4 : i32
    %495 = vector.broadcast %c4_i32_222 : i32 to vector<1x8xi32>
    %496 = arith.cmpi eq, %13, %495 : vector<1x8xi32>
    %497 = arith.index_cast %486 : i32 to index
    %498 = memref.load %arg1[%497] : memref<4xf32, #tpu.memory_space<smem>>
    %c0_223 = arith.constant 0 : index
    %c0_224 = arith.constant 0 : index
    %499 = vector.load %arg15[%c0_223, %c0_224] : memref<1x8xf32, #tpu.memory_space<vmem>>, vector<1x8xf32>
    %500 = vector.broadcast %498 : f32 to vector<1x8xf32>
    %501 = arith.select %496, %500, %499 : vector<1x8xi1>, vector<1x8xf32>
    %c0_225 = arith.constant 0 : index
    %c0_226 = arith.constant 0 : index
    %502 = vector.load %arg15[%c0_225, %c0_226] : memref<1x8xf32, #tpu.memory_space<vmem>>, vector<1x8xf32>
    tpu.vector_store %arg15[%c0_225, %c0_226], %501 {strides = array<i32>} : memref<1x8xf32, #tpu.memory_space<vmem>>, vector<1x8xf32>,
    %c4_227 = arith.constant 4 : index
    %503 = memref.load %arg11[%c4_227] : memref<8xi32, #tpu.memory_space<smem>>
    memref.store %486, %arg11[%c4_227] : memref<8xi32, #tpu.memory_space<smem>>
    %c4_228 = arith.constant 4 : index
    %504 = memref.load %arg12[%c4_228] : memref<8xf32, #tpu.memory_space<smem>>
    memref.store %494, %arg12[%c4_228] : memref<8xf32, #tpu.memory_space<smem>>
    %c5 = arith.constant 5 : index
    %c0_229 = arith.constant 0 : index
    %505 = vector.load %arg9[%c5, %c0_229] : memref<8x8xf32, #tpu.memory_space<vmem>>, vector<1x8xf32>
    %cst_230 = arith.constant 0.000000e+00 : f32
    %506 = vector.broadcast %cst_230 : f32 to vector<1x8xf32>
    %507 = arith.cmpf ogt, %505, %506 : vector<1x8xf32>
    %c0_231 = arith.constant 0 : index
    %c0_232 = arith.constant 0 : index
    %508 = vector.load %arg15[%c0_231, %c0_232] : memref<1x8xf32, #tpu.memory_space<vmem>>, vector<1x8xf32>
    %cst_233 = arith.constant 0xFF800000 : f32
    %509 = vector.broadcast %cst_233 : f32 to vector<1x8xf32>
    %510 = arith.select %507, %508, %509 : vector<1x8xi1>, vector<1x8xf32>
    %c5_234 = arith.constant 5 : index
    %511 = memref.load %arg0[%c5_234] : memref<8xi32, #tpu.memory_space<smem>>
    %c0_i32_235 = arith.constant 0 : i32
    %512 = arith.cmpi sgt, %511, %c0_i32_235 : i32
    %513 = vector.shape_cast %510 : vector<1x8xf32> to vector<1x1x8xf32>
    %cst_236 = arith.constant dense<0xFF800000> : vector<1xf32>
    %514 = vector.multi_reduction <maximumf>, %513, %cst_236 [1, 2] : vector<1x1x8xf32> to vector<1xf32>
    %515 = vector.shape_cast %514 : vector<1xf32> to vector<1x1x1xf32>
    %516 = vector.extract %515[0, 0, 0] : f32 from vector<1x1x1xf32>
    %cst_237 = arith.constant 0.000000e+00 : f32
    %517 = arith.select %512, %516, %cst_237 : f32
    %c5_238 = arith.constant 5 : index
    %c0_239 = arith.constant 0 : index
    %518 = vector.load %arg2[%c5_238, %c0_239] : memref<8x128xf32, #tpu.memory_space<vmem>>, vector<1x128xf32>
    %519 = vector.broadcast %517 : f32 to vector<1x128xf32>
    %520 = arith.mulf %519, %7 : vector<1x128xf32>
    %521 = arith.addf %518, %520 : vector<1x128xf32>
    %c0_240 = arith.constant 0 : index
    %c0_241 = arith.constant 0 : index
    %522 = vector.load %arg14[%c0_240, %c0_241] : memref<1x128xf32, #tpu.memory_space<vmem>>, vector<1x128xf32>
    %523 = arith.addf %521, %522 : vector<1x128xf32>
    %524 = arith.negf %523 : vector<1x128xf32>
    %525 = math.exp %524 : vector<1x128xf32>
    %cst_242 = arith.constant 1.000000e+00 : f32
    %526 = vector.broadcast %cst_242 : f32 to vector<1x128xf32>
    %527 = arith.addf %526, %525 : vector<1x128xf32>
    %528 = arith.divf %526, %527 : vector<1x128xf32>
    %529 = vector.extract_strided_slice %528 {offsets = [0, 0], sizes = [1, 32], strides = [1, 1]} : vector<1x128xf32> to vector<1x32xf32>
    %530 = vector.extract_strided_slice %528 {offsets = [0, 32], sizes = [1, 32], strides = [1, 1]} : vector<1x128xf32> to vector<1x32xf32>
    %531 = vector.extract_strided_slice %528 {offsets = [0, 64], sizes = [1, 32], strides = [1, 1]} : vector<1x128xf32> to vector<1x32xf32>
    %cst_243 = arith.constant 2.000000e+00 : f32
    %532 = vector.broadcast %cst_243 : f32 to vector<1x32xf32>
    %533 = arith.mulf %532, %531 : vector<1x32xf32>
    %cst_244 = arith.constant 1.000000e+00 : f32
    %534 = vector.broadcast %cst_244 : f32 to vector<1x32xf32>
    %535 = arith.subf %533, %534 : vector<1x32xf32>
    %536 = vector.extract_strided_slice %528 {offsets = [0, 96], sizes = [1, 32], strides = [1, 1]} : vector<1x128xf32> to vector<1x32xf32>
    %c0_245 = arith.constant 0 : index
    %c0_246 = arith.constant 0 : index
    %537 = vector.load %arg13[%c0_245, %c0_246] : memref<1x32xf32, #tpu.memory_space<vmem>>, vector<1x32xf32>
    %538 = arith.mulf %530, %537 : vector<1x32xf32>
    %539 = arith.mulf %529, %535 : vector<1x32xf32>
    %540 = arith.addf %538, %539 : vector<1x32xf32>
    %541 = math.tanh %540 : vector<1x32xf32>
    %542 = arith.mulf %536, %541 : vector<1x32xf32>
    %c0_247 = arith.constant 0 : index
    %c0_248 = arith.constant 0 : index
    %543 = vector.load %arg13[%c0_247, %c0_248] : memref<1x32xf32, #tpu.memory_space<vmem>>, vector<1x32xf32>
    tpu.vector_store %arg13[%c0_247, %c0_248], %540 {strides = array<i32>} : memref<1x32xf32, #tpu.memory_space<vmem>>, vector<1x32xf32>,
    %544 = arith.truncf %542 : vector<1x32xf32> to vector<1x32xbf16>
    %cst_249 = arith.constant dense<0.000000e+00> : vector<1x384xf32>
    %545 = tpu.matmul %544, %4, %cst_249 {dimension_numbers = #tpu.dot_dimension_numbers<[1], [0], [0], [1], [0, 0, 1, 1], [], []>} : vector<1x32xbf16>, vector<32x384xbf16>, vector<1x384xf32> -> vector<1x384xf32>
    %546 = vector.extract_strided_slice %545 {offsets = [0, 0], sizes = [1, 128], strides = [1, 1]} : vector<1x384xf32> to vector<1x128xf32>
    %c0_250 = arith.constant 0 : index
    %c0_251 = arith.constant 0 : index
    %547 = vector.load %arg14[%c0_250, %c0_251] : memref<1x128xf32, #tpu.memory_space<vmem>>, vector<1x128xf32>
    tpu.vector_store %arg14[%c0_250, %c0_251], %546 {strides = array<i32>} : memref<1x128xf32, #tpu.memory_space<vmem>>, vector<1x128xf32>,
    %548 = vector.extract_strided_slice %545 {offsets = [0, 128], sizes = [1, 8], strides = [1, 1]} : vector<1x384xf32> to vector<1x8xf32>
    %549 = vector.extract_strided_slice %545 {offsets = [0, 256], sizes = [1, 4], strides = [1, 1]} : vector<1x384xf32> to vector<1x4xf32>
    %cst_252 = arith.constant dense<0xFF800000> : vector<1xf32>
    %550 = vector.multi_reduction <maximumf>, %548, %cst_252 [1] : vector<1x8xf32> to vector<1xf32>
    %551 = vector.shape_cast %550 : vector<1xf32> to vector<1x1xf32>
    %552 = vector.broadcast %551 : vector<1x1xf32> to vector<1x8xf32>
    %553 = arith.subf %548, %552 : vector<1x8xf32>
    %554 = math.exp %553 : vector<1x8xf32>
    %cst_253 = arith.constant dense<0.000000e+00> : vector<1xf32>
    %555 = vector.multi_reduction <add>, %554, %cst_253 [1] : vector<1x8xf32> to vector<1xf32>
    %556 = vector.shape_cast %555 : vector<1xf32> to vector<1x1xf32>
    %557 = vector.broadcast %556 : vector<1x1xf32> to vector<1x8xf32>
    %558 = arith.divf %554, %557 : vector<1x8xf32>
    %559 = arith.truncf %558 : vector<1x8xf32> to vector<1x8xbf16>
    %cst_254 = arith.constant dense<0.000000e+00> : vector<1x32xf32>
    %560 = tpu.matmul %559, %5, %cst_254 {dimension_numbers = #tpu.dot_dimension_numbers<[1], [0], [0], [1], [0, 0, 1, 1], [], []>} : vector<1x8xbf16>, vector<8x32xbf16>, vector<1x32xf32> -> vector<1x32xf32>
    %561 = arith.truncf %560 : vector<1x32xf32> to vector<1x32xbf16>
    %cst_255 = arith.constant dense<0.000000e+00> : vector<1x4xf32>
    %562 = tpu.matmul %561, %6, %cst_255 {dimension_numbers = #tpu.dot_dimension_numbers<[1], [0], [0], [1], [0, 0, 1, 1], [], []>} : vector<1x32xbf16>, vector<32x4xbf16>, vector<1x4xf32> -> vector<1x4xf32>
    %563 = arith.addf %549, %562 : vector<1x4xf32>
    %564 = math.tanh %563 : vector<1x4xf32>
    %cst_256 = arith.constant 1.000000e+01 : f32
    %565 = vector.broadcast %cst_256 : f32 to vector<1x4xf32>
    %566 = arith.mulf %565, %564 : vector<1x4xf32>
    %567 = math.exp %566 : vector<1x4xf32>
    %cst_257 = arith.constant dense<0.000000e+00> : vector<1xf32>
    %568 = vector.multi_reduction <add>, %567, %cst_257 [1] : vector<1x4xf32> to vector<1xf32>
    %569 = vector.shape_cast %568 : vector<1xf32> to vector<1x1xf32>
    %570 = math.log %569 : vector<1x1xf32>
    %571 = vector.broadcast %570 : vector<1x1xf32> to vector<1x4xf32>
    %572 = arith.subf %566, %571 : vector<1x4xf32>
    %c5_258 = arith.constant 5 : index
    %c0_259 = arith.constant 0 : index
    %573 = vector.load %arg10[%c5_258, %c0_259] : memref<8x4xf32, #tpu.memory_space<vmem>>, vector<1x4xf32>
    %574 = arith.addf %566, %573 : vector<1x4xf32>
    %cst_260 = arith.constant dense<0xFF800000> : vector<1xf32>
    %575 = vector.multi_reduction <maximumf>, %574, %cst_260 [1] : vector<1x4xf32> to vector<1xf32>
    %576 = vector.shape_cast %575 : vector<1xf32> to vector<1x1xf32>
    %577 = vector.broadcast %576 : vector<1x1xf32> to vector<1x4xf32>
    %578 = arith.cmpf oge, %574, %577 : vector<1x4xf32>
    %c4_i32_261 = arith.constant 4 : i32
    %579 = vector.broadcast %c4_i32_261 : i32 to vector<1x4xi32>
    %580 = arith.select %578, %14, %579 : vector<1x4xi1>, vector<1x4xi32>
    %581 = vector.shape_cast %580 : vector<1x4xi32> to vector<1x1x4xi32>
    %cst_262 = arith.constant dense<2147483647> : vector<1xi32>
    %582 = vector.multi_reduction <minsi>, %581, %cst_262 [1, 2] : vector<1x1x4xi32> to vector<1xi32>
    %583 = vector.shape_cast %582 : vector<1xi32> to vector<1x1x1xi32>
    %584 = vector.extract %583[0, 0, 0] : i32 from vector<1x1x1xi32>
    %585 = vector.broadcast %584 : i32 to vector<1x4xi32>
    %586 = arith.cmpi eq, %14, %585 : vector<1x4xi32>
    %cst_263 = arith.constant 0.000000e+00 : f32
    %587 = vector.broadcast %cst_263 : f32 to vector<1x4xf32>
    %588 = arith.select %586, %572, %587 : vector<1x4xi1>, vector<1x4xf32>
    %589 = vector.shape_cast %588 : vector<1x4xf32> to vector<1x1x4xf32>
    %cst_264 = arith.constant dense<0.000000e+00> : vector<1xf32>
    %590 = vector.multi_reduction <add>, %589, %cst_264 [1, 2] : vector<1x1x4xf32> to vector<1xf32>
    %591 = vector.shape_cast %590 : vector<1xf32> to vector<1x1x1xf32>
    %592 = vector.extract %591[0, 0, 0] : f32 from vector<1x1x1xf32>
    %c5_i32 = arith.constant 5 : i32
    %593 = vector.broadcast %c5_i32 : i32 to vector<1x8xi32>
    %594 = arith.cmpi eq, %13, %593 : vector<1x8xi32>
    %595 = arith.index_cast %584 : i32 to index
    %596 = memref.load %arg1[%595] : memref<4xf32, #tpu.memory_space<smem>>
    %c0_265 = arith.constant 0 : index
    %c0_266 = arith.constant 0 : index
    %597 = vector.load %arg15[%c0_265, %c0_266] : memref<1x8xf32, #tpu.memory_space<vmem>>, vector<1x8xf32>
    %598 = vector.broadcast %596 : f32 to vector<1x8xf32>
    %599 = arith.select %594, %598, %597 : vector<1x8xi1>, vector<1x8xf32>
    %c0_267 = arith.constant 0 : index
    %c0_268 = arith.constant 0 : index
    %600 = vector.load %arg15[%c0_267, %c0_268] : memref<1x8xf32, #tpu.memory_space<vmem>>, vector<1x8xf32>
    tpu.vector_store %arg15[%c0_267, %c0_268], %599 {strides = array<i32>} : memref<1x8xf32, #tpu.memory_space<vmem>>, vector<1x8xf32>,
    %c5_269 = arith.constant 5 : index
    %601 = memref.load %arg11[%c5_269] : memref<8xi32, #tpu.memory_space<smem>>
    memref.store %584, %arg11[%c5_269] : memref<8xi32, #tpu.memory_space<smem>>
    %c5_270 = arith.constant 5 : index
    %602 = memref.load %arg12[%c5_270] : memref<8xf32, #tpu.memory_space<smem>>
    memref.store %592, %arg12[%c5_270] : memref<8xf32, #tpu.memory_space<smem>>
    %c6 = arith.constant 6 : index
    %c0_271 = arith.constant 0 : index
    %603 = vector.load %arg9[%c6, %c0_271] : memref<8x8xf32, #tpu.memory_space<vmem>>, vector<1x8xf32>
    %cst_272 = arith.constant 0.000000e+00 : f32
    %604 = vector.broadcast %cst_272 : f32 to vector<1x8xf32>
    %605 = arith.cmpf ogt, %603, %604 : vector<1x8xf32>
    %c0_273 = arith.constant 0 : index
    %c0_274 = arith.constant 0 : index
    %606 = vector.load %arg15[%c0_273, %c0_274] : memref<1x8xf32, #tpu.memory_space<vmem>>, vector<1x8xf32>
    %cst_275 = arith.constant 0xFF800000 : f32
    %607 = vector.broadcast %cst_275 : f32 to vector<1x8xf32>
    %608 = arith.select %605, %606, %607 : vector<1x8xi1>, vector<1x8xf32>
    %c6_276 = arith.constant 6 : index
    %609 = memref.load %arg0[%c6_276] : memref<8xi32, #tpu.memory_space<smem>>
    %c0_i32_277 = arith.constant 0 : i32
    %610 = arith.cmpi sgt, %609, %c0_i32_277 : i32
    %611 = vector.shape_cast %608 : vector<1x8xf32> to vector<1x1x8xf32>
    %cst_278 = arith.constant dense<0xFF800000> : vector<1xf32>
    %612 = vector.multi_reduction <maximumf>, %611, %cst_278 [1, 2] : vector<1x1x8xf32> to vector<1xf32>
    %613 = vector.shape_cast %612 : vector<1xf32> to vector<1x1x1xf32>
    %614 = vector.extract %613[0, 0, 0] : f32 from vector<1x1x1xf32>
    %cst_279 = arith.constant 0.000000e+00 : f32
    %615 = arith.select %610, %614, %cst_279 : f32
    %c6_280 = arith.constant 6 : index
    %c0_281 = arith.constant 0 : index
    %616 = vector.load %arg2[%c6_280, %c0_281] : memref<8x128xf32, #tpu.memory_space<vmem>>, vector<1x128xf32>
    %617 = vector.broadcast %615 : f32 to vector<1x128xf32>
    %618 = arith.mulf %617, %7 : vector<1x128xf32>
    %619 = arith.addf %616, %618 : vector<1x128xf32>
    %c0_282 = arith.constant 0 : index
    %c0_283 = arith.constant 0 : index
    %620 = vector.load %arg14[%c0_282, %c0_283] : memref<1x128xf32, #tpu.memory_space<vmem>>, vector<1x128xf32>
    %621 = arith.addf %619, %620 : vector<1x128xf32>
    %622 = arith.negf %621 : vector<1x128xf32>
    %623 = math.exp %622 : vector<1x128xf32>
    %cst_284 = arith.constant 1.000000e+00 : f32
    %624 = vector.broadcast %cst_284 : f32 to vector<1x128xf32>
    %625 = arith.addf %624, %623 : vector<1x128xf32>
    %626 = arith.divf %624, %625 : vector<1x128xf32>
    %627 = vector.extract_strided_slice %626 {offsets = [0, 0], sizes = [1, 32], strides = [1, 1]} : vector<1x128xf32> to vector<1x32xf32>
    %628 = vector.extract_strided_slice %626 {offsets = [0, 32], sizes = [1, 32], strides = [1, 1]} : vector<1x128xf32> to vector<1x32xf32>
    %629 = vector.extract_strided_slice %626 {offsets = [0, 64], sizes = [1, 32], strides = [1, 1]} : vector<1x128xf32> to vector<1x32xf32>
    %cst_285 = arith.constant 2.000000e+00 : f32
    %630 = vector.broadcast %cst_285 : f32 to vector<1x32xf32>
    %631 = arith.mulf %630, %629 : vector<1x32xf32>
    %cst_286 = arith.constant 1.000000e+00 : f32
    %632 = vector.broadcast %cst_286 : f32 to vector<1x32xf32>
    %633 = arith.subf %631, %632 : vector<1x32xf32>
    %634 = vector.extract_strided_slice %626 {offsets = [0, 96], sizes = [1, 32], strides = [1, 1]} : vector<1x128xf32> to vector<1x32xf32>
    %c0_287 = arith.constant 0 : index
    %c0_288 = arith.constant 0 : index
    %635 = vector.load %arg13[%c0_287, %c0_288] : memref<1x32xf32, #tpu.memory_space<vmem>>, vector<1x32xf32>
    %636 = arith.mulf %628, %635 : vector<1x32xf32>
    %637 = arith.mulf %627, %633 : vector<1x32xf32>
    %638 = arith.addf %636, %637 : vector<1x32xf32>
    %639 = math.tanh %638 : vector<1x32xf32>
    %640 = arith.mulf %634, %639 : vector<1x32xf32>
    %c0_289 = arith.constant 0 : index
    %c0_290 = arith.constant 0 : index
    %641 = vector.load %arg13[%c0_289, %c0_290] : memref<1x32xf32, #tpu.memory_space<vmem>>, vector<1x32xf32>
    tpu.vector_store %arg13[%c0_289, %c0_290], %638 {strides = array<i32>} : memref<1x32xf32, #tpu.memory_space<vmem>>, vector<1x32xf32>,
    %642 = arith.truncf %640 : vector<1x32xf32> to vector<1x32xbf16>
    %cst_291 = arith.constant dense<0.000000e+00> : vector<1x384xf32>
    %643 = tpu.matmul %642, %4, %cst_291 {dimension_numbers = #tpu.dot_dimension_numbers<[1], [0], [0], [1], [0, 0, 1, 1], [], []>} : vector<1x32xbf16>, vector<32x384xbf16>, vector<1x384xf32> -> vector<1x384xf32>
    %644 = vector.extract_strided_slice %643 {offsets = [0, 0], sizes = [1, 128], strides = [1, 1]} : vector<1x384xf32> to vector<1x128xf32>
    %c0_292 = arith.constant 0 : index
    %c0_293 = arith.constant 0 : index
    %645 = vector.load %arg14[%c0_292, %c0_293] : memref<1x128xf32, #tpu.memory_space<vmem>>, vector<1x128xf32>
    tpu.vector_store %arg14[%c0_292, %c0_293], %644 {strides = array<i32>} : memref<1x128xf32, #tpu.memory_space<vmem>>, vector<1x128xf32>,
    %646 = vector.extract_strided_slice %643 {offsets = [0, 128], sizes = [1, 8], strides = [1, 1]} : vector<1x384xf32> to vector<1x8xf32>
    %647 = vector.extract_strided_slice %643 {offsets = [0, 256], sizes = [1, 4], strides = [1, 1]} : vector<1x384xf32> to vector<1x4xf32>
    %cst_294 = arith.constant dense<0xFF800000> : vector<1xf32>
    %648 = vector.multi_reduction <maximumf>, %646, %cst_294 [1] : vector<1x8xf32> to vector<1xf32>
    %649 = vector.shape_cast %648 : vector<1xf32> to vector<1x1xf32>
    %650 = vector.broadcast %649 : vector<1x1xf32> to vector<1x8xf32>
    %651 = arith.subf %646, %650 : vector<1x8xf32>
    %652 = math.exp %651 : vector<1x8xf32>
    %cst_295 = arith.constant dense<0.000000e+00> : vector<1xf32>
    %653 = vector.multi_reduction <add>, %652, %cst_295 [1] : vector<1x8xf32> to vector<1xf32>
    %654 = vector.shape_cast %653 : vector<1xf32> to vector<1x1xf32>
    %655 = vector.broadcast %654 : vector<1x1xf32> to vector<1x8xf32>
    %656 = arith.divf %652, %655 : vector<1x8xf32>
    %657 = arith.truncf %656 : vector<1x8xf32> to vector<1x8xbf16>
    %cst_296 = arith.constant dense<0.000000e+00> : vector<1x32xf32>
    %658 = tpu.matmul %657, %5, %cst_296 {dimension_numbers = #tpu.dot_dimension_numbers<[1], [0], [0], [1], [0, 0, 1, 1], [], []>} : vector<1x8xbf16>, vector<8x32xbf16>, vector<1x32xf32> -> vector<1x32xf32>
    %659 = arith.truncf %658 : vector<1x32xf32> to vector<1x32xbf16>
    %cst_297 = arith.constant dense<0.000000e+00> : vector<1x4xf32>
    %660 = tpu.matmul %659, %6, %cst_297 {dimension_numbers = #tpu.dot_dimension_numbers<[1], [0], [0], [1], [0, 0, 1, 1], [], []>} : vector<1x32xbf16>, vector<32x4xbf16>, vector<1x4xf32> -> vector<1x4xf32>
    %661 = arith.addf %647, %660 : vector<1x4xf32>
    %662 = math.tanh %661 : vector<1x4xf32>
    %cst_298 = arith.constant 1.000000e+01 : f32
    %663 = vector.broadcast %cst_298 : f32 to vector<1x4xf32>
    %664 = arith.mulf %663, %662 : vector<1x4xf32>
    %665 = math.exp %664 : vector<1x4xf32>
    %cst_299 = arith.constant dense<0.000000e+00> : vector<1xf32>
    %666 = vector.multi_reduction <add>, %665, %cst_299 [1] : vector<1x4xf32> to vector<1xf32>
    %667 = vector.shape_cast %666 : vector<1xf32> to vector<1x1xf32>
    %668 = math.log %667 : vector<1x1xf32>
    %669 = vector.broadcast %668 : vector<1x1xf32> to vector<1x4xf32>
    %670 = arith.subf %664, %669 : vector<1x4xf32>
    %c6_300 = arith.constant 6 : index
    %c0_301 = arith.constant 0 : index
    %671 = vector.load %arg10[%c6_300, %c0_301] : memref<8x4xf32, #tpu.memory_space<vmem>>, vector<1x4xf32>
    %672 = arith.addf %664, %671 : vector<1x4xf32>
    %cst_302 = arith.constant dense<0xFF800000> : vector<1xf32>
    %673 = vector.multi_reduction <maximumf>, %672, %cst_302 [1] : vector<1x4xf32> to vector<1xf32>
    %674 = vector.shape_cast %673 : vector<1xf32> to vector<1x1xf32>
    %675 = vector.broadcast %674 : vector<1x1xf32> to vector<1x4xf32>
    %676 = arith.cmpf oge, %672, %675 : vector<1x4xf32>
    %c4_i32_303 = arith.constant 4 : i32
    %677 = vector.broadcast %c4_i32_303 : i32 to vector<1x4xi32>
    %678 = arith.select %676, %14, %677 : vector<1x4xi1>, vector<1x4xi32>
    %679 = vector.shape_cast %678 : vector<1x4xi32> to vector<1x1x4xi32>
    %cst_304 = arith.constant dense<2147483647> : vector<1xi32>
    %680 = vector.multi_reduction <minsi>, %679, %cst_304 [1, 2] : vector<1x1x4xi32> to vector<1xi32>
    %681 = vector.shape_cast %680 : vector<1xi32> to vector<1x1x1xi32>
    %682 = vector.extract %681[0, 0, 0] : i32 from vector<1x1x1xi32>
    %683 = vector.broadcast %682 : i32 to vector<1x4xi32>
    %684 = arith.cmpi eq, %14, %683 : vector<1x4xi32>
    %cst_305 = arith.constant 0.000000e+00 : f32
    %685 = vector.broadcast %cst_305 : f32 to vector<1x4xf32>
    %686 = arith.select %684, %670, %685 : vector<1x4xi1>, vector<1x4xf32>
    %687 = vector.shape_cast %686 : vector<1x4xf32> to vector<1x1x4xf32>
    %cst_306 = arith.constant dense<0.000000e+00> : vector<1xf32>
    %688 = vector.multi_reduction <add>, %687, %cst_306 [1, 2] : vector<1x1x4xf32> to vector<1xf32>
    %689 = vector.shape_cast %688 : vector<1xf32> to vector<1x1x1xf32>
    %690 = vector.extract %689[0, 0, 0] : f32 from vector<1x1x1xf32>
    %c6_i32 = arith.constant 6 : i32
    %691 = vector.broadcast %c6_i32 : i32 to vector<1x8xi32>
    %692 = arith.cmpi eq, %13, %691 : vector<1x8xi32>
    %693 = arith.index_cast %682 : i32 to index
    %694 = memref.load %arg1[%693] : memref<4xf32, #tpu.memory_space<smem>>
    %c0_307 = arith.constant 0 : index
    %c0_308 = arith.constant 0 : index
    %695 = vector.load %arg15[%c0_307, %c0_308] : memref<1x8xf32, #tpu.memory_space<vmem>>, vector<1x8xf32>
    %696 = vector.broadcast %694 : f32 to vector<1x8xf32>
    %697 = arith.select %692, %696, %695 : vector<1x8xi1>, vector<1x8xf32>
    %c0_309 = arith.constant 0 : index
    %c0_310 = arith.constant 0 : index
    %698 = vector.load %arg15[%c0_309, %c0_310] : memref<1x8xf32, #tpu.memory_space<vmem>>, vector<1x8xf32>
    tpu.vector_store %arg15[%c0_309, %c0_310], %697 {strides = array<i32>} : memref<1x8xf32, #tpu.memory_space<vmem>>, vector<1x8xf32>,
    %c6_311 = arith.constant 6 : index
    %699 = memref.load %arg11[%c6_311] : memref<8xi32, #tpu.memory_space<smem>>
    memref.store %682, %arg11[%c6_311] : memref<8xi32, #tpu.memory_space<smem>>
    %c6_312 = arith.constant 6 : index
    %700 = memref.load %arg12[%c6_312] : memref<8xf32, #tpu.memory_space<smem>>
    memref.store %690, %arg12[%c6_312] : memref<8xf32, #tpu.memory_space<smem>>
    %c7 = arith.constant 7 : index
    %c0_313 = arith.constant 0 : index
    %701 = vector.load %arg9[%c7, %c0_313] : memref<8x8xf32, #tpu.memory_space<vmem>>, vector<1x8xf32>
    %cst_314 = arith.constant 0.000000e+00 : f32
    %702 = vector.broadcast %cst_314 : f32 to vector<1x8xf32>
    %703 = arith.cmpf ogt, %701, %702 : vector<1x8xf32>
    %c0_315 = arith.constant 0 : index
    %c0_316 = arith.constant 0 : index
    %704 = vector.load %arg15[%c0_315, %c0_316] : memref<1x8xf32, #tpu.memory_space<vmem>>, vector<1x8xf32>
    %cst_317 = arith.constant 0xFF800000 : f32
    %705 = vector.broadcast %cst_317 : f32 to vector<1x8xf32>
    %706 = arith.select %703, %704, %705 : vector<1x8xi1>, vector<1x8xf32>
    %c7_318 = arith.constant 7 : index
    %707 = memref.load %arg0[%c7_318] : memref<8xi32, #tpu.memory_space<smem>>
    %c0_i32_319 = arith.constant 0 : i32
    %708 = arith.cmpi sgt, %707, %c0_i32_319 : i32
    %709 = vector.shape_cast %706 : vector<1x8xf32> to vector<1x1x8xf32>
    %cst_320 = arith.constant dense<0xFF800000> : vector<1xf32>
    %710 = vector.multi_reduction <maximumf>, %709, %cst_320 [1, 2] : vector<1x1x8xf32> to vector<1xf32>
    %711 = vector.shape_cast %710 : vector<1xf32> to vector<1x1x1xf32>
    %712 = vector.extract %711[0, 0, 0] : f32 from vector<1x1x1xf32>
    %cst_321 = arith.constant 0.000000e+00 : f32
    %713 = arith.select %708, %712, %cst_321 : f32
    %c7_322 = arith.constant 7 : index
    %c0_323 = arith.constant 0 : index
    %714 = vector.load %arg2[%c7_322, %c0_323] : memref<8x128xf32, #tpu.memory_space<vmem>>, vector<1x128xf32>
    %715 = vector.broadcast %713 : f32 to vector<1x128xf32>
    %716 = arith.mulf %715, %7 : vector<1x128xf32>
    %717 = arith.addf %714, %716 : vector<1x128xf32>
    %c0_324 = arith.constant 0 : index
    %c0_325 = arith.constant 0 : index
    %718 = vector.load %arg14[%c0_324, %c0_325] : memref<1x128xf32, #tpu.memory_space<vmem>>, vector<1x128xf32>
    %719 = arith.addf %717, %718 : vector<1x128xf32>
    %720 = arith.negf %719 : vector<1x128xf32>
    %721 = math.exp %720 : vector<1x128xf32>
    %cst_326 = arith.constant 1.000000e+00 : f32
    %722 = vector.broadcast %cst_326 : f32 to vector<1x128xf32>
    %723 = arith.addf %722, %721 : vector<1x128xf32>
    %724 = arith.divf %722, %723 : vector<1x128xf32>
    %725 = vector.extract_strided_slice %724 {offsets = [0, 0], sizes = [1, 32], strides = [1, 1]} : vector<1x128xf32> to vector<1x32xf32>
    %726 = vector.extract_strided_slice %724 {offsets = [0, 32], sizes = [1, 32], strides = [1, 1]} : vector<1x128xf32> to vector<1x32xf32>
    %727 = vector.extract_strided_slice %724 {offsets = [0, 64], sizes = [1, 32], strides = [1, 1]} : vector<1x128xf32> to vector<1x32xf32>
    %cst_327 = arith.constant 2.000000e+00 : f32
    %728 = vector.broadcast %cst_327 : f32 to vector<1x32xf32>
    %729 = arith.mulf %728, %727 : vector<1x32xf32>
    %cst_328 = arith.constant 1.000000e+00 : f32
    %730 = vector.broadcast %cst_328 : f32 to vector<1x32xf32>
    %731 = arith.subf %729, %730 : vector<1x32xf32>
    %732 = vector.extract_strided_slice %724 {offsets = [0, 96], sizes = [1, 32], strides = [1, 1]} : vector<1x128xf32> to vector<1x32xf32>
    %c0_329 = arith.constant 0 : index
    %c0_330 = arith.constant 0 : index
    %733 = vector.load %arg13[%c0_329, %c0_330] : memref<1x32xf32, #tpu.memory_space<vmem>>, vector<1x32xf32>
    %734 = arith.mulf %726, %733 : vector<1x32xf32>
    %735 = arith.mulf %725, %731 : vector<1x32xf32>
    %736 = arith.addf %734, %735 : vector<1x32xf32>
    %737 = math.tanh %736 : vector<1x32xf32>
    %738 = arith.mulf %732, %737 : vector<1x32xf32>
    %c0_331 = arith.constant 0 : index
    %c0_332 = arith.constant 0 : index
    %739 = vector.load %arg13[%c0_331, %c0_332] : memref<1x32xf32, #tpu.memory_space<vmem>>, vector<1x32xf32>
    tpu.vector_store %arg13[%c0_331, %c0_332], %736 {strides = array<i32>} : memref<1x32xf32, #tpu.memory_space<vmem>>, vector<1x32xf32>,
    %740 = arith.truncf %738 : vector<1x32xf32> to vector<1x32xbf16>
    %cst_333 = arith.constant dense<0.000000e+00> : vector<1x384xf32>
    %741 = tpu.matmul %740, %4, %cst_333 {dimension_numbers = #tpu.dot_dimension_numbers<[1], [0], [0], [1], [0, 0, 1, 1], [], []>} : vector<1x32xbf16>, vector<32x384xbf16>, vector<1x384xf32> -> vector<1x384xf32>
    %742 = vector.extract_strided_slice %741 {offsets = [0, 0], sizes = [1, 128], strides = [1, 1]} : vector<1x384xf32> to vector<1x128xf32>
    %c0_334 = arith.constant 0 : index
    %c0_335 = arith.constant 0 : index
    %743 = vector.load %arg14[%c0_334, %c0_335] : memref<1x128xf32, #tpu.memory_space<vmem>>, vector<1x128xf32>
    tpu.vector_store %arg14[%c0_334, %c0_335], %742 {strides = array<i32>} : memref<1x128xf32, #tpu.memory_space<vmem>>, vector<1x128xf32>,
    %744 = vector.extract_strided_slice %741 {offsets = [0, 128], sizes = [1, 8], strides = [1, 1]} : vector<1x384xf32> to vector<1x8xf32>
    %745 = vector.extract_strided_slice %741 {offsets = [0, 256], sizes = [1, 4], strides = [1, 1]} : vector<1x384xf32> to vector<1x4xf32>
    %cst_336 = arith.constant dense<0xFF800000> : vector<1xf32>
    %746 = vector.multi_reduction <maximumf>, %744, %cst_336 [1] : vector<1x8xf32> to vector<1xf32>
    %747 = vector.shape_cast %746 : vector<1xf32> to vector<1x1xf32>
    %748 = vector.broadcast %747 : vector<1x1xf32> to vector<1x8xf32>
    %749 = arith.subf %744, %748 : vector<1x8xf32>
    %750 = math.exp %749 : vector<1x8xf32>
    %cst_337 = arith.constant dense<0.000000e+00> : vector<1xf32>
    %751 = vector.multi_reduction <add>, %750, %cst_337 [1] : vector<1x8xf32> to vector<1xf32>
    %752 = vector.shape_cast %751 : vector<1xf32> to vector<1x1xf32>
    %753 = vector.broadcast %752 : vector<1x1xf32> to vector<1x8xf32>
    %754 = arith.divf %750, %753 : vector<1x8xf32>
    %755 = arith.truncf %754 : vector<1x8xf32> to vector<1x8xbf16>
    %cst_338 = arith.constant dense<0.000000e+00> : vector<1x32xf32>
    %756 = tpu.matmul %755, %5, %cst_338 {dimension_numbers = #tpu.dot_dimension_numbers<[1], [0], [0], [1], [0, 0, 1, 1], [], []>} : vector<1x8xbf16>, vector<8x32xbf16>, vector<1x32xf32> -> vector<1x32xf32>
    %757 = arith.truncf %756 : vector<1x32xf32> to vector<1x32xbf16>
    %cst_339 = arith.constant dense<0.000000e+00> : vector<1x4xf32>
    %758 = tpu.matmul %757, %6, %cst_339 {dimension_numbers = #tpu.dot_dimension_numbers<[1], [0], [0], [1], [0, 0, 1, 1], [], []>} : vector<1x32xbf16>, vector<32x4xbf16>, vector<1x4xf32> -> vector<1x4xf32>
    %759 = arith.addf %745, %758 : vector<1x4xf32>
    %760 = math.tanh %759 : vector<1x4xf32>
    %cst_340 = arith.constant 1.000000e+01 : f32
    %761 = vector.broadcast %cst_340 : f32 to vector<1x4xf32>
    %762 = arith.mulf %761, %760 : vector<1x4xf32>
    %763 = math.exp %762 : vector<1x4xf32>
    %cst_341 = arith.constant dense<0.000000e+00> : vector<1xf32>
    %764 = vector.multi_reduction <add>, %763, %cst_341 [1] : vector<1x4xf32> to vector<1xf32>
    %765 = vector.shape_cast %764 : vector<1xf32> to vector<1x1xf32>
    %766 = math.log %765 : vector<1x1xf32>
    %767 = vector.broadcast %766 : vector<1x1xf32> to vector<1x4xf32>
    %768 = arith.subf %762, %767 : vector<1x4xf32>
    %c7_342 = arith.constant 7 : index
    %c0_343 = arith.constant 0 : index
    %769 = vector.load %arg10[%c7_342, %c0_343] : memref<8x4xf32, #tpu.memory_space<vmem>>, vector<1x4xf32>
    %770 = arith.addf %762, %769 : vector<1x4xf32>
    %cst_344 = arith.constant dense<0xFF800000> : vector<1xf32>
    %771 = vector.multi_reduction <maximumf>, %770, %cst_344 [1] : vector<1x4xf32> to vector<1xf32>
    %772 = vector.shape_cast %771 : vector<1xf32> to vector<1x1xf32>
    %773 = vector.broadcast %772 : vector<1x1xf32> to vector<1x4xf32>
    %774 = arith.cmpf oge, %770, %773 : vector<1x4xf32>
    %c4_i32_345 = arith.constant 4 : i32
    %775 = vector.broadcast %c4_i32_345 : i32 to vector<1x4xi32>
    %776 = arith.select %774, %14, %775 : vector<1x4xi1>, vector<1x4xi32>
    %777 = vector.shape_cast %776 : vector<1x4xi32> to vector<1x1x4xi32>
    %cst_346 = arith.constant dense<2147483647> : vector<1xi32>
    %778 = vector.multi_reduction <minsi>, %777, %cst_346 [1, 2] : vector<1x1x4xi32> to vector<1xi32>
    %779 = vector.shape_cast %778 : vector<1xi32> to vector<1x1x1xi32>
    %780 = vector.extract %779[0, 0, 0] : i32 from vector<1x1x1xi32>
    %781 = vector.broadcast %780 : i32 to vector<1x4xi32>
    %782 = arith.cmpi eq, %14, %781 : vector<1x4xi32>
    %cst_347 = arith.constant 0.000000e+00 : f32
    %783 = vector.broadcast %cst_347 : f32 to vector<1x4xf32>
    %784 = arith.select %782, %768, %783 : vector<1x4xi1>, vector<1x4xf32>
    %785 = vector.shape_cast %784 : vector<1x4xf32> to vector<1x1x4xf32>
    %cst_348 = arith.constant dense<0.000000e+00> : vector<1xf32>
    %786 = vector.multi_reduction <add>, %785, %cst_348 [1, 2] : vector<1x1x4xf32> to vector<1xf32>
    %787 = vector.shape_cast %786 : vector<1xf32> to vector<1x1x1xf32>
    %788 = vector.extract %787[0, 0, 0] : f32 from vector<1x1x1xf32>
    %c7_i32 = arith.constant 7 : i32
    %789 = vector.broadcast %c7_i32 : i32 to vector<1x8xi32>
    %790 = arith.cmpi eq, %13, %789 : vector<1x8xi32>
    %791 = arith.index_cast %780 : i32 to index
    %792 = memref.load %arg1[%791] : memref<4xf32, #tpu.memory_space<smem>>
    %c0_349 = arith.constant 0 : index
    %c0_350 = arith.constant 0 : index
    %793 = vector.load %arg15[%c0_349, %c0_350] : memref<1x8xf32, #tpu.memory_space<vmem>>, vector<1x8xf32>
    %794 = vector.broadcast %792 : f32 to vector<1x8xf32>
    %795 = arith.select %790, %794, %793 : vector<1x8xi1>, vector<1x8xf32>
    %c0_351 = arith.constant 0 : index
    %c0_352 = arith.constant 0 : index
    %796 = vector.load %arg15[%c0_351, %c0_352] : memref<1x8xf32, #tpu.memory_space<vmem>>, vector<1x8xf32>
    tpu.vector_store %arg15[%c0_351, %c0_352], %795 {strides = array<i32>} : memref<1x8xf32, #tpu.memory_space<vmem>>, vector<1x8xf32>,
    %c7_353 = arith.constant 7 : index
    %797 = memref.load %arg11[%c7_353] : memref<8xi32, #tpu.memory_space<smem>>
    memref.store %780, %arg11[%c7_353] : memref<8xi32, #tpu.memory_space<smem>>
    %c7_354 = arith.constant 7 : index
    %798 = memref.load %arg12[%c7_354] : memref<8xf32, #tpu.memory_space<smem>>
    memref.store %788, %arg12[%c7_354] : memref<8xf32, #tpu.memory_space<smem>>
    return
  }
}

</mosaic_0001>

<llo_original>
// kernel: policy_net_forward.1
$region0: #{policy_net_forward.1}
  #allocation0 [shape = 'u32[]', space=smem, size = 0x4, offset = 0x4, fixed_abs, tag = 'smem constant byte address 0x4 - core index']
  #allocation1 [shape = 'u32[144,128]{1,0:T(1,128)}', space=vmem, size = 0x12000, scoped, tag = 'internal scratch']
  #allocation2 [shape = 'f32[1,32]{1,0:T(1,128)}', space=vmem, size = 0x200, scoped, tag = 'scratch operand']
  #allocation3 [shape = 'f32[1,128]{1,0:T(1,128)}', space=vmem, size = 0x200, scoped, tag = 'scratch operand']
  #allocation4 [shape = 'f32[1,8]{1,0:T(1,128)}', space=vmem, size = 0x200, scoped, tag = 'scratch operand']
  %s0 = inlined_call_operand.vmem [shape: s32[8], index: 0, kind: input, shape index: {}]
  %s1 = inlined_call_operand.vmem [shape: f32[4], index: 1, kind: input, shape index: {}]
  %s2 = inlined_call_operand.vmem [shape: f32[8,128], index: 2, kind: input, shape index: {}]
  %s3 = inlined_call_operand.vmem [shape: f32[1,128], index: 3, kind: input, shape index: {}]
  %s4 = inlined_call_operand.vmem [shape: f32[1,32], index: 4, kind: input, shape index: {}]
  %s5 = inlined_call_operand.vmem [shape: f32[1,32], index: 5, kind: input, shape index: {}]
  %s6 = inlined_call_operand.vmem [shape: bf16[32,384], index: 6, kind: input, shape index: {}]
  %s7 = inlined_call_operand.vmem [shape: bf16[32,4], index: 7, kind: input, shape index: {}]
  %s8 = inlined_call_operand.vmem [shape: bf16[8,32], index: 8, kind: input, shape index: {}]
  %s9 = inlined_call_operand.vmem [shape: f32[8,8], index: 9, kind: input, shape index: {}]
  %s10 = inlined_call_operand.vmem [shape: f32[8,4], index: 10, kind: input, shape index: {}]
  %s11 = inlined_call_operand.hbm [shape: s32[8], index: 11, kind: output, shape index: {0}]
  %s12 = inlined_call_operand.hbm [shape: f32[8], index: 12, kind: output, shape index: {1}]
  %13 = xla_tuple %s11, %s12
  %s14 = sld [smem:[#allocation0]]
  $region70: #{policy_net_forward.1} parent=0
    _
  %s16 = ssub.s32 1, %s14
  %s17 = scalar_select 0, %s16, %s14
  $region1: #{policy_net_forward.1} parent=0
    #allocation5 [shape = 'u8[512]{0}', space=smem, size = 0x200, scoped, tag = 'input window, operand 0, single buffered']
    #allocation6 [shape = 's32[1]{0}', space=sflag, size = 0x4, scoped, tag = 'scoped memory for policy_net_forward.1']
    #allocation7 [shape = 's32[1]{0}', space=sflag, size = 0x4, scoped, tag = 'scoped memory for policy_net_forward.1']
    #allocation8 [shape = 'u8[512]{0}', space=smem, size = 0x200, scoped, tag = 'input window, operand 1, single buffered']
    #allocation9 [shape = 's32[1]{0}', space=sflag, size = 0x4, scoped, tag = 'scoped memory for policy_net_forward.1']
    #allocation10 [shape = 'u8[512]{0}', space=smem, size = 0x200, scoped, tag = 'output window, operand 0, single buffered']
    #allocation11 [shape = 'u8[512]{0}', space=smem, size = 0x200, scoped, tag = 'output window, operand 1, single buffered']
    #allocation12 [shape = 's32[1]{0}', space=sflag, size = 0x4, scoped, tag = 'scoped memory for policy_net_forward.1']
    %18 = vsyncpa [#allocation7], 0
    %19 = vsyncpa [#allocation9], 0
    %20 = vsyncpa [#allocation6], 0
    %21 = vsyncpa [#allocation12], 0
    // Predicated region
    $region2: #{policy_net_forward.1} parent=1 // pred_check
      _
    $region3: #{policy_net_forward.1} parent=1 // pred_check_branch
      %23 = sbr.rel (0) target = $region5
    $region4: #{policy_net_forward.1} parent=1 // pred_region
      %s25 = ssub.s32 16, 16
      %26 = vsyncadd [#allocation7], %s25
      %s28 = sshll.u32 %s0, 4
      %s29 = int_to_ptr.vmem [resolvable:$true] %s28
      %31 = dma.vmem_to_smem %s29, 16, [#allocation5], [#allocation7]
    $region5: #{policy_net_forward.1} parent=1 // pred_fallthru
      _
    // Predicated region
    $region6: #{policy_net_forward.1} parent=1 // pred_check
      _
    $region7: #{policy_net_forward.1} parent=1 // pred_check_branch
      %33 = sbr.rel (0) target = $region9
    $region8: #{policy_net_forward.1} parent=1 // pred_region
      %s35 = ssub.s32 16, 16
      %36 = vsyncadd [#allocation9], %s35
      %s38 = sshll.u32 %s1, 4
      %s39 = int_to_ptr.vmem [resolvable:$true] %s38
      %41 = dma.vmem_to_smem %s39, 16, [#allocation8], [#allocation9]
    $region9: #{policy_net_forward.1} parent=1 // pred_fallthru
      _
    // Predicated region
    $region10: #{policy_net_forward.1} parent=1 // pred_check
      _
    $region11: #{policy_net_forward.1} parent=1 // pred_check_branch
      %43 = sbr.rel (0) target = $region13
    $region12: #{policy_net_forward.1} parent=1 // pred_region
      _
    $region13: #{policy_net_forward.1} parent=1 // pred_fallthru
      _
    // Predicated region
    $region14: #{policy_net_forward.1} parent=1 // pred_check
      _
    $region15: #{policy_net_forward.1} parent=1 // pred_check_branch
      %45 = sbr.rel (0) target = $region17
    $region16: #{policy_net_forward.1} parent=1 // pred_region
      _
    $region17: #{policy_net_forward.1} parent=1 // pred_fallthru
      _
    // Predicated region
    $region18: #{policy_net_forward.1} parent=1 // pred_check
      _
    $region19: #{policy_net_forward.1} parent=1 // pred_check_branch
      %47 = sbr.rel (0) target = $region21
    $region20: #{policy_net_forward.1} parent=1 // pred_region
      _
    $region21: #{policy_net_forward.1} parent=1 // pred_fallthru
      _
    // Predicated region
    $region22: #{policy_net_forward.1} parent=1 // pred_check
      _
    $region23: #{policy_net_forward.1} parent=1 // pred_check_branch
      %49 = sbr.rel (0) target = $region25
    $region24: #{policy_net_forward.1} parent=1 // pred_region
      _
    $region25: #{policy_net_forward.1} parent=1 // pred_fallthru
      _
    // Predicated region
    $region26: #{policy_net_forward.1} parent=1 // pred_check
      _
    $region27: #{policy_net_forward.1} parent=1 // pred_check_branch
      %51 = sbr.rel (0) target = $region29
    $region28: #{policy_net_forward.1} parent=1 // pred_region
      _
    $region29: #{policy_net_forward.1} parent=1 // pred_fallthru
      _
    // Predicated region
    $region30: #{policy_net_forward.1} parent=1 // pred_check
      _
    $region31: #{policy_net_forward.1} parent=1 // pred_check_branch
      %53 = sbr.rel (0) target = $region33
    $region32: #{policy_net_forward.1} parent=1 // pred_region
      _
    $region33: #{policy_net_forward.1} parent=1 // pred_fallthru
      _
    // Predicated region
    $region34: #{policy_net_forward.1} parent=1 // pred_check
      _
    $region35: #{policy_net_forward.1} parent=1 // pred_check_branch
      %55 = sbr.rel (0) target = $region37
    $region36: #{policy_net_forward.1} parent=1 // pred_region
      _
    $region37: #{policy_net_forward.1} parent=1 // pred_fallthru
      _
    // Predicated region
    $region38: #{policy_net_forward.1} parent=1 // pred_check
      _
    $region39: #{policy_net_forward.1} parent=1 // pred_check_branch
      %57 = sbr.rel (0) target = $region41
    $region40: #{policy_net_forward.1} parent=1 // pred_region
      _
    $region41: #{policy_net_forward.1} parent=1 // pred_fallthru
      _
    // Predicated region
    $region42: #{policy_net_forward.1} parent=1 // pred_check
      _
    $region43: #{policy_net_forward.1} parent=1 // pred_check_branch
      %59 = sbr.rel (0) target = $region45
    $region44: #{policy_net_forward.1} parent=1 // pred_region
      _
    $region45: #{policy_net_forward.1} parent=1 // pred_fallthru
      _
    // Predicated region
    $region46: #{policy_net_forward.1} parent=1 // pred_check
      _
    $region47: #{policy_net_forward.1} parent=1 // pred_check_branch
      %61 = sbr.rel (0) target = $region49
    $region48: #{policy_net_forward.1} parent=1 // pred_region
      %62 = dma.done [#allocation7], 16
    $region49: #{policy_net_forward.1} parent=1 // pred_fallthru
      _
    // Predicated region
    $region50: #{policy_net_forward.1} parent=1 // pred_check
      _
    $region51: #{policy_net_forward.1} parent=1 // pred_check_branch
      %64 = sbr.rel (0) target = $region53
    $region52: #{policy_net_forward.1} parent=1 // pred_region
      %65 = dma.done [#allocation9], 16
    $region53: #{policy_net_forward.1} parent=1 // pred_fallthru
      _
    %66 = sfence
    %v68 = vld [vmem:[%s5] sm:$0x1]
    %vm69 = vcmask 253952
    %70 = vst.msk [vmem:[#allocation2] sm:$0x1] %vm69, %v68
    %vm71 = vcmask 57344
    %72 = vst.msk [vmem:[#allocation4] sm:$0x1] %vm71, 0.0
    %v73 = vld [vmem:[%s6] sm:$0xff]
    %v74 = vld [vmem:[%s6 + $0x8] sm:$0xf]
    %v75 = vld [vmem:[%s6 + $0xc] sm:$0xff]
    %v76 = vld [vmem:[%s6 + $0x14] sm:$0xf]
    %v77 = vld [vmem:[%s6 + $0x18] sm:$0xff]
    %v78 = vld [vmem:[%s6 + $0x20] sm:$0xf]
    %v79 = vld [vmem:[%s6 + $0x24] sm:$0xff]
    %v80 = vld [vmem:[%s6 + $0x2c] sm:$0xf]
    %v81 = vld [vmem:[%s8] sm:$0xf]
    %v82 = vld [vmem:[%s7] sm:$0xf]
    %v83 = vld [vmem:[%s7 + $0x4] sm:$0xf]
    %v84 = vld [vmem:[%s7 + $0x8] sm:$0xf]
    %v85 = vld [vmem:[%s7 + $0xc] sm:$0xf]
    %v86 = vld [vmem:[%s3] sm:$0x1]
    %v87 = vld [vmem:[%s4] sm:$0x1]
    %v88 = vpack.c.bf16 %v87, %v87
    %v93 = vunpack.c.l.b16 %v73
    %v94 = vunpack.c.h.b16 %v73
    %v95 = vunpack.c.l.b16 %v75
    %v96 = vunpack.c.h.b16 %v75
    %v97 = vunpack.c.l.b16 %v77
    %v98 = vunpack.c.h.b16 %v77
    %v99 = vunpack.c.l.b16 %v79
    %v100 = vunpack.c.h.b16 %v79
    %v101 = vpack.c.b16 %v95, %v93
    %v102 = vpack.c.b16 %v96, %v94
    %v103 = vpack.c.b16 %v99, %v97
    %v104 = vpack.c.b16 %v100, %v98
    %vm109 = vcmask 261120
    %v111 = vsel %vm109, %v88, 0
    %113 = vmatprep.subr.bf16.mxu0 %v102
    %114 = vmatpush1.bf16.msra.mxu0 %v101
    %115 = vmatprep.subr.bf16.mxu0 %v104
    %116 = vmatpush1.bf16.msra.mxu0 %v103
    %117 = vmatprep.subr.bf16.mxu0 0
    %118 = vmatpush1.bf16.msra.mxu0 0
    %119 = vmatprep.subr.bf16.mxu0 0
    %120 = vmatpush1.bf16.msra.mxu0 0
    %121 = vmatprep.subr.bf16.mxu0 0
    %122 = vmatpush1.bf16.msra.mxu0 0
    %123 = vmatprep.subr.bf16.mxu0 0
    %124 = vmatpush1.bf16.msra.mxu0 0
    %125 = vmatprep.subr.bf16.mxu0 0
    %126 = vmatpush1.bf16.msra.mxu0 0
    %127 = vmatprep.subr.bf16.mxu0 0
    %128 = vmatpush1.bf16.msra.mxu0 0
    %129 = vmatprep.subr.bf16.mxu0 0
    %130 = vmatpush1.bf16.msra.mxu0 0
    %131 = vmatprep.subr.bf16.mxu0 0
    %132 = vmatpush1.bf16.msra.mxu0 0
    %133 = vmatprep.subr.bf16.mxu0 0
    %134 = vmatpush1.bf16.msra.mxu0 0
    %135 = vmatprep.subr.bf16.mxu0 0
    %136 = vmatpush1.bf16.msra.mxu0 0
    %137 = vmatprep.subr.bf16.mxu0 0
    %138 = vmatpush1.bf16.msra.mxu0 0
    %139 = vmatprep.subr.bf16.mxu0 0
    %140 = vmatpush1.bf16.msra.mxu0 0
    %141 = vmatprep.subr.bf16.mxu0 0
    %142 = vmatpush1.bf16.msra.mxu0 0
    %143 = vmatprep.subr.bf16.mxu0 0
    %144 = vmatpush1.bf16.msra.mxu0 0
    %145 = vmatprep.mubr.bf16.mxu0 0
    %146 = vmatmul.mubr.bf16.gmra.mrb[0].mxu0 %v111
    %v147 = vpop.f32.mrb[0].mxu0
    %v148 = vadd.f32 0.0, %v147
    %v149 = vpop.f32.mrb[0].mxu0
    %v150 = vpop.f32.mrb[0].mxu0
    %v151 = vpop.f32.mrb[0].mxu0
    %152 = vdwg.mxu0
    %153 = vst [vmem:[#allocation3] sm:$0x1] %v148
    %v154 = vlaneseq
    %v155 = vand.u32 %v154, 127
    %v156 = vld [vmem:[%s9] sm:$0x1]
    %vm157 = vcmp.gt.f32.partialorder %v156, 0.0
    %v158 = vld [vmem:[#allocation4] sm:$0x1]
    %v159 = vsel %vm157, %v158, -inf
    %s160 = sld [smem:[#allocation5]]
    %p161 = scmp.gt.s32.totalorder %s160, 0
    %v162 = vsel %vm71, %v159, -inf
    %163 = vmax.xlane.f32.xlu0 %v162
    %v164 = vpop.xlane.xlu0 %163
    %v165 = vrot.slane %v164, 4
    %v166 = vmax.f32 %v164, %v165
    %v167 = vrot.slane %v166, 2
    %v168 = vmax.f32 %v166, %v167
    %v169 = vrot.slane %v168, 1
    %v170 = vmax.f32 %v168, %v169
    %s171 = vtos %v170
    %s172 = scalar_select %p161, %s171, 0.0
    %v173 = vld [vmem:[%s2] sm:$0x1]
    %v174 = vstv %s172
    %v175 = vmul.f32 %v174, %v86
    %v176 = vadd.f32 %v173, %v175
    %v177 = vld [vmem:[#allocation3] sm:$0x1]
    %v178 = vadd.f32 %v176, %v177
    %v179 = vxor.u32 %v178, 2147483648
    %v180 = vmul.f32 %v179, 1.442695
    %v181 = vpow.pop %v180
    %v182 = vadd.f32 %v181, 1.0
    %v183 = vrcp.pop %v182
    %v184 = vmul.f32 1.0, %v183
    %v185 = vmul.f32 %v184, 2.0
    %v186 = vsub.f32 %v185, 1.0
    %v187 = vld [vmem:[#allocation2] sm:$0x1]
    %v189 = vlaneseq
    %v190 = vshrl.u32 %v189, 7
    %v191 = vsub.s32 0, %v190
    %v192 = vrot.slane %v187, %v191
    %193 = vrot.lane.b32.xlu0 %v192, 32
    %v194 = vpop.permute.xlu0 %193
    %v196 = vmul.f32 %v184, %v194
    %198 = vrot.lane.b32.xlu0 %v186, 64
    %v199 = vpop.permute.xlu0 %198
    %v201 = vmul.f32 %v184, %v199
    %203 = vrot.lane.b32.xlu0 %v201, 32
    %v204 = vpop.permute.xlu0 %203
    %v206 = vadd.f32 %v196, %v204
    %v207 = vtanh.pop %v206
    %209 = vrot.lane.b32.xlu0 %v207, 64
    %v210 = vpop.permute.xlu0 %209
    %v212 = vmul.f32 %v184, %v210
    %214 = vrot.lane.b32.xlu0 %v206, 96
    %v215 = vpop.permute.xlu0 %214
    %217 = vst.msk [vmem:[#allocation2] sm:$0x1] %vm69, %v215
    %v218 = vpack.c.bf16 %v212, %v212
    %220 = vrot.lane.b32.xlu0 %v218, 32
    %v221 = vpop.permute.xlu0 %220
    %v226 = vunpack.c.l.b16 %v74
    %v227 = vunpack.c.l.b16 %v76
    %v228 = vunpack.c.l.b16 %v78
    %v229 = vunpack.c.l.b16 %v80
    %v230 = vpack.c.b16 %v227, %v226
    %v231 = vpack.c.b16 %v229, %v228
    %v235 = vsel %vm109, %v221, 0
    %237 = vmatprep.subr.bf16.mxu0 %v102
    %238 = vmatpush1.bf16.msra.mxu0 %v101
    %239 = vmatprep.subr.bf16.mxu0 %v104
    %240 = vmatpush1.bf16.msra.mxu0 %v103
    %241 = vmatprep.subr.bf16.mxu0 0
    %242 = vmatpush1.bf16.msra.mxu0 0
    %243 = vmatprep.subr.bf16.mxu0 0
    %244 = vmatpush1.bf16.msra.mxu0 0
    %245 = vmatprep.subr.bf16.mxu0 0
    %246 = vmatpush1.bf16.msra.mxu0 0
    %247 = vmatprep.subr.bf16.mxu0 0
    %248 = vmatpush1.bf16.msra.mxu0 0
    %249 = vmatprep.subr.bf16.mxu0 0
    %250 = vmatpush1.bf16.msra.mxu0 0
    %251 = vmatprep.subr.bf16.mxu0 0
    %252 = vmatpush1.bf16.msra.mxu0 0
    %253 = vmatprep.subr.bf16.mxu0 0
    %254 = vmatpush1.bf16.msra.mxu0 0
    %255 = vmatprep.subr.bf16.mxu0 0
    %256 = vmatpush1.bf16.msra.mxu0 0
    %257 = vmatprep.subr.bf16.mxu0 0
    %258 = vmatpush1.bf16.msra.mxu0 0
    %259 = vmatprep.subr.bf16.mxu0 0
    %260 = vmatpush1.bf16.msra.mxu0 0
    %261 = vmatprep.subr.bf16.mxu0 0
    %262 = vmatpush1.bf16.msra.mxu0 0
    %263 = vmatprep.subr.bf16.mxu0 0
    %264 = vmatpush1.bf16.msra.mxu0 0
    %265 = vmatprep.subr.bf16.mxu0 0
    %266 = vmatpush1.bf16.msra.mxu0 0
    %267 = vmatprep.subr.bf16.mxu0 0
    %268 = vmatpush1.bf16.msra.mxu0 0
    %269 = vmatprep.mubr.bf16.mxu0 0
    %270 = vmatmul.mubr.bf16.gmra.mrb[0].mxu0 %v235
    %v271 = vpop.f32.mrb[0].mxu0
    %v272 = vadd.f32 0.0, %v271
    %v273 = vpop.f32.mrb[0].mxu0
    %v274 = vadd.f32 0.0, %v273
    %v275 = vpop.f32.mrb[0].mxu0
    %v276 = vpop.f32.mrb[0].mxu0
    %277 = vdwg.mxu0
    %278 = vmatprep.subr.bf16.mxu0 0
    %279 = vmatpush1.bf16.msra.mxu0 %v230
    %280 = vmatprep.subr.bf16.mxu0 0
    %281 = vmatpush1.bf16.msra.mxu0 %v231
    %282 = vmatprep.subr.bf16.mxu0 0
    %283 = vmatpush1.bf16.msra.mxu0 0
    %284 = vmatprep.subr.bf16.mxu0 0
    %285 = vmatpush1.bf16.msra.mxu0 0
    %286 = vmatprep.subr.bf16.mxu0 0
    %287 = vmatpush1.bf16.msra.mxu0 0
    %288 = vmatprep.subr.bf16.mxu0 0
    %289 = vmatpush1.bf16.msra.mxu0 0
    %290 = vmatprep.subr.bf16.mxu0 0
    %291 = vmatpush1.bf16.msra.mxu0 0
    %292 = vmatprep.subr.bf16.mxu0 0
    %293 = vmatpush1.bf16.msra.mxu0 0
    %294 = vmatprep.subr.bf16.mxu0 0
    %295 = vmatpush1.bf16.msra.mxu0 0
    %296 = vmatprep.subr.bf16.mxu0 0
    %297 = vmatpush1.bf16.msra.mxu0 0
    %298 = vmatprep.subr.bf16.mxu0 0
    %299 = vmatpush1.bf16.msra.mxu0 0
    %300 = vmatprep.subr.bf16.mxu0 0
    %301 = vmatpush1.bf16.msra.mxu0 0
    %302 = vmatprep.subr.bf16.mxu0 0
    %303 = vmatpush1.bf16.msra.mxu0 0
    %304 = vmatprep.subr.bf16.mxu0 0
    %305 = vmatpush1.bf16.msra.mxu0 0
    %306 = vmatprep.subr.bf16.mxu0 0
    %307 = vmatpush1.bf16.msra.mxu0 0
    %308 = vmatprep.subr.bf16.mxu0 0
    %309 = vmatpush1.bf16.msra.mxu0 0
    %310 = vmatprep.mubr.bf16.mxu0 0
    %311 = vmatmul.mubr.bf16.gmra.mrb[0].mxu0 %v235
    %v312 = vpop.f32.mrb[0].mxu0
    %v313 = vadd.f32 0.0, %v312
    %v314 = vpop.f32.mrb[0].mxu0
    %v315 = vpop.f32.mrb[0].mxu0
    %v316 = vpop.f32.mrb[0].mxu0
    %317 = vdwg.mxu0
    %318 = vst [vmem:[#allocation3] sm:$0x1] %v272
    %v319 = vsel %vm71, %v274, -inf
    %320 = vmax.xlane.f32.xlu0 %v319
    %v321 = vpop.xlane.xlu0 %320
    %v322 = vsub.f32 %v274, %v321
    %v323 = vmul.f32 %v322, 1.442695
    %v324 = vpow.pop %v323
    %v325 = vsel %vm71, %v324, 0.0
    %326 = vadd.xlane.f32.xlu0 %v325
    %v327 = vpop.xlane.xlu0 %326
    %v328 = vrcp.pop %v327
    %v329 = vmul.f32 %v324, %v328
    %v330 = vpack.c.bf16 %v329, %v329
    %vm331 = vcmask 64512
    %v333 = vsel %vm331, %v330, 0
    %vm335 = vcmask 1043456
    %v337 = vsel %vm335, %v81, 0
    %339 = vmatprep.subr.bf16.mxu0 0
    %340 = vmatpush1.bf16.msra.mxu0 %v337
    %341 = vmatprep.subr.bf16.mxu0 0
    %342 = vmatpush1.bf16.msra.mxu0 0
    %343 = vmatprep.subr.bf16.mxu0 0
    %344 = vmatpush1.bf16.msra.mxu0 0
    %345 = vmatprep.subr.bf16.mxu0 0
    %346 = vmatpush1.bf16.msra.mxu0 0
    %347 = vmatprep.subr.bf16.mxu0 0
    %348 = vmatpush1.bf16.msra.mxu0 0
    %349 = vmatprep.subr.bf16.mxu0 0
    %350 = vmatpush1.bf16.msra.mxu0 0
    %351 = vmatprep.subr.bf16.mxu0 0
    %352 = vmatpush1.bf16.msra.mxu0 0
    %353 = vmatprep.subr.bf16.mxu0 0
    %354 = vmatpush1.bf16.msra.mxu0 0
    %355 = vmatprep.subr.bf16.mxu0 0
    %356 = vmatpush1.bf16.msra.mxu0 0
    %357 = vmatprep.subr.bf16.mxu0 0
    %358 = vmatpush1.bf16.msra.mxu0 0
    %359 = vmatprep.subr.bf16.mxu0 0
    %360 = vmatpush1.bf16.msra.mxu0 0
    %361 = vmatprep.subr.bf16.mxu0 0
    %362 = vmatpush1.bf16.msra.mxu0 0
    %363 = vmatprep.subr.bf16.mxu0 0
    %364 = vmatpush1.bf16.msra.mxu0 0
    %365 = vmatprep.subr.bf16.mxu0 0
    %366 = vmatpush1.bf16.msra.mxu0 0
    %367 = vmatprep.subr.bf16.mxu0 0
    %368 = vmatpush1.bf16.msra.mxu0 0
    %369 = vmatprep.subr.bf16.mxu0 0
    %370 = vmatpush1.bf16.msra.mxu0 0
    %371 = vmatprep.mubr.bf16.mxu0 0
    %372 = vmatmul.mubr.bf16.gmra.mrb[0].mxu0 %v333
    %v373 = vpop.f32.mrb[0].mxu0
    %v374 = vadd.f32 0.0, %v373
    %v375 = vpop.f32.mrb[0].mxu0
    %v376 = vpop.f32.mrb[0].mxu0
    %v377 = vpop.f32.mrb[0].mxu0
    %378 = vdwg.mxu0
    %v379 = vpack.c.bf16 %v374, %v374
    %v384 = vunpack.c.l.b16 %v82
    %v385 = vunpack.c.l.b16 %v83
    %v386 = vunpack.c.l.b16 %v84
    %v387 = vunpack.c.l.b16 %v85
    %v388 = vpack.c.b16 %v385, %v384
    %v389 = vpack.c.b16 %v387, %v386
    %v393 = vsel %vm109, %v379, 0
    %395 = vmatprep.subr.bf16.mxu0 0
    %396 = vmatpush1.bf16.msra.mxu0 %v388
    %397 = vmatprep.subr.bf16.mxu0 0
    %398 = vmatpush1.bf16.msra.mxu0 %v389
    %399 = vmatprep.subr.bf16.mxu0 0
    %400 = vmatpush1.bf16.msra.mxu0 0
    %401 = vmatprep.subr.bf16.mxu0 0
    %402 = vmatpush1.bf16.msra.mxu0 0
    %403 = vmatprep.subr.bf16.mxu0 0
    %404 = vmatpush1.bf16.msra.mxu0 0
    %405 = vmatprep.subr.bf16.mxu0 0
    %406 = vmatpush1.bf16.msra.mxu0 0
    %407 = vmatprep.subr.bf16.mxu0 0
    %408 = vmatpush1.bf16.msra.mxu0 0
    %409 = vmatprep.subr.bf16.mxu0 0
    %410 = vmatpush1.bf16.msra.mxu0 0
    %411 = vmatprep.subr.bf16.mxu0 0
    %412 = vmatpush1.bf16.msra.mxu0 0
    %413 = vmatprep.subr.bf16.mxu0 0
    %414 = vmatpush1.bf16.msra.mxu0 0
    %415 = vmatprep.subr.bf16.mxu0 0
    %416 = vmatpush1.bf16.msra.mxu0 0
    %417 = vmatprep.subr.bf16.mxu0 0
    %418 = vmatpush1.bf16.msra.mxu0 0
    %419 = vmatprep.subr.bf16.mxu0 0
    %420 = vmatpush1.bf16.msra.mxu0 0
    %421 = vmatprep.subr.bf16.mxu0 0
    %422 = vmatpush1.bf16.msra.mxu0 0
    %423 = vmatprep.subr.bf16.mxu0 0
    %424 = vmatpush1.bf16.msra.mxu0 0
    %425 = vmatprep.subr.bf16.mxu0 0
    %426 = vmatpush1.bf16.msra.mxu0 0
    %427 = vmatprep.mubr.bf16.mxu0 0
    %428 = vmatmul.mubr.bf16.gmra.mrb[0].mxu0 %v393
    %v429 = vpop.f32.mrb[0].mxu0
    %v430 = vadd.f32 0.0, %v429
    %v431 = vpop.f32.mrb[0].mxu0
    %v432 = vpop.f32.mrb[0].mxu0
    %v433 = vpop.f32.mrb[0].mxu0
    %434 = vdwg.mxu0
    %v435 = vadd.f32 %v313, %v430
    %v436 = vtanh.pop %v435
    %v437 = vmul.f32 %v436, 10.0
    %v438 = vmul.f32 %v437, 1.442695
    %v439 = vpow.pop %v438
    %vm440 = vcmask 24576
    %v441 = vsel %vm440, %v439, 0.0
    %442 = vadd.xlane.f32.xlu0 %v441
    %v443 = vpop.xlane.xlu0 %442
    %v444 = vlog2.pop %v443
    %v445 = vmul.f32 %v444, 0.6931472
    %v446 = vsub.f32 %v437, %v445
    %v447 = vld [vmem:[%s10] sm:$0x1]
    %v448 = vadd.f32 %v437, %v447
    %v449 = vsel %vm440, %v448, -inf
    %450 = vmax.xlane.f32.xlu0 %v449
    %v451 = vpop.xlane.xlu0 %450
    %vm452 = vcmp.ge.f32.partialorder %v448, %v451
    %v453 = vsel %vm452, %v155, 4
    %v454 = vsel %vm440, %v453, 2147483647
    %v455 = vand.u32 %v454, 65535
    %v456 = vshra.s32 %v454, 16
    %v457 = vcvt.s32.f32 %v455
    %v458 = vcvt.s32.f32 %v456
    %459 = vmin.xlane.f32.xlu0 %v458
    %v460 = vpop.xlane.xlu0 %459
    %vm461 = vcmp.eq.f32.partialorder %v458, %v460
    %v462 = vsel %vm461, %v457, inf
    %463 = vmin.xlane.f32.xlu0 %v462
    %v464 = vpop.xlane.xlu0 %463
    %v465 = vcvt.f32.s32 %v464
    %v466 = vcvt.f32.s32 %v460
    %v467 = vshll.u32 %v466, 16
    %v468 = vadd.s32 %v467, %v465
    %v469 = vrot.slane %v468, 4
    %vm470 = vcmp.lt.s32.totalorder %v468, %v469
    %v471 = vsel %vm470, %v468, %v469
    %v472 = vrot.slane %v471, 2
    %vm473 = vcmp.lt.s32.totalorder %v471, %v472
    %v474 = vsel %vm473, %v471, %v472
    %v475 = vrot.slane %v474, 1
    %vm476 = vcmp.lt.s32.totalorder %v474, %v475
    %v477 = vsel %vm476, %v474, %v475
    %s478 = vtos %v477
    %v479 = vstv %s478
    %vm480 = vcmp.eq.s32.totalorder %v155, %v479
    %v481 = vsel %vm480, %v446, 0.0
    %v482 = vsel %vm440, %v481, 0.0
    %483 = vadd.xlane.f32.xlu0 %v482
    %v484 = vpop.xlane.xlu0 %483
    %v485 = vrot.slane %v484, 4
    %v486 = vadd.f32 %v484, %v485
    %v487 = vrot.slane %v486, 2
    %v488 = vadd.f32 %v486, %v487
    %v489 = vrot.slane %v488, 1
    %v490 = vadd.f32 %v488, %v489
    %s491 = vtos %v490
    %vm492 = vcmp.eq.s32.totalorder %v155, 0
    %s493 = sld [smem:[#allocation8 + %s478]]
    %v494 = vld [vmem:[#allocation4] sm:$0x1]
    %v495 = vstv %s493
    %v496 = vsel %vm492, %v495, %v494
    %497 = vst.msk [vmem:[#allocation4] sm:$0x1] %vm71, %v496
    %s498 = scalar_lea.smem [#allocation10], 0
    %499 = sst [smem:[%s498]] %s478
    %s500 = scalar_lea.smem [#allocation11], 0
    %501 = sst [smem:[%s500]] %s491
    %v502 = vld [vmem:[%s9 + $0x1] sm:$0x1]
    %vm503 = vcmp.gt.f32.partialorder %v502, 0.0
    %v504 = vld [vmem:[#allocation4] sm:$0x1]
    %v505 = vsel %vm503, %v504, -inf
    %s506 = sld [smem:[#allocation5 + $0x1]]
    %p507 = scmp.gt.s32.totalorder %s506, 0
    %v508 = vsel %vm71, %v505, -inf
    %509 = vmax.xlane.f32.xlu0 %v508
    %v510 = vpop.xlane.xlu0 %509
    %v511 = vrot.slane %v510, 4
    %v512 = vmax.f32 %v510, %v511
    %v513 = vrot.slane %v512, 2
    %v514 = vmax.f32 %v512, %v513
    %v515 = vrot.slane %v514, 1
    %v516 = vmax.f32 %v514, %v515
    %s517 = vtos %v516
    %s518 = scalar_select %p507, %s517, 0.0
    %v519 = vld [vmem:[%s2 + $0x1] sm:$0x1]
    %v520 = vstv %s518
    %v521 = vmul.f32 %v520, %v86
    %v522 = vadd.f32 %v519, %v521
    %v523 = vld [vmem:[#allocation3] sm:$0x1]
    %v524 = vadd.f32 %v522, %v523
    %v525 = vxor.u32 %v524, 2147483648
    %v526 = vmul.f32 %v525, 1.442695
    %v527 = vpow.pop %v526
    %v528 = vadd.f32 %v527, 1.0
    %v529 = vrcp.pop %v528
    %v530 = vmul.f32 1.0, %v529
    %v531 = vmul.f32 %v530, 2.0
    %v532 = vsub.f32 %v531, 1.0
    %v533 = vld [vmem:[#allocation2] sm:$0x1]
    %v535 = vlaneseq
    %v536 = vshrl.u32 %v535, 7
    %v537 = vsub.s32 0, %v536
    %v538 = vrot.slane %v533, %v537
    %539 = vrot.lane.b32.xlu0 %v538, 32
    %v540 = vpop.permute.xlu0 %539
    %v542 = vmul.f32 %v530, %v540
    %544 = vrot.lane.b32.xlu0 %v532, 64
    %v545 = vpop.permute.xlu0 %544
    %v547 = vmul.f32 %v530, %v545
    %549 = vrot.lane.b32.xlu0 %v547, 32
    %v550 = vpop.permute.xlu0 %549
    %v552 = vadd.f32 %v542, %v550
    %v553 = vtanh.pop %v552
    %555 = vrot.lane.b32.xlu0 %v553, 64
    %v556 = vpop.permute.xlu0 %555
    %v558 = vmul.f32 %v530, %v556
    %560 = vrot.lane.b32.xlu0 %v552, 96
    %v561 = vpop.permute.xlu0 %560
    %563 = vst.msk [vmem:[#allocation2] sm:$0x1] %vm69, %v561
    %v564 = vpack.c.bf16 %v558, %v558
    %566 = vrot.lane.b32.xlu0 %v564, 32
    %v567 = vpop.permute.xlu0 %566
    %v569 = vsel %vm109, %v567, 0
    %571 = vmatprep.subr.bf16.mxu0 %v102
    %572 = vmatpush1.bf16.msra.mxu0 %v101
    %573 = vmatprep.subr.bf16.mxu0 %v104
    %574 = vmatpush1.bf16.msra.mxu0 %v103
    %575 = vmatprep.subr.bf16.mxu0 0
    %576 = vmatpush1.bf16.msra.mxu0 0
    %577 = vmatprep.subr.bf16.mxu0 0
    %578 = vmatpush1.bf16.msra.mxu0 0
    %579 = vmatprep.subr.bf16.mxu0 0
    %580 = vmatpush1.bf16.msra.mxu0 0
    %581 = vmatprep.subr.bf16.mxu0 0
    %582 = vmatpush1.bf16.msra.mxu0 0
    %583 = vmatprep.subr.bf16.mxu0 0
    %584 = vmatpush1.bf16.msra.mxu0 0
    %585 = vmatprep.subr.bf16.mxu0 0
    %586 = vmatpush1.bf16.msra.mxu0 0
    %587 = vmatprep.subr.bf16.mxu0 0
    %588 = vmatpush1.bf16.msra.mxu0 0
    %589 = vmatprep.subr.bf16.mxu0 0
    %590 = vmatpush1.bf16.msra.mxu0 0
    %591 = vmatprep.subr.bf16.mxu0 0
    %592 = vmatpush1.bf16.msra.mxu0 0
    %593 = vmatprep.subr.bf16.mxu0 0
    %594 = vmatpush1.bf16.msra.mxu0 0
    %595 = vmatprep.subr.bf16.mxu0 0
    %596 = vmatpush1.bf16.msra.mxu0 0
    %597 = vmatprep.subr.bf16.mxu0 0
    %598 = vmatpush1.bf16.msra.mxu0 0
    %599 = vmatprep.subr.bf16.mxu0 0
    %600 = vmatpush1.bf16.msra.mxu0 0
    %601 = vmatprep.subr.bf16.mxu0 0
    %602 = vmatpush1.bf16.msra.mxu0 0
    %603 = vmatprep.mubr.bf16.mxu0 0
    %604 = vmatmul.mubr.bf16.gmra.mrb[0].mxu0 %v569
    %v605 = vpop.f32.mrb[0].mxu0
    %v606 = vadd.f32 0.0, %v605
    %v607 = vpop.f32.mrb[0].mxu0
    %v608 = vadd.f32 0.0, %v607
    %v609 = vpop.f32.mrb[0].mxu0
    %v610 = vpop.f32.mrb[0].mxu0
    %611 = vdwg.mxu0
    %612 = vmatprep.subr.bf16.mxu0 0
    %613 = vmatpush1.bf16.msra.mxu0 %v230
    %614 = vmatprep.subr.bf16.mxu0 0
    %615 = vmatpush1.bf16.msra.mxu0 %v231
    %616 = vmatprep.subr.bf16.mxu0 0
    %617 = vmatpush1.bf16.msra.mxu0 0
    %618 = vmatprep.subr.bf16.mxu0 0
    %619 = vmatpush1.bf16.msra.mxu0 0
    %620 = vmatprep.subr.bf16.mxu0 0
    %621 = vmatpush1.bf16.msra.mxu0 0
    %622 = vmatprep.subr.bf16.mxu0 0
    %623 = vmatpush1.bf16.msra.mxu0 0
    %624 = vmatprep.subr.bf16.mxu0 0
    %625 = vmatpush1.bf16.msra.mxu0 0
    %626 = vmatprep.subr.bf16.mxu0 0
    %627 = vmatpush1.bf16.msra.mxu0 0
    %628 = vmatprep.subr.bf16.mxu0 0
    %629 = vmatpush1.bf16.msra.mxu0 0
    %630 = vmatprep.subr.bf16.mxu0 0
    %631 = vmatpush1.bf16.msra.mxu0 0
    %632 = vmatprep.subr.bf16.mxu0 0
    %633 = vmatpush1.bf16.msra.mxu0 0
    %634 = vmatprep.subr.bf16.mxu0 0
    %635 = vmatpush1.bf16.msra.mxu0 0
    %636 = vmatprep.subr.bf16.mxu0 0
    %637 = vmatpush1.bf16.msra.mxu0 0
    %638 = vmatprep.subr.bf16.mxu0 0
    %639 = vmatpush1.bf16.msra.mxu0 0
    %640 = vmatprep.subr.bf16.mxu0 0
    %641 = vmatpush1.bf16.msra.mxu0 0
    %642 = vmatprep.subr.bf16.mxu0 0
    %643 = vmatpush1.bf16.msra.mxu0 0
    %644 = vmatprep.mubr.bf16.mxu0 0
    %645 = vmatmul.mubr.bf16.gmra.mrb[0].mxu0 %v569
    %v646 = vpop.f32.mrb[0].mxu0
    %v647 = vadd.f32 0.0, %v646
    %v648 = vpop.f32.mrb[0].mxu0
    %v649 = vpop.f32.mrb[0].mxu0
    %v650 = vpop.f32.mrb[0].mxu0
    %651 = vdwg.mxu0
    %652 = vst [vmem:[#allocation3] sm:$0x1] %v606
    %v653 = vsel %vm71, %v608, -inf
    %654 = vmax.xlane.f32.xlu0 %v653
    %v655 = vpop.xlane.xlu0 %654
    %v656 = vsub.f32 %v608, %v655
    %v657 = vmul.f32 %v656, 1.442695
    %v658 = vpow.pop %v657
    %v659 = vsel %vm71, %v658, 0.0
    %660 = vadd.xlane.f32.xlu0 %v659
    %v661 = vpop.xlane.xlu0 %660
    %v662 = vrcp.pop %v661
    %v663 = vmul.f32 %v658, %v662
    %v664 = vpack.c.bf16 %v663, %v663
    %v666 = vsel %vm331, %v664, 0
    %668 = vmatprep.subr.bf16.mxu0 0
    %669 = vmatpush1.bf16.msra.mxu0 %v337
    %670 = vmatprep.subr.bf16.mxu0 0
    %671 = vmatpush1.bf16.msra.mxu0 0
    %672 = vmatprep.subr.bf16.mxu0 0
    %673 = vmatpush1.bf16.msra.mxu0 0
    %674 = vmatprep.subr.bf16.mxu0 0
    %675 = vmatpush1.bf16.msra.mxu0 0
    %676 = vmatprep.subr.bf16.mxu0 0
    %677 = vmatpush1.bf16.msra.mxu0 0
    %678 = vmatprep.subr.bf16.mxu0 0
    %679 = vmatpush1.bf16.msra.mxu0 0
    %680 = vmatprep.subr.bf16.mxu0 0
    %681 = vmatpush1.bf16.msra.mxu0 0
    %682 = vmatprep.subr.bf16.mxu0 0
    %683 = vmatpush1.bf16.msra.mxu0 0
    %684 = vmatprep.subr.bf16.mxu0 0
    %685 = vmatpush1.bf16.msra.mxu0 0
    %686 = vmatprep.subr.bf16.mxu0 0
    %687 = vmatpush1.bf16.msra.mxu0 0
    %688 = vmatprep.subr.bf16.mxu0 0
    %689 = vmatpush1.bf16.msra.mxu0 0
    %690 = vmatprep.subr.bf16.mxu0 0
    %691 = vmatpush1.bf16.msra.mxu0 0
    %692 = vmatprep.subr.bf16.mxu0 0
    %693 = vmatpush1.bf16.msra.mxu0 0
    %694 = vmatprep.subr.bf16.mxu0 0
    %695 = vmatpush1.bf16.msra.mxu0 0
    %696 = vmatprep.subr.bf16.mxu0 0
    %697 = vmatpush1.bf16.msra.mxu0 0
    %698 = vmatprep.subr.bf16.mxu0 0
    %699 = vmatpush1.bf16.msra.mxu0 0
    %700 = vmatprep.mubr.bf16.mxu0 0
    %701 = vmatmul.mubr.bf16.gmra.mrb[0].mxu0 %v666
    %v702 = vpop.f32.mrb[0].mxu0
    %v703 = vadd.f32 0.0, %v702
    %v704 = vpop.f32.mrb[0].mxu0
    %v705 = vpop.f32.mrb[0].mxu0
    %v706 = vpop.f32.mrb[0].mxu0
    %707 = vdwg.mxu0
    %v708 = vpack.c.bf16 %v703, %v703
    %v710 = vsel %vm109, %v708, 0
    %712 = vmatprep.subr.bf16.mxu0 0
    %713 = vmatpush1.bf16.msra.mxu0 %v388
    %714 = vmatprep.subr.bf16.mxu0 0
    %715 = vmatpush1.bf16.msra.mxu0 %v389
    %716 = vmatprep.subr.bf16.mxu0 0
    %717 = vmatpush1.bf16.msra.mxu0 0
    %718 = vmatprep.subr.bf16.mxu0 0
    %719 = vmatpush1.bf16.msra.mxu0 0
    %720 = vmatprep.subr.bf16.mxu0 0
    %721 = vmatpush1.bf16.msra.mxu0 0
    %722 = vmatprep.subr.bf16.mxu0 0
    %723 = vmatpush1.bf16.msra.mxu0 0
    %724 = vmatprep.subr.bf16.mxu0 0
    %725 = vmatpush1.bf16.msra.mxu0 0
    %726 = vmatprep.subr.bf16.mxu0 0
    %727 = vmatpush1.bf16.msra.mxu0 0
    %728 = vmatprep.subr.bf16.mxu0 0
    %729 = vmatpush1.bf16.msra.mxu0 0
    %730 = vmatprep.subr.bf16.mxu0 0
    %731 = vmatpush1.bf16.msra.mxu0 0
    %732 = vmatprep.subr.bf16.mxu0 0
    %733 = vmatpush1.bf16.msra.mxu0 0
    %734 = vmatprep.subr.bf16.mxu0 0
    %735 = vmatpush1.bf16.msra.mxu0 0
    %736 = vmatprep.subr.bf16.mxu0 0
    %737 = vmatpush1.bf16.msra.mxu0 0
    %738 = vmatprep.subr.bf16.mxu0 0
    %739 = vmatpush1.bf16.msra.mxu0 0
    %740 = vmatprep.subr.bf16.mxu0 0
    %741 = vmatpush1.bf16.msra.mxu0 0
    %742 = vmatprep.subr.bf16.mxu0 0
    %743 = vmatpush1.bf16.msra.mxu0 0
    %744 = vmatprep.mubr.bf16.mxu0 0
    %745 = vmatmul.mubr.bf16.gmra.mrb[0].mxu0 %v710
    %v746 = vpop.f32.mrb[0].mxu0
    %v747 = vadd.f32 0.0, %v746
    %v748 = vpop.f32.mrb[0].mxu0
    %v749 = vpop.f32.mrb[0].mxu0
    %v750 = vpop.f32.mrb[0].mxu0
    %751 = vdwg.mxu0
    %v752 = vadd.f32 %v647, %v747
    %v753 = vtanh.pop %v752
    %v754 = vmul.f32 %v753, 10.0
    %v755 = vmul.f32 %v754, 1.442695
    %v756 = vpow.pop %v755
    %v757 = vsel %vm440, %v756, 0.0
    %758 = vadd.xlane.f32.xlu0 %v757
    %v759 = vpop.xlane.xlu0 %758
    %v760 = vlog2.pop %v759
    %v761 = vmul.f32 %v760, 0.6931472
    %v762 = vsub.f32 %v754, %v761
    %v763 = vld [vmem:[%s10 + $0x1] sm:$0x1]
    %v764 = vadd.f32 %v754, %v763
    %v765 = vsel %vm440, %v764, -inf
    %766 = vmax.xlane.f32.xlu0 %v765
    %v767 = vpop.xlane.xlu0 %766
    %vm768 = vcmp.ge.f32.partialorder %v764, %v767
    %v769 = vsel %vm768, %v155, 4
    %v770 = vsel %vm440, %v769, 2147483647
    %v771 = vand.u32 %v770, 65535
    %v772 = vshra.s32 %v770, 16
    %v773 = vcvt.s32.f32 %v771
    %v774 = vcvt.s32.f32 %v772
    %775 = vmin.xlane.f32.xlu0 %v774
    %v776 = vpop.xlane.xlu0 %775
    %vm777 = vcmp.eq.f32.partialorder %v774, %v776
    %v778 = vsel %vm777, %v773, inf
    %779 = vmin.xlane.f32.xlu0 %v778
    %v780 = vpop.xlane.xlu0 %779
    %v781 = vcvt.f32.s32 %v780
    %v782 = vcvt.f32.s32 %v776
    %v783 = vshll.u32 %v782, 16
    %v784 = vadd.s32 %v783, %v781
    %v785 = vrot.slane %v784, 4
    %vm786 = vcmp.lt.s32.totalorder %v784, %v785
    %v787 = vsel %vm786, %v784, %v785
    %v788 = vrot.slane %v787, 2
    %vm789 = vcmp.lt.s32.totalorder %v787, %v788
    %v790 = vsel %vm789, %v787, %v788
    %v791 = vrot.slane %v790, 1
    %vm792 = vcmp.lt.s32.totalorder %v790, %v791
    %v793 = vsel %vm792, %v790, %v791
    %s794 = vtos %v793
    %v795 = vstv %s794
    %vm796 = vcmp.eq.s32.totalorder %v155, %v795
    %v797 = vsel %vm796, %v762, 0.0
    %v798 = vsel %vm440, %v797, 0.0
    %799 = vadd.xlane.f32.xlu0 %v798
    %v800 = vpop.xlane.xlu0 %799
    %v801 = vrot.slane %v800, 4
    %v802 = vadd.f32 %v800, %v801
    %v803 = vrot.slane %v802, 2
    %v804 = vadd.f32 %v802, %v803
    %v805 = vrot.slane %v804, 1
    %v806 = vadd.f32 %v804, %v805
    %s807 = vtos %v806
    %vm808 = vcmp.eq.s32.totalorder %v155, 1
    %s809 = sld [smem:[#allocation8 + %s794]]
    %v810 = vld [vmem:[#allocation4] sm:$0x1]
    %v811 = vstv %s809
    %v812 = vsel %vm808, %v811, %v810
    %813 = vst.msk [vmem:[#allocation4] sm:$0x1] %vm71, %v812
    %s814 = scalar_lea.smem [#allocation10], 1
    %815 = sst [smem:[%s814]] %s794
    %s816 = scalar_lea.smem [#allocation11], 1
    %817 = sst [smem:[%s816]] %s807
    %v818 = vld [vmem:[%s9 + $0x2] sm:$0x1]
    %vm819 = vcmp.gt.f32.partialorder %v818, 0.0
    %v820 = vld [vmem:[#allocation4] sm:$0x1]
    %v821 = vsel %vm819, %v820, -inf
    %s822 = sld [smem:[#allocation5 + $0x2]]
    %p823 = scmp.gt.s32.totalorder %s822, 0
    %v824 = vsel %vm71, %v821, -inf
    %825 = vmax.xlane.f32.xlu0 %v824
    %v826 = vpop.xlane.xlu0 %825
    %v827 = vrot.slane %v826, 4
    %v828 = vmax.f32 %v826, %v827
    %v829 = vrot.slane %v828, 2
    %v830 = vmax.f32 %v828, %v829
    %v831 = vrot.slane %v830, 1
    %v832 = vmax.f32 %v830, %v831
    %s833 = vtos %v832
    %s834 = scalar_select %p823, %s833, 0.0
    %v835 = vld [vmem:[%s2 + $0x2] sm:$0x1]
    %v836 = vstv %s834
    %v837 = vmul.f32 %v836, %v86
    %v838 = vadd.f32 %v835, %v837
    %v839 = vld [vmem:[#allocation3] sm:$0x1]
    %v840 = vadd.f32 %v838, %v839
    %v841 = vxor.u32 %v840, 2147483648
    %v842 = vmul.f32 %v841, 1.442695
    %v843 = vpow.pop %v842
    %v844 = vadd.f32 %v843, 1.0
    %v845 = vrcp.pop %v844
    %v846 = vmul.f32 1.0, %v845
    %v847 = vmul.f32 %v846, 2.0
    %v848 = vsub.f32 %v847, 1.0
    %v849 = vld [vmem:[#allocation2] sm:$0x1]
    %v851 = vlaneseq
    %v852 = vshrl.u32 %v851, 7
    %v853 = vsub.s32 0, %v852
    %v854 = vrot.slane %v849, %v853
    %855 = vrot.lane.b32.xlu0 %v854, 32
    %v856 = vpop.permute.xlu0 %855
    %v858 = vmul.f32 %v846, %v856
    %860 = vrot.lane.b32.xlu0 %v848, 64
    %v861 = vpop.permute.xlu0 %860
    %v863 = vmul.f32 %v846, %v861
    %865 = vrot.lane.b32.xlu0 %v863, 32
    %v866 = vpop.permute.xlu0 %865
    %v868 = vadd.f32 %v858, %v866
    %v869 = vtanh.pop %v868
    %871 = vrot.lane.b32.xlu0 %v869, 64
    %v872 = vpop.permute.xlu0 %871
    %v874 = vmul.f32 %v846, %v872
    %876 = vrot.lane.b32.xlu0 %v868, 96
    %v877 = vpop.permute.xlu0 %876
    %879 = vst.msk [vmem:[#allocation2] sm:$0x1] %vm69, %v877
    %v880 = vpack.c.bf16 %v874, %v874
    %882 = vrot.lane.b32.xlu0 %v880, 32
    %v883 = vpop.permute.xlu0 %882
    %v885 = vsel %vm109, %v883, 0
    %887 = vmatprep.subr.bf16.mxu0 %v102
    %888 = vmatpush1.bf16.msra.mxu0 %v101
    %889 = vmatprep.subr.bf16.mxu0 %v104
    %890 = vmatpush1.bf16.msra.mxu0 %v103
    %891 = vmatprep.subr.bf16.mxu0 0
    %892 = vmatpush1.bf16.msra.mxu0 0
    %893 = vmatprep.subr.bf16.mxu0 0
    %894 = vmatpush1.bf16.msra.mxu0 0
    %895 = vmatprep.subr.bf16.mxu0 0
    %896 = vmatpush1.bf16.msra.mxu0 0
    %897 = vmatprep.subr.bf16.mxu0 0
    %898 = vmatpush1.bf16.msra.mxu0 0
    %899 = vmatprep.subr.bf16.mxu0 0
    %900 = vmatpush1.bf16.msra.mxu0 0
    %901 = vmatprep.subr.bf16.mxu0 0
    %902 = vmatpush1.bf16.msra.mxu0 0
    %903 = vmatprep.subr.bf16.mxu0 0
    %904 = vmatpush1.bf16.msra.mxu0 0
    %905 = vmatprep.subr.bf16.mxu0 0
    %906 = vmatpush1.bf16.msra.mxu0 0
    %907 = vmatprep.subr.bf16.mxu0 0
    %908 = vmatpush1.bf16.msra.mxu0 0
    %909 = vmatprep.subr.bf16.mxu0 0
    %910 = vmatpush1.bf16.msra.mxu0 0
    %911 = vmatprep.subr.bf16.mxu0 0
    %912 = vmatpush1.bf16.msra.mxu0 0
    %913 = vmatprep.subr.bf16.mxu0 0
    %914 = vmatpush1.bf16.msra.mxu0 0
    %915 = vmatprep.subr.bf16.mxu0 0
    %916 = vmatpush1.bf16.msra.mxu0 0
    %917 = vmatprep.subr.bf16.mxu0 0
    %918 = vmatpush1.bf16.msra.mxu0 0
    %919 = vmatprep.mubr.bf16.mxu0 0
    %920 = vmatmul.mubr.bf16.gmra.mrb[0].mxu0 %v885
    %v921 = vpop.f32.mrb[0].mxu0
    %v922 = vadd.f32 0.0, %v921
    %v923 = vpop.f32.mrb[0].mxu0
    %v924 = vadd.f32 0.0, %v923
    %v925 = vpop.f32.mrb[0].mxu0
    %v926 = vpop.f32.mrb[0].mxu0
    %927 = vdwg.mxu0
    %928 = vmatprep.subr.bf16.mxu0 0
    %929 = vmatpush1.bf16.msra.mxu0 %v230
    %930 = vmatprep.subr.bf16.mxu0 0
    %931 = vmatpush1.bf16.msra.mxu0 %v231
    %932 = vmatprep.subr.bf16.mxu0 0
    %933 = vmatpush1.bf16.msra.mxu0 0
    %934 = vmatprep.subr.bf16.mxu0 0
    %935 = vmatpush1.bf16.msra.mxu0 0
    %936 = vmatprep.subr.bf16.mxu0 0
    %937 = vmatpush1.bf16.msra.mxu0 0
    %938 = vmatprep.subr.bf16.mxu0 0
    %939 = vmatpush1.bf16.msra.mxu0 0
    %940 = vmatprep.subr.bf16.mxu0 0
    %941 = vmatpush1.bf16.msra.mxu0 0
    %942 = vmatprep.subr.bf16.mxu0 0
    %943 = vmatpush1.bf16.msra.mxu0 0
    %944 = vmatprep.subr.bf16.mxu0 0
    %945 = vmatpush1.bf16.msra.mxu0 0
    %946 = vmatprep.subr.bf16.mxu0 0
    %947 = vmatpush1.bf16.msra.mxu0 0
    %948 = vmatprep.subr.bf16.mxu0 0
    %949 = vmatpush1.bf16.msra.mxu0 0
    %950 = vmatprep.subr.bf16.mxu0 0
    %951 = vmatpush1.bf16.msra.mxu0 0
    %952 = vmatprep.subr.bf16.mxu0 0
    %953 = vmatpush1.bf16.msra.mxu0 0
    %954 = vmatprep.subr.bf16.mxu0 0
    %955 = vmatpush1.bf16.msra.mxu0 0
    %956 = vmatprep.subr.bf16.mxu0 0
    %957 = vmatpush1.bf16.msra.mxu0 0
    %958 = vmatprep.subr.bf16.mxu0 0
    %959 = vmatpush1.bf16.msra.mxu0 0
    %960 = vmatprep.mubr.bf16.mxu0 0
    %961 = vmatmul.mubr.bf16.gmra.mrb[0].mxu0 %v885
    %v962 = vpop.f32.mrb[0].mxu0
    %v963 = vadd.f32 0.0, %v962
    %v964 = vpop.f32.mrb[0].mxu0
    %v965 = vpop.f32.mrb[0].mxu0
    %v966 = vpop.f32.mrb[0].mxu0
    %967 = vdwg.mxu0
    %968 = vst [vmem:[#allocation3] sm:$0x1] %v922
    %v969 = vsel %vm71, %v924, -inf
    %970 = vmax.xlane.f32.xlu0 %v969
    %v971 = vpop.xlane.xlu0 %970
    %v972 = vsub.f32 %v924, %v971
    %v973 = vmul.f32 %v972, 1.442695
    %v974 = vpow.pop %v973
    %v975 = vsel %vm71, %v974, 0.0
    %976 = vadd.xlane.f32.xlu0 %v975
    %v977 = vpop.xlane.xlu0 %976
    %v978 = vrcp.pop %v977
    %v979 = vmul.f32 %v974, %v978
    %v980 = vpack.c.bf16 %v979, %v979
    %v982 = vsel %vm331, %v980, 0
    %984 = vmatprep.subr.bf16.mxu0 0
    %985 = vmatpush1.bf16.msra.mxu0 %v337
    %986 = vmatprep.subr.bf16.mxu0 0
    %987 = vmatpush1.bf16.msra.mxu0 0
    %988 = vmatprep.subr.bf16.mxu0 0
    %989 = vmatpush1.bf16.msra.mxu0 0
    %990 = vmatprep.subr.bf16.mxu0 0
    %991 = vmatpush1.bf16.msra.mxu0 0
    %992 = vmatprep.subr.bf16.mxu0 0
    %993 = vmatpush1.bf16.msra.mxu0 0
    %994 = vmatprep.subr.bf16.mxu0 0
    %995 = vmatpush1.bf16.msra.mxu0 0
    %996 = vmatprep.subr.bf16.mxu0 0
    %997 = vmatpush1.bf16.msra.mxu0 0
    %998 = vmatprep.subr.bf16.mxu0 0
    %999 = vmatpush1.bf16.msra.mxu0 0
    %1000 = vmatprep.subr.bf16.mxu0 0
    %1001 = vmatpush1.bf16.msra.mxu0 0
    %1002 = vmatprep.subr.bf16.mxu0 0
    %1003 = vmatpush1.bf16.msra.mxu0 0
    %1004 = vmatprep.subr.bf16.mxu0 0
    %1005 = vmatpush1.bf16.msra.mxu0 0
    %1006 = vmatprep.subr.bf16.mxu0 0
    %1007 = vmatpush1.bf16.msra.mxu0 0
    %1008 = vmatprep.subr.bf16.mxu0 0
    %1009 = vmatpush1.bf16.msra.mxu0 0
    %1010 = vmatprep.subr.bf16.mxu0 0
    %1011 = vmatpush1.bf16.msra.mxu0 0
    %1012 = vmatprep.subr.bf16.mxu0 0
    %1013 = vmatpush1.bf16.msra.mxu0 0
    %1014 = vmatprep.subr.bf16.mxu0 0
    %1015 = vmatpush1.bf16.msra.mxu0 0
    %1016 = vmatprep.mubr.bf16.mxu0 0
    %1017 = vmatmul.mubr.bf16.gmra.mrb[0].mxu0 %v982
    %v1018 = vpop.f32.mrb[0].mxu0
    %v1019 = vadd.f32 0.0, %v1018
    %v1020 = vpop.f32.mrb[0].mxu0
    %v1021 = vpop.f32.mrb[0].mxu0
    %v1022 = vpop.f32.mrb[0].mxu0
    %1023 = vdwg.mxu0
    %v1024 = vpack.c.bf16 %v1019, %v1019
    %v1026 = vsel %vm109, %v1024, 0
    %1028 = vmatprep.subr.bf16.mxu0 0
    %1029 = vmatpush1.bf16.msra.mxu0 %v388
    %1030 = vmatprep.subr.bf16.mxu0 0
    %1031 = vmatpush1.bf16.msra.mxu0 %v389
    %1032 = vmatprep.subr.bf16.mxu0 0
    %1033 = vmatpush1.bf16.msra.mxu0 0
    %1034 = vmatprep.subr.bf16.mxu0 0
    %1035 = vmatpush1.bf16.msra.mxu0 0
    %1036 = vmatprep.subr.bf16.mxu0 0
    %1037 = vmatpush1.bf16.msra.mxu0 0
    %1038 = vmatprep.subr.bf16.mxu0 0
    %1039 = vmatpush1.bf16.msra.mxu0 0
    %1040 = vmatprep.subr.bf16.mxu0 0
    %1041 = vmatpush1.bf16.msra.mxu0 0
    %1042 = vmatprep.subr.bf16.mxu0 0
    %1043 = vmatpush1.bf16.msra.mxu0 0
    %1044 = vmatprep.subr.bf16.mxu0 0
    %1045 = vmatpush1.bf16.msra.mxu0 0
    %1046 = vmatprep.subr.bf16.mxu0 0
    %1047 = vmatpush1.bf16.msra.mxu0 0
    %1048 = vmatprep.subr.bf16.mxu0 0
    %1049 = vmatpush1.bf16.msra.mxu0 0
    %1050 = vmatprep.subr.bf16.mxu0 0
    %1051 = vmatpush1.bf16.msra.mxu0 0
    %1052 = vmatprep.subr.bf16.mxu0 0
    %1053 = vmatpush1.bf16.msra.mxu0 0
    %1054 = vmatprep.subr.bf16.mxu0 0
    %1055 = vmatpush1.bf16.msra.mxu0 0
    %1056 = vmatprep.subr.bf16.mxu0 0
    %1057 = vmatpush1.bf16.msra.mxu0 0
    %1058 = vmatprep.subr.bf16.mxu0 0
    %1059 = vmatpush1.bf16.msra.mxu0 0
    %1060 = vmatprep.mubr.bf16.mxu0 0
    %1061 = vmatmul.mubr.bf16.gmra.mrb[0].mxu0 %v1026
    %v1062 = vpop.f32.mrb[0].mxu0
    %v1063 = vadd.f32 0.0, %v1062
    %v1064 = vpop.f32.mrb[0].mxu0
    %v1065 = vpop.f32.mrb[0].mxu0
    %v1066 = vpop.f32.mrb[0].mxu0
    %1067 = vdwg.mxu0
    %v1068 = vadd.f32 %v963, %v1063
    %v1069 = vtanh.pop %v1068
    %v1070 = vmul.f32 %v1069, 10.0
    %v1071 = vmul.f32 %v1070, 1.442695
    %v1072 = vpow.pop %v1071
    %v1073 = vsel %vm440, %v1072, 0.0
    %1074 = vadd.xlane.f32.xlu0 %v1073
    %v1075 = vpop.xlane.xlu0 %1074
    %v1076 = vlog2.pop %v1075
    %v1077 = vmul.f32 %v1076, 0.6931472
    %v1078 = vsub.f32 %v1070, %v1077
    %v1079 = vld [vmem:[%s10 + $0x2] sm:$0x1]
    %v1080 = vadd.f32 %v1070, %v1079
    %v1081 = vsel %vm440, %v1080, -inf
    %1082 = vmax.xlane.f32.xlu0 %v1081
    %v1083 = vpop.xlane.xlu0 %1082
    %vm1084 = vcmp.ge.f32.partialorder %v1080, %v1083
    %v1085 = vsel %vm1084, %v155, 4
    %v1086 = vsel %vm440, %v1085, 2147483647
    %v1087 = vand.u32 %v1086, 65535
    %v1088 = vshra.s32 %v1086, 16
    %v1089 = vcvt.s32.f32 %v1087
    %v1090 = vcvt.s32.f32 %v1088
    %1091 = vmin.xlane.f32.xlu0 %v1090
    %v1092 = vpop.xlane.xlu0 %1091
    %vm1093 = vcmp.eq.f32.partialorder %v1090, %v1092
    %v1094 = vsel %vm1093, %v1089, inf
    %1095 = vmin.xlane.f32.xlu0 %v1094
    %v1096 = vpop.xlane.xlu0 %1095
    %v1097 = vcvt.f32.s32 %v1096
    %v1098 = vcvt.f32.s32 %v1092
    %v1099 = vshll.u32 %v1098, 16
    %v1100 = vadd.s32 %v1099, %v1097
    %v1101 = vrot.slane %v1100, 4
    %vm1102 = vcmp.lt.s32.totalorder %v1100, %v1101
    %v1103 = vsel %vm1102, %v1100, %v1101
    %v1104 = vrot.slane %v1103, 2
    %vm1105 = vcmp.lt.s32.totalorder %v1103, %v1104
    %v1106 = vsel %vm1105, %v1103, %v1104
    %v1107 = vrot.slane %v1106, 1
    %vm1108 = vcmp.lt.s32.totalorder %v1106, %v1107
    %v1109 = vsel %vm1108, %v1106, %v1107
    %s1110 = vtos %v1109
    %v1111 = vstv %s1110
    %vm1112 = vcmp.eq.s32.totalorder %v155, %v1111
    %v1113 = vsel %vm1112, %v1078, 0.0
    %v1114 = vsel %vm440, %v1113, 0.0
    %1115 = vadd.xlane.f32.xlu0 %v1114
    %v1116 = vpop.xlane.xlu0 %1115
    %v1117 = vrot.slane %v1116, 4
    %v1118 = vadd.f32 %v1116, %v1117
    %v1119 = vrot.slane %v1118, 2
    %v1120 = vadd.f32 %v1118, %v1119
    %v1121 = vrot.slane %v1120, 1
    %v1122 = vadd.f32 %v1120, %v1121
    %s1123 = vtos %v1122
    %vm1124 = vcmp.eq.s32.totalorder %v155, 2
    %s1125 = sld [smem:[#allocation8 + %s1110]]
    %v1126 = vld [vmem:[#allocation4] sm:$0x1]
    %v1127 = vstv %s1125
    %v1128 = vsel %vm1124, %v1127, %v1126
    %1129 = vst.msk [vmem:[#allocation4] sm:$0x1] %vm71, %v1128
    %s1130 = scalar_lea.smem [#allocation10], 2
    %1131 = sst [smem:[%s1130]] %s1110
    %s1132 = scalar_lea.smem [#allocation11], 2
    %1133 = sst [smem:[%s1132]] %s1123
    %v1134 = vld [vmem:[%s9 + $0x3] sm:$0x1]
    %vm1135 = vcmp.gt.f32.partialorder %v1134, 0.0
    %v1136 = vld [vmem:[#allocation4] sm:$0x1]
    %v1137 = vsel %vm1135, %v1136, -inf
    %s1138 = sld [smem:[#allocation5 + $0x3]]
    %p1139 = scmp.gt.s32.totalorder %s1138, 0
    %v1140 = vsel %vm71, %v1137, -inf
    %1141 = vmax.xlane.f32.xlu0 %v1140
    %v1142 = vpop.xlane.xlu0 %1141
    %v1143 = vrot.slane %v1142, 4
    %v1144 = vmax.f32 %v1142, %v1143
    %v1145 = vrot.slane %v1144, 2
    %v1146 = vmax.f32 %v1144, %v1145
    %v1147 = vrot.slane %v1146, 1
    %v1148 = vmax.f32 %v1146, %v1147
    %s1149 = vtos %v1148
    %s1150 = scalar_select %p1139, %s1149, 0.0
    %v1151 = vld [vmem:[%s2 + $0x3] sm:$0x1]
    %v1152 = vstv %s1150
    %v1153 = vmul.f32 %v1152, %v86
    %v1154 = vadd.f32 %v1151, %v1153
    %v1155 = vld [vmem:[#allocation3] sm:$0x1]
    %v1156 = vadd.f32 %v1154, %v1155
    %v1157 = vxor.u32 %v1156, 2147483648
    %v1158 = vmul.f32 %v1157, 1.442695
    %v1159 = vpow.pop %v1158
    %v1160 = vadd.f32 %v1159, 1.0
    %v1161 = vrcp.pop %v1160
    %v1162 = vmul.f32 1.0, %v1161
    %v1163 = vmul.f32 %v1162, 2.0
    %v1164 = vsub.f32 %v1163, 1.0
    %v1165 = vld [vmem:[#allocation2] sm:$0x1]
    %v1167 = vlaneseq
    %v1168 = vshrl.u32 %v1167, 7
    %v1169 = vsub.s32 0, %v1168
    %v1170 = vrot.slane %v1165, %v1169
    %1171 = vrot.lane.b32.xlu0 %v1170, 32
    %v1172 = vpop.permute.xlu0 %1171
    %v1174 = vmul.f32 %v1162, %v1172
    %1176 = vrot.lane.b32.xlu0 %v1164, 64
    %v1177 = vpop.permute.xlu0 %1176
    %v1179 = vmul.f32 %v1162, %v1177
    %1181 = vrot.lane.b32.xlu0 %v1179, 32
    %v1182 = vpop.permute.xlu0 %1181
    %v1184 = vadd.f32 %v1174, %v1182
    %v1185 = vtanh.pop %v1184
    %1187 = vrot.lane.b32.xlu0 %v1185, 64
    %v1188 = vpop.permute.xlu0 %1187
    %v1190 = vmul.f32 %v1162, %v1188
    %1192 = vrot.lane.b32.xlu0 %v1184, 96
    %v1193 = vpop.permute.xlu0 %1192
    %1195 = vst.msk [vmem:[#allocation2] sm:$0x1] %vm69, %v1193
    %v1196 = vpack.c.bf16 %v1190, %v1190
    %1198 = vrot.lane.b32.xlu0 %v1196, 32
    %v1199 = vpop.permute.xlu0 %1198
    %v1201 = vsel %vm109, %v1199, 0
    %1203 = vmatprep.subr.bf16.mxu0 %v102
    %1204 = vmatpush1.bf16.msra.mxu0 %v101
    %1205 = vmatprep.subr.bf16.mxu0 %v104
    %1206 = vmatpush1.bf16.msra.mxu0 %v103
    %1207 = vmatprep.subr.bf16.mxu0 0
    %1208 = vmatpush1.bf16.msra.mxu0 0
    %1209 = vmatprep.subr.bf16.mxu0 0
    %1210 = vmatpush1.bf16.msra.mxu0 0
    %1211 = vmatprep.subr.bf16.mxu0 0
    %1212 = vmatpush1.bf16.msra.mxu0 0
    %1213 = vmatprep.subr.bf16.mxu0 0
    %1214 = vmatpush1.bf16.msra.mxu0 0
    %1215 = vmatprep.subr.bf16.mxu0 0
    %1216 = vmatpush1.bf16.msra.mxu0 0
    %1217 = vmatprep.subr.bf16.mxu0 0
    %1218 = vmatpush1.bf16.msra.mxu0 0
    %1219 = vmatprep.subr.bf16.mxu0 0
    %1220 = vmatpush1.bf16.msra.mxu0 0
    %1221 = vmatprep.subr.bf16.mxu0 0
    %1222 = vmatpush1.bf16.msra.mxu0 0
    %1223 = vmatprep.subr.bf16.mxu0 0
    %1224 = vmatpush1.bf16.msra.mxu0 0
    %1225 = vmatprep.subr.bf16.mxu0 0
    %1226 = vmatpush1.bf16.msra.mxu0 0
    %1227 = vmatprep.subr.bf16.mxu0 0
    %1228 = vmatpush1.bf16.msra.mxu0 0
    %1229 = vmatprep.subr.bf16.mxu0 0
    %1230 = vmatpush1.bf16.msra.mxu0 0
    %1231 = vmatprep.subr.bf16.mxu0 0
    %1232 = vmatpush1.bf16.msra.mxu0 0
    %1233 = vmatprep.subr.bf16.mxu0 0
    %1234 = vmatpush1.bf16.msra.mxu0 0
    %1235 = vmatprep.mubr.bf16.mxu0 0
    %1236 = vmatmul.mubr.bf16.gmra.mrb[0].mxu0 %v1201
    %v1237 = vpop.f32.mrb[0].mxu0
    %v1238 = vadd.f32 0.0, %v1237
    %v1239 = vpop.f32.mrb[0].mxu0
    %v1240 = vadd.f32 0.0, %v1239
    %v1241 = vpop.f32.mrb[0].mxu0
    %v1242 = vpop.f32.mrb[0].mxu0
    %1243 = vdwg.mxu0
    %1244 = vmatprep.subr.bf16.mxu0 0
    %1245 = vmatpush1.bf16.msra.mxu0 %v230
    %1246 = vmatprep.subr.bf16.mxu0 0
    %1247 = vmatpush1.bf16.msra.mxu0 %v231
    %1248 = vmatprep.subr.bf16.mxu0 0
    %1249 = vmatpush1.bf16.msra.mxu0 0
    %1250 = vmatprep.subr.bf16.mxu0 0
    %1251 = vmatpush1.bf16.msra.mxu0 0
    %1252 = vmatprep.subr.bf16.mxu0 0
    %1253 = vmatpush1.bf16.msra.mxu0 0
    %1254 = vmatprep.subr.bf16.mxu0 0
    %1255 = vmatpush1.bf16.msra.mxu0 0
    %1256 = vmatprep.subr.bf16.mxu0 0
    %1257 = vmatpush1.bf16.msra.mxu0 0
    %1258 = vmatprep.subr.bf16.mxu0 0
    %1259 = vmatpush1.bf16.msra.mxu0 0
    %1260 = vmatprep.subr.bf16.mxu0 0
    %1261 = vmatpush1.bf16.msra.mxu0 0
    %1262 = vmatprep.subr.bf16.mxu0 0
    %1263 = vmatpush1.bf16.msra.mxu0 0
    %1264 = vmatprep.subr.bf16.mxu0 0
    %1265 = vmatpush1.bf16.msra.mxu0 0
    %1266 = vmatprep.subr.bf16.mxu0 0
    %1267 = vmatpush1.bf16.msra.mxu0 0
    %1268 = vmatprep.subr.bf16.mxu0 0
    %1269 = vmatpush1.bf16.msra.mxu0 0
    %1270 = vmatprep.subr.bf16.mxu0 0
    %1271 = vmatpush1.bf16.msra.mxu0 0
    %1272 = vmatprep.subr.bf16.mxu0 0
    %1273 = vmatpush1.bf16.msra.mxu0 0
    %1274 = vmatprep.subr.bf16.mxu0 0
    %1275 = vmatpush1.bf16.msra.mxu0 0
    %1276 = vmatprep.mubr.bf16.mxu0 0
    %1277 = vmatmul.mubr.bf16.gmra.mrb[0].mxu0 %v1201
    %v1278 = vpop.f32.mrb[0].mxu0
    %v1279 = vadd.f32 0.0, %v1278
    %v1280 = vpop.f32.mrb[0].mxu0
    %v1281 = vpop.f32.mrb[0].mxu0
    %v1282 = vpop.f32.mrb[0].mxu0
    %1283 = vdwg.mxu0
    %1284 = vst [vmem:[#allocation3] sm:$0x1] %v1238
    %v1285 = vsel %vm71, %v1240, -inf
    %1286 = vmax.xlane.f32.xlu0 %v1285
    %v1287 = vpop.xlane.xlu0 %1286
    %v1288 = vsub.f32 %v1240, %v1287
    %v1289 = vmul.f32 %v1288, 1.442695
    %v1290 = vpow.pop %v1289
    %v1291 = vsel %vm71, %v1290, 0.0
    %1292 = vadd.xlane.f32.xlu0 %v1291
    %v1293 = vpop.xlane.xlu0 %1292
    %v1294 = vrcp.pop %v1293
    %v1295 = vmul.f32 %v1290, %v1294
    %v1296 = vpack.c.bf16 %v1295, %v1295
    %v1298 = vsel %vm331, %v1296, 0
    %1300 = vmatprep.subr.bf16.mxu0 0
    %1301 = vmatpush1.bf16.msra.mxu0 %v337
    %1302 = vmatprep.subr.bf16.mxu0 0
    %1303 = vmatpush1.bf16.msra.mxu0 0
    %1304 = vmatprep.subr.bf16.mxu0 0
    %1305 = vmatpush1.bf16.msra.mxu0 0
    %1306 = vmatprep.subr.bf16.mxu0 0
    %1307 = vmatpush1.bf16.msra.mxu0 0
    %1308 = vmatprep.subr.bf16.mxu0 0
    %1309 = vmatpush1.bf16.msra.mxu0 0
    %1310 = vmatprep.subr.bf16.mxu0 0
    %1311 = vmatpush1.bf16.msra.mxu0 0
    %1312 = vmatprep.subr.bf16.mxu0 0
    %1313 = vmatpush1.bf16.msra.mxu0 0
    %1314 = vmatprep.subr.bf16.mxu0 0
    %1315 = vmatpush1.bf16.msra.mxu0 0
    %1316 = vmatprep.subr.bf16.mxu0 0
    %1317 = vmatpush1.bf16.msra.mxu0 0
    %1318 = vmatprep.subr.bf16.mxu0 0
    %1319 = vmatpush1.bf16.msra.mxu0 0
    %1320 = vmatprep.subr.bf16.mxu0 0
    %1321 = vmatpush1.bf16.msra.mxu0 0
    %1322 = vmatprep.subr.bf16.mxu0 0
    %1323 = vmatpush1.bf16.msra.mxu0 0
    %1324 = vmatprep.subr.bf16.mxu0 0
    %1325 = vmatpush1.bf16.msra.mxu0 0
    %1326 = vmatprep.subr.bf16.mxu0 0
    %1327 = vmatpush1.bf16.msra.mxu0 0
    %1328 = vmatprep.subr.bf16.mxu0 0
    %1329 = vmatpush1.bf16.msra.mxu0 0
    %1330 = vmatprep.subr.bf16.mxu0 0
    %1331 = vmatpush1.bf16.msra.mxu0 0
    %1332 = vmatprep.mubr.bf16.mxu0 0
    %1333 = vmatmul.mubr.bf16.gmra.mrb[0].mxu0 %v1298
    %v1334 = vpop.f32.mrb[0].mxu0
    %v1335 = vadd.f32 0.0, %v1334
    %v1336 = vpop.f32.mrb[0].mxu0
    %v1337 = vpop.f32.mrb[0].mxu0
    %v1338 = vpop.f32.mrb[0].mxu0
    %1339 = vdwg.mxu0
    %v1340 = vpack.c.bf16 %v1335, %v1335
    %v1342 = vsel %vm109, %v1340, 0
    %1344 = vmatprep.subr.bf16.mxu0 0
    %1345 = vmatpush1.bf16.msra.mxu0 %v388
    %1346 = vmatprep.subr.bf16.mxu0 0
    %1347 = vmatpush1.bf16.msra.mxu0 %v389
    %1348 = vmatprep.subr.bf16.mxu0 0
    %1349 = vmatpush1.bf16.msra.mxu0 0
    %1350 = vmatprep.subr.bf16.mxu0 0
    %1351 = vmatpush1.bf16.msra.mxu0 0
    %1352 = vmatprep.subr.bf16.mxu0 0
    %1353 = vmatpush1.bf16.msra.mxu0 0
    %1354 = vmatprep.subr.bf16.mxu0 0
    %1355 = vmatpush1.bf16.msra.mxu0 0
    %1356 = vmatprep.subr.bf16.mxu0 0
    %1357 = vmatpush1.bf16.msra.mxu0 0
    %1358 = vmatprep.subr.bf16.mxu0 0
    %1359 = vmatpush1.bf16.msra.mxu0 0
    %1360 = vmatprep.subr.bf16.mxu0 0
    %1361 = vmatpush1.bf16.msra.mxu0 0
    %1362 = vmatprep.subr.bf16.mxu0 0
    %1363 = vmatpush1.bf16.msra.mxu0 0
    %1364 = vmatprep.subr.bf16.mxu0 0
    %1365 = vmatpush1.bf16.msra.mxu0 0
    %1366 = vmatprep.subr.bf16.mxu0 0
    %1367 = vmatpush1.bf16.msra.mxu0 0
    %1368 = vmatprep.subr.bf16.mxu0 0
    %1369 = vmatpush1.bf16.msra.mxu0 0
    %1370 = vmatprep.subr.bf16.mxu0 0
    %1371 = vmatpush1.bf16.msra.mxu0 0
    %1372 = vmatprep.subr.bf16.mxu0 0
    %1373 = vmatpush1.bf16.msra.mxu0 0
    %1374 = vmatprep.subr.bf16.mxu0 0
    %1375 = vmatpush1.bf16.msra.mxu0 0
    %1376 = vmatprep.mubr.bf16.mxu0 0
    %1377 = vmatmul.mubr.bf16.gmra.mrb[0].mxu0 %v1342
    %v1378 = vpop.f32.mrb[0].mxu0
    %v1379 = vadd.f32 0.0, %v1378
    %v1380 = vpop.f32.mrb[0].mxu0
    %v1381 = vpop.f32.mrb[0].mxu0
    %v1382 = vpop.f32.mrb[0].mxu0
    %1383 = vdwg.mxu0
    %v1384 = vadd.f32 %v1279, %v1379
    %v1385 = vtanh.pop %v1384
    %v1386 = vmul.f32 %v1385, 10.0
    %v1387 = vmul.f32 %v1386, 1.442695
    %v1388 = vpow.pop %v1387
    %v1389 = vsel %vm440, %v1388, 0.0
    %1390 = vadd.xlane.f32.xlu0 %v1389
    %v1391 = vpop.xlane.xlu0 %1390
    %v1392 = vlog2.pop %v1391
    %v1393 = vmul.f32 %v1392, 0.6931472
    %v1394 = vsub.f32 %v1386, %v1393
    %v1395 = vld [vmem:[%s10 + $0x3] sm:$0x1]
    %v1396 = vadd.f32 %v1386, %v1395
    %v1397 = vsel %vm440, %v1396, -inf
    %1398 = vmax.xlane.f32.xlu0 %v1397
    %v1399 = vpop.xlane.xlu0 %1398
    %vm1400 = vcmp.ge.f32.partialorder %v1396, %v1399
    %v1401 = vsel %vm1400, %v155, 4
    %v1402 = vsel %vm440, %v1401, 2147483647
    %v1403 = vand.u32 %v1402, 65535
    %v1404 = vshra.s32 %v1402, 16
    %v1405 = vcvt.s32.f32 %v1403
    %v1406 = vcvt.s32.f32 %v1404
    %1407 = vmin.xlane.f32.xlu0 %v1406
    %v1408 = vpop.xlane.xlu0 %1407
    %vm1409 = vcmp.eq.f32.partialorder %v1406, %v1408
    %v1410 = vsel %vm1409, %v1405, inf
    %1411 = vmin.xlane.f32.xlu0 %v1410
    %v1412 = vpop.xlane.xlu0 %1411
    %v1413 = vcvt.f32.s32 %v1412
    %v1414 = vcvt.f32.s32 %v1408
    %v1415 = vshll.u32 %v1414, 16
    %v1416 = vadd.s32 %v1415, %v1413
    %v1417 = vrot.slane %v1416, 4
    %vm1418 = vcmp.lt.s32.totalorder %v1416, %v1417
    %v1419 = vsel %vm1418, %v1416, %v1417
    %v1420 = vrot.slane %v1419, 2
    %vm1421 = vcmp.lt.s32.totalorder %v1419, %v1420
    %v1422 = vsel %vm1421, %v1419, %v1420
    %v1423 = vrot.slane %v1422, 1
    %vm1424 = vcmp.lt.s32.totalorder %v1422, %v1423
    %v1425 = vsel %vm1424, %v1422, %v1423
    %s1426 = vtos %v1425
    %v1427 = vstv %s1426
    %vm1428 = vcmp.eq.s32.totalorder %v155, %v1427
    %v1429 = vsel %vm1428, %v1394, 0.0
    %v1430 = vsel %vm440, %v1429, 0.0
    %1431 = vadd.xlane.f32.xlu0 %v1430
    %v1432 = vpop.xlane.xlu0 %1431
    %v1433 = vrot.slane %v1432, 4
    %v1434 = vadd.f32 %v1432, %v1433
    %v1435 = vrot.slane %v1434, 2
    %v1436 = vadd.f32 %v1434, %v1435
    %v1437 = vrot.slane %v1436, 1
    %v1438 = vadd.f32 %v1436, %v1437
    %s1439 = vtos %v1438
    %vm1440 = vcmp.eq.s32.totalorder %v155, 3
    %s1441 = sld [smem:[#allocation8 + %s1426]]
    %v1442 = vld [vmem:[#allocation4] sm:$0x1]
    %v1443 = vstv %s1441
    %v1444 = vsel %vm1440, %v1443, %v1442
    %1445 = vst.msk [vmem:[#allocation4] sm:$0x1] %vm71, %v1444
    %s1446 = scalar_lea.smem [#allocation10], 3
    %1447 = sst [smem:[%s1446]] %s1426
    %s1448 = scalar_lea.smem [#allocation11], 3
    %1449 = sst [smem:[%s1448]] %s1439
    %v1450 = vld [vmem:[%s9 + $0x4] sm:$0x1]
    %vm1451 = vcmp.gt.f32.partialorder %v1450, 0.0
    %v1452 = vld [vmem:[#allocation4] sm:$0x1]
    %v1453 = vsel %vm1451, %v1452, -inf
    %s1454 = sld [smem:[#allocation5 + $0x4]]
    %p1455 = scmp.gt.s32.totalorder %s1454, 0
    %v1456 = vsel %vm71, %v1453, -inf
    %1457 = vmax.xlane.f32.xlu0 %v1456
    %v1458 = vpop.xlane.xlu0 %1457
    %v1459 = vrot.slane %v1458, 4
    %v1460 = vmax.f32 %v1458, %v1459
    %v1461 = vrot.slane %v1460, 2
    %v1462 = vmax.f32 %v1460, %v1461
    %v1463 = vrot.slane %v1462, 1
    %v1464 = vmax.f32 %v1462, %v1463
    %s1465 = vtos %v1464
    %s1466 = scalar_select %p1455, %s1465, 0.0
    %v1467 = vld [vmem:[%s2 + $0x4] sm:$0x1]
    %v1468 = vstv %s1466
    %v1469 = vmul.f32 %v1468, %v86
    %v1470 = vadd.f32 %v1467, %v1469
    %v1471 = vld [vmem:[#allocation3] sm:$0x1]
    %v1472 = vadd.f32 %v1470, %v1471
    %v1473 = vxor.u32 %v1472, 2147483648
    %v1474 = vmul.f32 %v1473, 1.442695
    %v1475 = vpow.pop %v1474
    %v1476 = vadd.f32 %v1475, 1.0
    %v1477 = vrcp.pop %v1476
    %v1478 = vmul.f32 1.0, %v1477
    %v1479 = vmul.f32 %v1478, 2.0
    %v1480 = vsub.f32 %v1479, 1.0
    %v1481 = vld [vmem:[#allocation2] sm:$0x1]
    %v1483 = vlaneseq
    %v1484 = vshrl.u32 %v1483, 7
    %v1485 = vsub.s32 0, %v1484
    %v1486 = vrot.slane %v1481, %v1485
    %1487 = vrot.lane.b32.xlu0 %v1486, 32
    %v1488 = vpop.permute.xlu0 %1487
    %v1490 = vmul.f32 %v1478, %v1488
    %1492 = vrot.lane.b32.xlu0 %v1480, 64
    %v1493 = vpop.permute.xlu0 %1492
    %v1495 = vmul.f32 %v1478, %v1493
    %1497 = vrot.lane.b32.xlu0 %v1495, 32
    %v1498 = vpop.permute.xlu0 %1497
    %v1500 = vadd.f32 %v1490, %v1498
    %v1501 = vtanh.pop %v1500
    %1503 = vrot.lane.b32.xlu0 %v1501, 64
    %v1504 = vpop.permute.xlu0 %1503
    %v1506 = vmul.f32 %v1478, %v1504
    %1508 = vrot.lane.b32.xlu0 %v1500, 96
    %v1509 = vpop.permute.xlu0 %1508
    %1511 = vst.msk [vmem:[#allocation2] sm:$0x1] %vm69, %v1509
    %v1512 = vpack.c.bf16 %v1506, %v1506
    %1514 = vrot.lane.b32.xlu0 %v1512, 32
    %v1515 = vpop.permute.xlu0 %1514
    %v1517 = vsel %vm109, %v1515, 0
    %1519 = vmatprep.subr.bf16.mxu0 %v102
    %1520 = vmatpush1.bf16.msra.mxu0 %v101
    %1521 = vmatprep.subr.bf16.mxu0 %v104
    %1522 = vmatpush1.bf16.msra.mxu0 %v103
    %1523 = vmatprep.subr.bf16.mxu0 0
    %1524 = vmatpush1.bf16.msra.mxu0 0
    %1525 = vmatprep.subr.bf16.mxu0 0
    %1526 = vmatpush1.bf16.msra.mxu0 0
    %1527 = vmatprep.subr.bf16.mxu0 0
    %1528 = vmatpush1.bf16.msra.mxu0 0
    %1529 = vmatprep.subr.bf16.mxu0 0
    %1530 = vmatpush1.bf16.msra.mxu0 0
    %1531 = vmatprep.subr.bf16.mxu0 0
    %1532 = vmatpush1.bf16.msra.mxu0 0
    %1533 = vmatprep.subr.bf16.mxu0 0
    %1534 = vmatpush1.bf16.msra.mxu0 0
    %1535 = vmatprep.subr.bf16.mxu0 0
    %1536 = vmatpush1.bf16.msra.mxu0 0
    %1537 = vmatprep.subr.bf16.mxu0 0
    %1538 = vmatpush1.bf16.msra.mxu0 0
    %1539 = vmatprep.subr.bf16.mxu0 0
    %1540 = vmatpush1.bf16.msra.mxu0 0
    %1541 = vmatprep.subr.bf16.mxu0 0
    %1542 = vmatpush1.bf16.msra.mxu0 0
    %1543 = vmatprep.subr.bf16.mxu0 0
    %1544 = vmatpush1.bf16.msra.mxu0 0
    %1545 = vmatprep.subr.bf16.mxu0 0
    %1546 = vmatpush1.bf16.msra.mxu0 0
    %1547 = vmatprep.subr.bf16.mxu0 0
    %1548 = vmatpush1.bf16.msra.mxu0 0
    %1549 = vmatprep.subr.bf16.mxu0 0
    %1550 = vmatpush1.bf16.msra.mxu0 0
    %1551 = vmatprep.mubr.bf16.mxu0 0
    %1552 = vmatmul.mubr.bf16.gmra.mrb[0].mxu0 %v1517
    %v1553 = vpop.f32.mrb[0].mxu0
    %v1554 = vadd.f32 0.0, %v1553
    %v1555 = vpop.f32.mrb[0].mxu0
    %v1556 = vadd.f32 0.0, %v1555
    %v1557 = vpop.f32.mrb[0].mxu0
    %v1558 = vpop.f32.mrb[0].mxu0
    %1559 = vdwg.mxu0
    %1560 = vmatprep.subr.bf16.mxu0 0
    %1561 = vmatpush1.bf16.msra.mxu0 %v230
    %1562 = vmatprep.subr.bf16.mxu0 0
    %1563 = vmatpush1.bf16.msra.mxu0 %v231
    %1564 = vmatprep.subr.bf16.mxu0 0
    %1565 = vmatpush1.bf16.msra.mxu0 0
    %1566 = vmatprep.subr.bf16.mxu0 0
    %1567 = vmatpush1.bf16.msra.mxu0 0
    %1568 = vmatprep.subr.bf16.mxu0 0
    %1569 = vmatpush1.bf16.msra.mxu0 0
    %1570 = vmatprep.subr.bf16.mxu0 0
    %1571 = vmatpush1.bf16.msra.mxu0 0
    %1572 = vmatprep.subr.bf16.mxu0 0
    %1573 = vmatpush1.bf16.msra.mxu0 0
    %1574 = vmatprep.subr.bf16.mxu0 0
    %1575 = vmatpush1.bf16.msra.mxu0 0
    %1576 = vmatprep.subr.bf16.mxu0 0
    %1577 = vmatpush1.bf16.msra.mxu0 0
    %1578 = vmatprep.subr.bf16.mxu0 0
    %1579 = vmatpush1.bf16.msra.mxu0 0
    %1580 = vmatprep.subr.bf16.mxu0 0
    %1581 = vmatpush1.bf16.msra.mxu0 0
    %1582 = vmatprep.subr.bf16.mxu0 0
    %1583 = vmatpush1.bf16.msra.mxu0 0
    %1584 = vmatprep.subr.bf16.mxu0 0
    %1585 = vmatpush1.bf16.msra.mxu0 0
    %1586 = vmatprep.subr.bf16.mxu0 0
    %1587 = vmatpush1.bf16.msra.mxu0 0
    %1588 = vmatprep.subr.bf16.mxu0 0
    %1589 = vmatpush1.bf16.msra.mxu0 0
    %1590 = vmatprep.subr.bf16.mxu0 0
    %1591 = vmatpush1.bf16.msra.mxu0 0
    %1592 = vmatprep.mubr.bf16.mxu0 0
    %1593 = vmatmul.mubr.bf16.gmra.mrb[0].mxu0 %v1517
    %v1594 = vpop.f32.mrb[0].mxu0
    %v1595 = vadd.f32 0.0, %v1594
    %v1596 = vpop.f32.mrb[0].mxu0
    %v1597 = vpop.f32.mrb[0].mxu0
    %v1598 = vpop.f32.mrb[0].mxu0
    %1599 = vdwg.mxu0
    %1600 = vst [vmem:[#allocation3] sm:$0x1] %v1554
    %v1601 = vsel %vm71, %v1556, -inf
    %1602 = vmax.xlane.f32.xlu0 %v1601
    %v1603 = vpop.xlane.xlu0 %1602
    %v1604 = vsub.f32 %v1556, %v1603
    %v1605 = vmul.f32 %v1604, 1.442695
    %v1606 = vpow.pop %v1605
    %v1607 = vsel %vm71, %v1606, 0.0
    %1608 = vadd.xlane.f32.xlu0 %v1607
    %v1609 = vpop.xlane.xlu0 %1608
    %v1610 = vrcp.pop %v1609
    %v1611 = vmul.f32 %v1606, %v1610
    %v1612 = vpack.c.bf16 %v1611, %v1611
    %v1614 = vsel %vm331, %v1612, 0
    %1616 = vmatprep.subr.bf16.mxu0 0
    %1617 = vmatpush1.bf16.msra.mxu0 %v337
    %1618 = vmatprep.subr.bf16.mxu0 0
    %1619 = vmatpush1.bf16.msra.mxu0 0
    %1620 = vmatprep.subr.bf16.mxu0 0
    %1621 = vmatpush1.bf16.msra.mxu0 0
    %1622 = vmatprep.subr.bf16.mxu0 0
    %1623 = vmatpush1.bf16.msra.mxu0 0
    %1624 = vmatprep.subr.bf16.mxu0 0
    %1625 = vmatpush1.bf16.msra.mxu0 0
    %1626 = vmatprep.subr.bf16.mxu0 0
    %1627 = vmatpush1.bf16.msra.mxu0 0
    %1628 = vmatprep.subr.bf16.mxu0 0
    %1629 = vmatpush1.bf16.msra.mxu0 0
    %1630 = vmatprep.subr.bf16.mxu0 0
    %1631 = vmatpush1.bf16.msra.mxu0 0
    %1632 = vmatprep.subr.bf16.mxu0 0
    %1633 = vmatpush1.bf16.msra.mxu0 0
    %1634 = vmatprep.subr.bf16.mxu0 0
    %1635 = vmatpush1.bf16.msra.mxu0 0
    %1636 = vmatprep.subr.bf16.mxu0 0
    %1637 = vmatpush1.bf16.msra.mxu0 0
    %1638 = vmatprep.subr.bf16.mxu0 0
    %1639 = vmatpush1.bf16.msra.mxu0 0
    %1640 = vmatprep.subr.bf16.mxu0 0
    %1641 = vmatpush1.bf16.msra.mxu0 0
    %1642 = vmatprep.subr.bf16.mxu0 0
    %1643 = vmatpush1.bf16.msra.mxu0 0
    %1644 = vmatprep.subr.bf16.mxu0 0
    %1645 = vmatpush1.bf16.msra.mxu0 0
    %1646 = vmatprep.subr.bf16.mxu0 0
    %1647 = vmatpush1.bf16.msra.mxu0 0
    %1648 = vmatprep.mubr.bf16.mxu0 0
    %1649 = vmatmul.mubr.bf16.gmra.mrb[0].mxu0 %v1614
    %v1650 = vpop.f32.mrb[0].mxu0
    %v1651 = vadd.f32 0.0, %v1650
    %v1652 = vpop.f32.mrb[0].mxu0
    %v1653 = vpop.f32.mrb[0].mxu0
    %v1654 = vpop.f32.mrb[0].mxu0
    %1655 = vdwg.mxu0
    %v1656 = vpack.c.bf16 %v1651, %v1651
    %v1658 = vsel %vm109, %v1656, 0
    %1660 = vmatprep.subr.bf16.mxu0 0
    %1661 = vmatpush1.bf16.msra.mxu0 %v388
    %1662 = vmatprep.subr.bf16.mxu0 0
    %1663 = vmatpush1.bf16.msra.mxu0 %v389
    %1664 = vmatprep.subr.bf16.mxu0 0
    %1665 = vmatpush1.bf16.msra.mxu0 0
    %1666 = vmatprep.subr.bf16.mxu0 0
    %1667 = vmatpush1.bf16.msra.mxu0 0
    %1668 = vmatprep.subr.bf16.mxu0 0
    %1669 = vmatpush1.bf16.msra.mxu0 0
    %1670 = vmatprep.subr.bf16.mxu0 0
    %1671 = vmatpush1.bf16.msra.mxu0 0
    %1672 = vmatprep.subr.bf16.mxu0 0
    %1673 = vmatpush1.bf16.msra.mxu0 0
    %1674 = vmatprep.subr.bf16.mxu0 0
    %1675 = vmatpush1.bf16.msra.mxu0 0
    %1676 = vmatprep.subr.bf16.mxu0 0
    %1677 = vmatpush1.bf16.msra.mxu0 0
    %1678 = vmatprep.subr.bf16.mxu0 0
    %1679 = vmatpush1.bf16.msra.mxu0 0
    %1680 = vmatprep.subr.bf16.mxu0 0
    %1681 = vmatpush1.bf16.msra.mxu0 0
    %1682 = vmatprep.subr.bf16.mxu0 0
    %1683 = vmatpush1.bf16.msra.mxu0 0
    %1684 = vmatprep.subr.bf16.mxu0 0
    %1685 = vmatpush1.bf16.msra.mxu0 0
    %1686 = vmatprep.subr.bf16.mxu0 0
    %1687 = vmatpush1.bf16.msra.mxu0 0
    %1688 = vmatprep.subr.bf16.mxu0 0
    %1689 = vmatpush1.bf16.msra.mxu0 0
    %1690 = vmatprep.subr.bf16.mxu0 0
    %1691 = vmatpush1.bf16.msra.mxu0 0
    %1692 = vmatprep.mubr.bf16.mxu0 0
    %1693 = vmatmul.mubr.bf16.gmra.mrb[0].mxu0 %v1658
    %v1694 = vpop.f32.mrb[0].mxu0
    %v1695 = vadd.f32 0.0, %v1694
    %v1696 = vpop.f32.mrb[0].mxu0
    %v1697 = vpop.f32.mrb[0].mxu0
    %v1698 = vpop.f32.mrb[0].mxu0
    %1699 = vdwg.mxu0
    %v1700 = vadd.f32 %v1595, %v1695
    %v1701 = vtanh.pop %v1700
    %v1702 = vmul.f32 %v1701, 10.0
    %v1703 = vmul.f32 %v1702, 1.442695
    %v1704 = vpow.pop %v1703
    %v1705 = vsel %vm440, %v1704, 0.0
    %1706 = vadd.xlane.f32.xlu0 %v1705
    %v1707 = vpop.xlane.xlu0 %1706
    %v1708 = vlog2.pop %v1707
    %v1709 = vmul.f32 %v1708, 0.6931472
    %v1710 = vsub.f32 %v1702, %v1709
    %v1711 = vld [vmem:[%s10 + $0x4] sm:$0x1]
    %v1712 = vadd.f32 %v1702, %v1711
    %v1713 = vsel %vm440, %v1712, -inf
    %1714 = vmax.xlane.f32.xlu0 %v1713
    %v1715 = vpop.xlane.xlu0 %1714
    %vm1716 = vcmp.ge.f32.partialorder %v1712, %v1715
    %v1717 = vsel %vm1716, %v155, 4
    %v1718 = vsel %vm440, %v1717, 2147483647
    %v1719 = vand.u32 %v1718, 65535
    %v1720 = vshra.s32 %v1718, 16
    %v1721 = vcvt.s32.f32 %v1719
    %v1722 = vcvt.s32.f32 %v1720
    %1723 = vmin.xlane.f32.xlu0 %v1722
    %v1724 = vpop.xlane.xlu0 %1723
    %vm1725 = vcmp.eq.f32.partialorder %v1722, %v1724
    %v1726 = vsel %vm1725, %v1721, inf
    %1727 = vmin.xlane.f32.xlu0 %v1726
    %v1728 = vpop.xlane.xlu0 %1727
    %v1729 = vcvt.f32.s32 %v1728
    %v1730 = vcvt.f32.s32 %v1724
    %v1731 = vshll.u32 %v1730, 16
    %v1732 = vadd.s32 %v1731, %v1729
    %v1733 = vrot.slane %v1732, 4
    %vm1734 = vcmp.lt.s32.totalorder %v1732, %v1733
    %v1735 = vsel %vm1734, %v1732, %v1733
    %v1736 = vrot.slane %v1735, 2
    %vm1737 = vcmp.lt.s32.totalorder %v1735, %v1736
    %v1738 = vsel %vm1737, %v1735, %v1736
    %v1739 = vrot.slane %v1738, 1
    %vm1740 = vcmp.lt.s32.totalorder %v1738, %v1739
    %v1741 = vsel %vm1740, %v1738, %v1739
    %s1742 = vtos %v1741
    %v1743 = vstv %s1742
    %vm1744 = vcmp.eq.s32.totalorder %v155, %v1743
    %v1745 = vsel %vm1744, %v1710, 0.0
    %v1746 = vsel %vm440, %v1745, 0.0
    %1747 = vadd.xlane.f32.xlu0 %v1746
    %v1748 = vpop.xlane.xlu0 %1747
    %v1749 = vrot.slane %v1748, 4
    %v1750 = vadd.f32 %v1748, %v1749
    %v1751 = vrot.slane %v1750, 2
    %v1752 = vadd.f32 %v1750, %v1751
    %v1753 = vrot.slane %v1752, 1
    %v1754 = vadd.f32 %v1752, %v1753
    %s1755 = vtos %v1754
    %vm1756 = vcmp.eq.s32.totalorder %v155, 4
    %s1757 = sld [smem:[#allocation8 + %s1742]]
    %v1758 = vld [vmem:[#allocation4] sm:$0x1]
    %v1759 = vstv %s1757
    %v1760 = vsel %vm1756, %v1759, %v1758
    %1761 = vst.msk [vmem:[#allocation4] sm:$0x1] %vm71, %v1760
    %s1762 = scalar_lea.smem [#allocation10], 4
    %1763 = sst [smem:[%s1762]] %s1742
    %s1764 = scalar_lea.smem [#allocation11], 4
    %1765 = sst [smem:[%s1764]] %s1755
    %v1766 = vld [vmem:[%s9 + $0x5] sm:$0x1]
    %vm1767 = vcmp.gt.f32.partialorder %v1766, 0.0
    %v1768 = vld [vmem:[#allocation4] sm:$0x1]
    %v1769 = vsel %vm1767, %v1768, -inf
    %s1770 = sld [smem:[#allocation5 + $0x5]]
    %p1771 = scmp.gt.s32.totalorder %s1770, 0
    %v1772 = vsel %vm71, %v1769, -inf
    %1773 = vmax.xlane.f32.xlu0 %v1772
    %v1774 = vpop.xlane.xlu0 %1773
    %v1775 = vrot.slane %v1774, 4
    %v1776 = vmax.f32 %v1774, %v1775
    %v1777 = vrot.slane %v1776, 2
    %v1778 = vmax.f32 %v1776, %v1777
    %v1779 = vrot.slane %v1778, 1
    %v1780 = vmax.f32 %v1778, %v1779
    %s1781 = vtos %v1780
    %s1782 = scalar_select %p1771, %s1781, 0.0
    %v1783 = vld [vmem:[%s2 + $0x5] sm:$0x1]
    %v1784 = vstv %s1782
    %v1785 = vmul.f32 %v1784, %v86
    %v1786 = vadd.f32 %v1783, %v1785
    %v1787 = vld [vmem:[#allocation3] sm:$0x1]
    %v1788 = vadd.f32 %v1786, %v1787
    %v1789 = vxor.u32 %v1788, 2147483648
    %v1790 = vmul.f32 %v1789, 1.442695
    %v1791 = vpow.pop %v1790
    %v1792 = vadd.f32 %v1791, 1.0
    %v1793 = vrcp.pop %v1792
    %v1794 = vmul.f32 1.0, %v1793
    %v1795 = vmul.f32 %v1794, 2.0
    %v1796 = vsub.f32 %v1795, 1.0
    %v1797 = vld [vmem:[#allocation2] sm:$0x1]
    %v1799 = vlaneseq
    %v1800 = vshrl.u32 %v1799, 7
    %v1801 = vsub.s32 0, %v1800
    %v1802 = vrot.slane %v1797, %v1801
    %1803 = vrot.lane.b32.xlu0 %v1802, 32
    %v1804 = vpop.permute.xlu0 %1803
    %v1806 = vmul.f32 %v1794, %v1804
    %1808 = vrot.lane.b32.xlu0 %v1796, 64
    %v1809 = vpop.permute.xlu0 %1808
    %v1811 = vmul.f32 %v1794, %v1809
    %1813 = vrot.lane.b32.xlu0 %v1811, 32
    %v1814 = vpop.permute.xlu0 %1813
    %v1816 = vadd.f32 %v1806, %v1814
    %v1817 = vtanh.pop %v1816
    %1819 = vrot.lane.b32.xlu0 %v1817, 64
    %v1820 = vpop.permute.xlu0 %1819
    %v1822 = vmul.f32 %v1794, %v1820
    %1824 = vrot.lane.b32.xlu0 %v1816, 96
    %v1825 = vpop.permute.xlu0 %1824
    %1827 = vst.msk [vmem:[#allocation2] sm:$0x1] %vm69, %v1825
    %v1828 = vpack.c.bf16 %v1822, %v1822
    %1830 = vrot.lane.b32.xlu0 %v1828, 32
    %v1831 = vpop.permute.xlu0 %1830
    %v1833 = vsel %vm109, %v1831, 0
    %1835 = vmatprep.subr.bf16.mxu0 %v102
    %1836 = vmatpush1.bf16.msra.mxu0 %v101
    %1837 = vmatprep.subr.bf16.mxu0 %v104
    %1838 = vmatpush1.bf16.msra.mxu0 %v103
    %1839 = vmatprep.subr.bf16.mxu0 0
    %1840 = vmatpush1.bf16.msra.mxu0 0
    %1841 = vmatprep.subr.bf16.mxu0 0
    %1842 = vmatpush1.bf16.msra.mxu0 0
    %1843 = vmatprep.subr.bf16.mxu0 0
    %1844 = vmatpush1.bf16.msra.mxu0 0
    %1845 = vmatprep.subr.bf16.mxu0 0
    %1846 = vmatpush1.bf16.msra.mxu0 0
    %1847 = vmatprep.subr.bf16.mxu0 0
    %1848 = vmatpush1.bf16.msra.mxu0 0
    %1849 = vmatprep.subr.bf16.mxu0 0
    %1850 = vmatpush1.bf16.msra.mxu0 0
    %1851 = vmatprep.subr.bf16.mxu0 0
    %1852 = vmatpush1.bf16.msra.mxu0 0
    %1853 = vmatprep.subr.bf16.mxu0 0
    %1854 = vmatpush1.bf16.msra.mxu0 0
    %1855 = vmatprep.subr.bf16.mxu0 0
    %1856 = vmatpush1.bf16.msra.mxu0 0
    %1857 = vmatprep.subr.bf16.mxu0 0
    %1858 = vmatpush1.bf16.msra.mxu0 0
    %1859 = vmatprep.subr.bf16.mxu0 0
    %1860 = vmatpush1.bf16.msra.mxu0 0
    %1861 = vmatprep.subr.bf16.mxu0 0
    %1862 = vmatpush1.bf16.msra.mxu0 0
    %1863 = vmatprep.subr.bf16.mxu0 0
    %1864 = vmatpush1.bf16.msra.mxu0 0
    %1865 = vmatprep.subr.bf16.mxu0 0
    %1866 = vmatpush1.bf16.msra.mxu0 0
    %1867 = vmatprep.mubr.bf16.mxu0 0
    %1868 = vmatmul.mubr.bf16.gmra.mrb[0].mxu0 %v1833
    %v1869 = vpop.f32.mrb[0].mxu0
    %v1870 = vadd.f32 0.0, %v1869
    %v1871 = vpop.f32.mrb[0].mxu0
    %v1872 = vadd.f32 0.0, %v1871
    %v1873 = vpop.f32.mrb[0].mxu0
    %v1874 = vpop.f32.mrb[0].mxu0
    %1875 = vdwg.mxu0
    %1876 = vmatprep.subr.bf16.mxu0 0
    %1877 = vmatpush1.bf16.msra.mxu0 %v230
    %1878 = vmatprep.subr.bf16.mxu0 0
    %1879 = vmatpush1.bf16.msra.mxu0 %v231
    %1880 = vmatprep.subr.bf16.mxu0 0
    %1881 = vmatpush1.bf16.msra.mxu0 0
    %1882 = vmatprep.subr.bf16.mxu0 0
    %1883 = vmatpush1.bf16.msra.mxu0 0
    %1884 = vmatprep.subr.bf16.mxu0 0
    %1885 = vmatpush1.bf16.msra.mxu0 0
    %1886 = vmatprep.subr.bf16.mxu0 0
    %1887 = vmatpush1.bf16.msra.mxu0 0
    %1888 = vmatprep.subr.bf16.mxu0 0
    %1889 = vmatpush1.bf16.msra.mxu0 0
    %1890 = vmatprep.subr.bf16.mxu0 0
    %1891 = vmatpush1.bf16.msra.mxu0 0
    %1892 = vmatprep.subr.bf16.mxu0 0
    %1893 = vmatpush1.bf16.msra.mxu0 0
    %1894 = vmatprep.subr.bf16.mxu0 0
    %1895 = vmatpush1.bf16.msra.mxu0 0
    %1896 = vmatprep.subr.bf16.mxu0 0
    %1897 = vmatpush1.bf16.msra.mxu0 0
    %1898 = vmatprep.subr.bf16.mxu0 0
    %1899 = vmatpush1.bf16.msra.mxu0 0
    %1900 = vmatprep.subr.bf16.mxu0 0
    %1901 = vmatpush1.bf16.msra.mxu0 0
    %1902 = vmatprep.subr.bf16.mxu0 0
    %1903 = vmatpush1.bf16.msra.mxu0 0
    %1904 = vmatprep.subr.bf16.mxu0 0
    %1905 = vmatpush1.bf16.msra.mxu0 0
    %1906 = vmatprep.subr.bf16.mxu0 0
    %1907 = vmatpush1.bf16.msra.mxu0 0
    %1908 = vmatprep.mubr.bf16.mxu0 0
    %1909 = vmatmul.mubr.bf16.gmra.mrb[0].mxu0 %v1833
    %v1910 = vpop.f32.mrb[0].mxu0
    %v1911 = vadd.f32 0.0, %v1910
    %v1912 = vpop.f32.mrb[0].mxu0
    %v1913 = vpop.f32.mrb[0].mxu0
    %v1914 = vpop.f32.mrb[0].mxu0
    %1915 = vdwg.mxu0
    %1916 = vst [vmem:[#allocation3] sm:$0x1] %v1870
    %v1917 = vsel %vm71, %v1872, -inf
    %1918 = vmax.xlane.f32.xlu0 %v1917
    %v1919 = vpop.xlane.xlu0 %1918
    %v1920 = vsub.f32 %v1872, %v1919
    %v1921 = vmul.f32 %v1920, 1.442695
    %v1922 = vpow.pop %v1921
    %v1923 = vsel %vm71, %v1922, 0.0
    %1924 = vadd.xlane.f32.xlu0 %v1923
    %v1925 = vpop.xlane.xlu0 %1924
    %v1926 = vrcp.pop %v1925
    %v1927 = vmul.f32 %v1922, %v1926
    %v1928 = vpack.c.bf16 %v1927, %v1927
    %v1930 = vsel %vm331, %v1928, 0
    %1932 = vmatprep.subr.bf16.mxu0 0
    %1933 = vmatpush1.bf16.msra.mxu0 %v337
    %1934 = vmatprep.subr.bf16.mxu0 0
    %1935 = vmatpush1.bf16.msra.mxu0 0
    %1936 = vmatprep.subr.bf16.mxu0 0
    %1937 = vmatpush1.bf16.msra.mxu0 0
    %1938 = vmatprep.subr.bf16.mxu0 0
    %1939 = vmatpush1.bf16.msra.mxu0 0
    %1940 = vmatprep.subr.bf16.mxu0 0
    %1941 = vmatpush1.bf16.msra.mxu0 0
    %1942 = vmatprep.subr.bf16.mxu0 0
    %1943 = vmatpush1.bf16.msra.mxu0 0
    %1944 = vmatprep.subr.bf16.mxu0 0
    %1945 = vmatpush1.bf16.msra.mxu0 0
    %1946 = vmatprep.subr.bf16.mxu0 0
    %1947 = vmatpush1.bf16.msra.mxu0 0
    %1948 = vmatprep.subr.bf16.mxu0 0
    %1949 = vmatpush1.bf16.msra.mxu0 0
    %1950 = vmatprep.subr.bf16.mxu0 0
    %1951 = vmatpush1.bf16.msra.mxu0 0
    %1952 = vmatprep.subr.bf16.mxu0 0
    %1953 = vmatpush1.bf16.msra.mxu0 0
    %1954 = vmatprep.subr.bf16.mxu0 0
    %1955 = vmatpush1.bf16.msra.mxu0 0
    %1956 = vmatprep.subr.bf16.mxu0 0
    %1957 = vmatpush1.bf16.msra.mxu0 0
    %1958 = vmatprep.subr.bf16.mxu0 0
    %1959 = vmatpush1.bf16.msra.mxu0 0
    %1960 = vmatprep.subr.bf16.mxu0 0
    %1961 = vmatpush1.bf16.msra.mxu0 0
    %1962 = vmatprep.subr.bf16.mxu0 0
    %1963 = vmatpush1.bf16.msra.mxu0 0
    %1964 = vmatprep.mubr.bf16.mxu0 0
    %1965 = vmatmul.mubr.bf16.gmra.mrb[0].mxu0 %v1930
    %v1966 = vpop.f32.mrb[0].mxu0
    %v1967 = vadd.f32 0.0, %v1966
    %v1968 = vpop.f32.mrb[0].mxu0
    %v1969 = vpop.f32.mrb[0].mxu0
    %v1970 = vpop.f32.mrb[0].mxu0
    %1971 = vdwg.mxu0
    %v1972 = vpack.c.bf16 %v1967, %v1967
    %v1974 = vsel %vm109, %v1972, 0
    %1976 = vmatprep.subr.bf16.mxu0 0
    %1977 = vmatpush1.bf16.msra.mxu0 %v388
    %1978 = vmatprep.subr.bf16.mxu0 0
    %1979 = vmatpush1.bf16.msra.mxu0 %v389
    %1980 = vmatprep.subr.bf16.mxu0 0
    %1981 = vmatpush1.bf16.msra.mxu0 0
    %1982 = vmatprep.subr.bf16.mxu0 0
    %1983 = vmatpush1.bf16.msra.mxu0 0
    %1984 = vmatprep.subr.bf16.mxu0 0
    %1985 = vmatpush1.bf16.msra.mxu0 0
    %1986 = vmatprep.subr.bf16.mxu0 0
    %1987 = vmatpush1.bf16.msra.mxu0 0
    %1988 = vmatprep.subr.bf16.mxu0 0
    %1989 = vmatpush1.bf16.msra.mxu0 0
    %1990 = vmatprep.subr.bf16.mxu0 0
    %1991 = vmatpush1.bf16.msra.mxu0 0
    %1992 = vmatprep.subr.bf16.mxu0 0
    %1993 = vmatpush1.bf16.msra.mxu0 0
    %1994 = vmatprep.subr.bf16.mxu0 0
    %1995 = vmatpush1.bf16.msra.mxu0 0
    %1996 = vmatprep.subr.bf16.mxu0 0
    %1997 = vmatpush1.bf16.msra.mxu0 0
    %1998 = vmatprep.subr.bf16.mxu0 0
    %1999 = vmatpush1.bf16.msra.mxu0 0
    %2000 = vmatprep.subr.bf16.mxu0 0
    %2001 = vmatpush1.bf16.msra.mxu0 0
    %2002 = vmatprep.subr.bf16.mxu0 0
    %2003 = vmatpush1.bf16.msra.mxu0 0
    %2004 = vmatprep.subr.bf16.mxu0 0
    %2005 = vmatpush1.bf16.msra.mxu0 0
    %2006 = vmatprep.subr.bf16.mxu0 0
    %2007 = vmatpush1.bf16.msra.mxu0 0
    %2008 = vmatprep.mubr.bf16.mxu0 0
    %2009 = vmatmul.mubr.bf16.gmra.mrb[0].mxu0 %v1974
    %v2010 = vpop.f32.mrb[0].mxu0
    %v2011 = vadd.f32 0.0, %v2010
    %v2012 = vpop.f32.mrb[0].mxu0
    %v2013 = vpop.f32.mrb[0].mxu0
    %v2014 = vpop.f32.mrb[0].mxu0
    %2015 = vdwg.mxu0
    %v2016 = vadd.f32 %v1911, %v2011
    %v2017 = vtanh.pop %v2016
    %v2018 = vmul.f32 %v2017, 10.0
    %v2019 = vmul.f32 %v2018, 1.442695
    %v2020 = vpow.pop %v2019
    %v2021 = vsel %vm440, %v2020, 0.0
    %2022 = vadd.xlane.f32.xlu0 %v2021
    %v2023 = vpop.xlane.xlu0 %2022
    %v2024 = vlog2.pop %v2023
    %v2025 = vmul.f32 %v2024, 0.6931472
    %v2026 = vsub.f32 %v2018, %v2025
    %v2027 = vld [vmem:[%s10 + $0x5] sm:$0x1]
    %v2028 = vadd.f32 %v2018, %v2027
    %v2029 = vsel %vm440, %v2028, -inf
    %2030 = vmax.xlane.f32.xlu0 %v2029
    %v2031 = vpop.xlane.xlu0 %2030
    %vm2032 = vcmp.ge.f32.partialorder %v2028, %v2031
    %v2033 = vsel %vm2032, %v155, 4
    %v2034 = vsel %vm440, %v2033, 2147483647
    %v2035 = vand.u32 %v2034, 65535
    %v2036 = vshra.s32 %v2034, 16
    %v2037 = vcvt.s32.f32 %v2035
    %v2038 = vcvt.s32.f32 %v2036
    %2039 = vmin.xlane.f32.xlu0 %v2038
    %v2040 = vpop.xlane.xlu0 %2039
    %vm2041 = vcmp.eq.f32.partialorder %v2038, %v2040
    %v2042 = vsel %vm2041, %v2037, inf
    %2043 = vmin.xlane.f32.xlu0 %v2042
    %v2044 = vpop.xlane.xlu0 %2043
    %v2045 = vcvt.f32.s32 %v2044
    %v2046 = vcvt.f32.s32 %v2040
    %v2047 = vshll.u32 %v2046, 16
    %v2048 = vadd.s32 %v2047, %v2045
    %v2049 = vrot.slane %v2048, 4
    %vm2050 = vcmp.lt.s32.totalorder %v2048, %v2049
    %v2051 = vsel %vm2050, %v2048, %v2049
    %v2052 = vrot.slane %v2051, 2
    %vm2053 = vcmp.lt.s32.totalorder %v2051, %v2052
    %v2054 = vsel %vm2053, %v2051, %v2052
    %v2055 = vrot.slane %v2054, 1
    %vm2056 = vcmp.lt.s32.totalorder %v2054, %v2055
    %v2057 = vsel %vm2056, %v2054, %v2055
    %s2058 = vtos %v2057
    %v2059 = vstv %s2058
    %vm2060 = vcmp.eq.s32.totalorder %v155, %v2059
    %v2061 = vsel %vm2060, %v2026, 0.0
    %v2062 = vsel %vm440, %v2061, 0.0
    %2063 = vadd.xlane.f32.xlu0 %v2062
    %v2064 = vpop.xlane.xlu0 %2063
    %v2065 = vrot.slane %v2064, 4
    %v2066 = vadd.f32 %v2064, %v2065
    %v2067 = vrot.slane %v2066, 2
    %v2068 = vadd.f32 %v2066, %v2067
    %v2069 = vrot.slane %v2068, 1
    %v2070 = vadd.f32 %v2068, %v2069
    %s2071 = vtos %v2070
    %vm2072 = vcmp.eq.s32.totalorder %v155, 5
    %s2073 = sld [smem:[#allocation8 + %s2058]]
    %v2074 = vld [vmem:[#allocation4] sm:$0x1]
    %v2075 = vstv %s2073
    %v2076 = vsel %vm2072, %v2075, %v2074
    %2077 = vst.msk [vmem:[#allocation4] sm:$0x1] %vm71, %v2076
    %s2078 = scalar_lea.smem [#allocation10], 5
    %2079 = sst [smem:[%s2078]] %s2058
    %s2080 = scalar_lea.smem [#allocation11], 5
    %2081 = sst [smem:[%s2080]] %s2071
    %v2082 = vld [vmem:[%s9 + $0x6] sm:$0x1]
    %vm2083 = vcmp.gt.f32.partialorder %v2082, 0.0
    %v2084 = vld [vmem:[#allocation4] sm:$0x1]
    %v2085 = vsel %vm2083, %v2084, -inf
    %s2086 = sld [smem:[#allocation5 + $0x6]]
    %p2087 = scmp.gt.s32.totalorder %s2086, 0
    %v2088 = vsel %vm71, %v2085, -inf
    %2089 = vmax.xlane.f32.xlu0 %v2088
    %v2090 = vpop.xlane.xlu0 %2089
    %v2091 = vrot.slane %v2090, 4
    %v2092 = vmax.f32 %v2090, %v2091
    %v2093 = vrot.slane %v2092, 2
    %v2094 = vmax.f32 %v2092, %v2093
    %v2095 = vrot.slane %v2094, 1
    %v2096 = vmax.f32 %v2094, %v2095
    %s2097 = vtos %v2096
    %s2098 = scalar_select %p2087, %s2097, 0.0
    %v2099 = vld [vmem:[%s2 + $0x6] sm:$0x1]
    %v2100 = vstv %s2098
    %v2101 = vmul.f32 %v2100, %v86
    %v2102 = vadd.f32 %v2099, %v2101
    %v2103 = vld [vmem:[#allocation3] sm:$0x1]
    %v2104 = vadd.f32 %v2102, %v2103
    %v2105 = vxor.u32 %v2104, 2147483648
    %v2106 = vmul.f32 %v2105, 1.442695
    %v2107 = vpow.pop %v2106
    %v2108 = vadd.f32 %v2107, 1.0
    %v2109 = vrcp.pop %v2108
    %v2110 = vmul.f32 1.0, %v2109
    %v2111 = vmul.f32 %v2110, 2.0
    %v2112 = vsub.f32 %v2111, 1.0
    %v2113 = vld [vmem:[#allocation2] sm:$0x1]
    %v2115 = vlaneseq
    %v2116 = vshrl.u32 %v2115, 7
    %v2117 = vsub.s32 0, %v2116
    %v2118 = vrot.slane %v2113, %v2117
    %2119 = vrot.lane.b32.xlu0 %v2118, 32
    %v2120 = vpop.permute.xlu0 %2119
    %v2122 = vmul.f32 %v2110, %v2120
    %2124 = vrot.lane.b32.xlu0 %v2112, 64
    %v2125 = vpop.permute.xlu0 %2124
    %v2127 = vmul.f32 %v2110, %v2125
    %2129 = vrot.lane.b32.xlu0 %v2127, 32
    %v2130 = vpop.permute.xlu0 %2129
    %v2132 = vadd.f32 %v2122, %v2130
    %v2133 = vtanh.pop %v2132
    %2135 = vrot.lane.b32.xlu0 %v2133, 64
    %v2136 = vpop.permute.xlu0 %2135
    %v2138 = vmul.f32 %v2110, %v2136
    %2140 = vrot.lane.b32.xlu0 %v2132, 96
    %v2141 = vpop.permute.xlu0 %2140
    %2143 = vst.msk [vmem:[#allocation2] sm:$0x1] %vm69, %v2141
    %v2144 = vpack.c.bf16 %v2138, %v2138
    %2146 = vrot.lane.b32.xlu0 %v2144, 32
    %v2147 = vpop.permute.xlu0 %2146
    %v2149 = vsel %vm109, %v2147, 0
    %2151 = vmatprep.subr.bf16.mxu0 %v102
    %2152 = vmatpush1.bf16.msra.mxu0 %v101
    %2153 = vmatprep.subr.bf16.mxu0 %v104
    %2154 = vmatpush1.bf16.msra.mxu0 %v103
    %2155 = vmatprep.subr.bf16.mxu0 0
    %2156 = vmatpush1.bf16.msra.mxu0 0
    %2157 = vmatprep.subr.bf16.mxu0 0
    %2158 = vmatpush1.bf16.msra.mxu0 0
    %2159 = vmatprep.subr.bf16.mxu0 0
    %2160 = vmatpush1.bf16.msra.mxu0 0
    %2161 = vmatprep.subr.bf16.mxu0 0
    %2162 = vmatpush1.bf16.msra.mxu0 0
    %2163 = vmatprep.subr.bf16.mxu0 0
    %2164 = vmatpush1.bf16.msra.mxu0 0
    %2165 = vmatprep.subr.bf16.mxu0 0
    %2166 = vmatpush1.bf16.msra.mxu0 0
    %2167 = vmatprep.subr.bf16.mxu0 0
    %2168 = vmatpush1.bf16.msra.mxu0 0
    %2169 = vmatprep.subr.bf16.mxu0 0
    %2170 = vmatpush1.bf16.msra.mxu0 0
    %2171 = vmatprep.subr.bf16.mxu0 0
    %2172 = vmatpush1.bf16.msra.mxu0 0
    %2173 = vmatprep.subr.bf16.mxu0 0
    %2174 = vmatpush1.bf16.msra.mxu0 0
    %2175 = vmatprep.subr.bf16.mxu0 0
    %2176 = vmatpush1.bf16.msra.mxu0 0
    %2177 = vmatprep.subr.bf16.mxu0 0
    %2178 = vmatpush1.bf16.msra.mxu0 0
    %2179 = vmatprep.subr.bf16.mxu0 0
    %2180 = vmatpush1.bf16.msra.mxu0 0
    %2181 = vmatprep.subr.bf16.mxu0 0
    %2182 = vmatpush1.bf16.msra.mxu0 0
    %2183 = vmatprep.mubr.bf16.mxu0 0
    %2184 = vmatmul.mubr.bf16.gmra.mrb[0].mxu0 %v2149
    %v2185 = vpop.f32.mrb[0].mxu0
    %v2186 = vadd.f32 0.0, %v2185
    %v2187 = vpop.f32.mrb[0].mxu0
    %v2188 = vadd.f32 0.0, %v2187
    %v2189 = vpop.f32.mrb[0].mxu0
    %v2190 = vpop.f32.mrb[0].mxu0
    %2191 = vdwg.mxu0
    %2192 = vmatprep.subr.bf16.mxu0 0
    %2193 = vmatpush1.bf16.msra.mxu0 %v230
    %2194 = vmatprep.subr.bf16.mxu0 0
    %2195 = vmatpush1.bf16.msra.mxu0 %v231
    %2196 = vmatprep.subr.bf16.mxu0 0
    %2197 = vmatpush1.bf16.msra.mxu0 0
    %2198 = vmatprep.subr.bf16.mxu0 0
    %2199 = vmatpush1.bf16.msra.mxu0 0
    %2200 = vmatprep.subr.bf16.mxu0 0
    %2201 = vmatpush1.bf16.msra.mxu0 0
    %2202 = vmatprep.subr.bf16.mxu0 0
    %2203 = vmatpush1.bf16.msra.mxu0 0
    %2204 = vmatprep.subr.bf16.mxu0 0
    %2205 = vmatpush1.bf16.msra.mxu0 0
    %2206 = vmatprep.subr.bf16.mxu0 0
    %2207 = vmatpush1.bf16.msra.mxu0 0
    %2208 = vmatprep.subr.bf16.mxu0 0
    %2209 = vmatpush1.bf16.msra.mxu0 0
    %2210 = vmatprep.subr.bf16.mxu0 0
    %2211 = vmatpush1.bf16.msra.mxu0 0
    %2212 = vmatprep.subr.bf16.mxu0 0
    %2213 = vmatpush1.bf16.msra.mxu0 0
    %2214 = vmatprep.subr.bf16.mxu0 0
    %2215 = vmatpush1.bf16.msra.mxu0 0
    %2216 = vmatprep.subr.bf16.mxu0 0
    %2217 = vmatpush1.bf16.msra.mxu0 0
    %2218 = vmatprep.subr.bf16.mxu0 0
    %2219 = vmatpush1.bf16.msra.mxu0 0
    %2220 = vmatprep.subr.bf16.mxu0 0
    %2221 = vmatpush1.bf16.msra.mxu0 0
    %2222 = vmatprep.subr.bf16.mxu0 0
    %2223 = vmatpush1.bf16.msra.mxu0 0
    %2224 = vmatprep.mubr.bf16.mxu0 0
    %2225 = vmatmul.mubr.bf16.gmra.mrb[0].mxu0 %v2149
    %v2226 = vpop.f32.mrb[0].mxu0
    %v2227 = vadd.f32 0.0, %v2226
    %v2228 = vpop.f32.mrb[0].mxu0
    %v2229 = vpop.f32.mrb[0].mxu0
    %v2230 = vpop.f32.mrb[0].mxu0
    %2231 = vdwg.mxu0
    %2232 = vst [vmem:[#allocation3] sm:$0x1] %v2186
    %v2233 = vsel %vm71, %v2188, -inf
    %2234 = vmax.xlane.f32.xlu0 %v2233
    %v2235 = vpop.xlane.xlu0 %2234
    %v2236 = vsub.f32 %v2188, %v2235
    %v2237 = vmul.f32 %v2236, 1.442695
    %v2238 = vpow.pop %v2237
    %v2239 = vsel %vm71, %v2238, 0.0
    %2240 = vadd.xlane.f32.xlu0 %v2239
    %v2241 = vpop.xlane.xlu0 %2240
    %v2242 = vrcp.pop %v2241
    %v2243 = vmul.f32 %v2238, %v2242
    %v2244 = vpack.c.bf16 %v2243, %v2243
    %v2246 = vsel %vm331, %v2244, 0
    %2248 = vmatprep.subr.bf16.mxu0 0
    %2249 = vmatpush1.bf16.msra.mxu0 %v337
    %2250 = vmatprep.subr.bf16.mxu0 0
    %2251 = vmatpush1.bf16.msra.mxu0 0
    %2252 = vmatprep.subr.bf16.mxu0 0
    %2253 = vmatpush1.bf16.msra.mxu0 0
    %2254 = vmatprep.subr.bf16.mxu0 0
    %2255 = vmatpush1.bf16.msra.mxu0 0
    %2256 = vmatprep.subr.bf16.mxu0 0
    %2257 = vmatpush1.bf16.msra.mxu0 0
    %2258 = vmatprep.subr.bf16.mxu0 0
    %2259 = vmatpush1.bf16.msra.mxu0 0
    %2260 = vmatprep.subr.bf16.mxu0 0
    %2261 = vmatpush1.bf16.msra.mxu0 0
    %2262 = vmatprep.subr.bf16.mxu0 0
    %2263 = vmatpush1.bf16.msra.mxu0 0
    %2264 = vmatprep.subr.bf16.mxu0 0
    %2265 = vmatpush1.bf16.msra.mxu0 0
    %2266 = vmatprep.subr.bf16.mxu0 0
    %2267 = vmatpush1.bf16.msra.mxu0 0
    %2268 = vmatprep.subr.bf16.mxu0 0
    %2269 = vmatpush1.bf16.msra.mxu0 0
    %2270 = vmatprep.subr.bf16.mxu0 0
    %2271 = vmatpush1.bf16.msra.mxu0 0
    %2272 = vmatprep.subr.bf16.mxu0 0
    %2273 = vmatpush1.bf16.msra.mxu0 0
    %2274 = vmatprep.subr.bf16.mxu0 0
    %2275 = vmatpush1.bf16.msra.mxu0 0
    %2276 = vmatprep.subr.bf16.mxu0 0
    %2277 = vmatpush1.bf16.msra.mxu0 0
    %2278 = vmatprep.subr.bf16.mxu0 0
    %2279 = vmatpush1.bf16.msra.mxu0 0
    %2280 = vmatprep.mubr.bf16.mxu0 0
    %2281 = vmatmul.mubr.bf16.gmra.mrb[0].mxu0 %v2246
    %v2282 = vpop.f32.mrb[0].mxu0
    %v2283 = vadd.f32 0.0, %v2282
    %v2284 = vpop.f32.mrb[0].mxu0
    %v2285 = vpop.f32.mrb[0].mxu0
    %v2286 = vpop.f32.mrb[0].mxu0
    %2287 = vdwg.mxu0
    %v2288 = vpack.c.bf16 %v2283, %v2283
    %v2290 = vsel %vm109, %v2288, 0
    %2292 = vmatprep.subr.bf16.mxu0 0
    %2293 = vmatpush1.bf16.msra.mxu0 %v388
    %2294 = vmatprep.subr.bf16.mxu0 0
    %2295 = vmatpush1.bf16.msra.mxu0 %v389
    %2296 = vmatprep.subr.bf16.mxu0 0
    %2297 = vmatpush1.bf16.msra.mxu0 0
    %2298 = vmatprep.subr.bf16.mxu0 0
    %2299 = vmatpush1.bf16.msra.mxu0 0
    %2300 = vmatprep.subr.bf16.mxu0 0
    %2301 = vmatpush1.bf16.msra.mxu0 0
    %2302 = vmatprep.subr.bf16.mxu0 0
    %2303 = vmatpush1.bf16.msra.mxu0 0
    %2304 = vmatprep.subr.bf16.mxu0 0
    %2305 = vmatpush1.bf16.msra.mxu0 0
    %2306 = vmatprep.subr.bf16.mxu0 0
    %2307 = vmatpush1.bf16.msra.mxu0 0
    %2308 = vmatprep.subr.bf16.mxu0 0
    %2309 = vmatpush1.bf16.msra.mxu0 0
    %2310 = vmatprep.subr.bf16.mxu0 0
    %2311 = vmatpush1.bf16.msra.mxu0 0
    %2312 = vmatprep.subr.bf16.mxu0 0
    %2313 = vmatpush1.bf16.msra.mxu0 0
    %2314 = vmatprep.subr.bf16.mxu0 0
    %2315 = vmatpush1.bf16.msra.mxu0 0
    %2316 = vmatprep.subr.bf16.mxu0 0
    %2317 = vmatpush1.bf16.msra.mxu0 0
    %2318 = vmatprep.subr.bf16.mxu0 0
    %2319 = vmatpush1.bf16.msra.mxu0 0
    %2320 = vmatprep.subr.bf16.mxu0 0
    %2321 = vmatpush1.bf16.msra.mxu0 0
    %2322 = vmatprep.subr.bf16.mxu0 0
    %2323 = vmatpush1.bf16.msra.mxu0 0
    %2324 = vmatprep.mubr.bf16.mxu0 0
    %2325 = vmatmul.mubr.bf16.gmra.mrb[0].mxu0 %v2290
    %v2326 = vpop.f32.mrb[0].mxu0
    %v2327 = vadd.f32 0.0, %v2326
    %v2328 = vpop.f32.mrb[0].mxu0
    %v2329 = vpop.f32.mrb[0].mxu0
    %v2330 = vpop.f32.mrb[0].mxu0
    %2331 = vdwg.mxu0
    %v2332 = vadd.f32 %v2227, %v2327
    %v2333 = vtanh.pop %v2332
    %v2334 = vmul.f32 %v2333, 10.0
    %v2335 = vmul.f32 %v2334, 1.442695
    %v2336 = vpow.pop %v2335
    %v2337 = vsel %vm440, %v2336, 0.0
    %2338 = vadd.xlane.f32.xlu0 %v2337
    %v2339 = vpop.xlane.xlu0 %2338
    %v2340 = vlog2.pop %v2339
    %v2341 = vmul.f32 %v2340, 0.6931472
    %v2342 = vsub.f32 %v2334, %v2341
    %v2343 = vld [vmem:[%s10 + $0x6] sm:$0x1]
    %v2344 = vadd.f32 %v2334, %v2343
    %v2345 = vsel %vm440, %v2344, -inf
    %2346 = vmax.xlane.f32.xlu0 %v2345
    %v2347 = vpop.xlane.xlu0 %2346
    %vm2348 = vcmp.ge.f32.partialorder %v2344, %v2347
    %v2349 = vsel %vm2348, %v155, 4
    %v2350 = vsel %vm440, %v2349, 2147483647
    %v2351 = vand.u32 %v2350, 65535
    %v2352 = vshra.s32 %v2350, 16
    %v2353 = vcvt.s32.f32 %v2351
    %v2354 = vcvt.s32.f32 %v2352
    %2355 = vmin.xlane.f32.xlu0 %v2354
    %v2356 = vpop.xlane.xlu0 %2355
    %vm2357 = vcmp.eq.f32.partialorder %v2354, %v2356
    %v2358 = vsel %vm2357, %v2353, inf
    %2359 = vmin.xlane.f32.xlu0 %v2358
    %v2360 = vpop.xlane.xlu0 %2359
    %v2361 = vcvt.f32.s32 %v2360
    %v2362 = vcvt.f32.s32 %v2356
    %v2363 = vshll.u32 %v2362, 16
    %v2364 = vadd.s32 %v2363, %v2361
    %v2365 = vrot.slane %v2364, 4
    %vm2366 = vcmp.lt.s32.totalorder %v2364, %v2365
    %v2367 = vsel %vm2366, %v2364, %v2365
    %v2368 = vrot.slane %v2367, 2
    %vm2369 = vcmp.lt.s32.totalorder %v2367, %v2368
    %v2370 = vsel %vm2369, %v2367, %v2368
    %v2371 = vrot.slane %v2370, 1
    %vm2372 = vcmp.lt.s32.totalorder %v2370, %v2371
    %v2373 = vsel %vm2372, %v2370, %v2371
    %s2374 = vtos %v2373
    %v2375 = vstv %s2374
    %vm2376 = vcmp.eq.s32.totalorder %v155, %v2375
    %v2377 = vsel %vm2376, %v2342, 0.0
    %v2378 = vsel %vm440, %v2377, 0.0
    %2379 = vadd.xlane.f32.xlu0 %v2378
    %v2380 = vpop.xlane.xlu0 %2379
    %v2381 = vrot.slane %v2380, 4
    %v2382 = vadd.f32 %v2380, %v2381
    %v2383 = vrot.slane %v2382, 2
    %v2384 = vadd.f32 %v2382, %v2383
    %v2385 = vrot.slane %v2384, 1
    %v2386 = vadd.f32 %v2384, %v2385
    %s2387 = vtos %v2386
    %vm2388 = vcmp.eq.s32.totalorder %v155, 6
    %s2389 = sld [smem:[#allocation8 + %s2374]]
    %v2390 = vld [vmem:[#allocation4] sm:$0x1]
    %v2391 = vstv %s2389
    %v2392 = vsel %vm2388, %v2391, %v2390
    %2393 = vst.msk [vmem:[#allocation4] sm:$0x1] %vm71, %v2392
    %s2394 = scalar_lea.smem [#allocation10], 6
    %2395 = sst [smem:[%s2394]] %s2374
    %s2396 = scalar_lea.smem [#allocation11], 6
    %2397 = sst [smem:[%s2396]] %s2387
    %v2398 = vld [vmem:[%s9 + $0x7] sm:$0x1]
    %vm2399 = vcmp.gt.f32.partialorder %v2398, 0.0
    %v2400 = vld [vmem:[#allocation4] sm:$0x1]
    %v2401 = vsel %vm2399, %v2400, -inf
    %s2402 = sld [smem:[#allocation5 + $0x7]]
    %p2403 = scmp.gt.s32.totalorder %s2402, 0
    %v2404 = vsel %vm71, %v2401, -inf
    %2405 = vmax.xlane.f32.xlu0 %v2404
    %v2406 = vpop.xlane.xlu0 %2405
    %v2407 = vrot.slane %v2406, 4
    %v2408 = vmax.f32 %v2406, %v2407
    %v2409 = vrot.slane %v2408, 2
    %v2410 = vmax.f32 %v2408, %v2409
    %v2411 = vrot.slane %v2410, 1
    %v2412 = vmax.f32 %v2410, %v2411
    %s2413 = vtos %v2412
    %s2414 = scalar_select %p2403, %s2413, 0.0
    %v2415 = vld [vmem:[%s2 + $0x7] sm:$0x1]
    %v2416 = vstv %s2414
    %v2417 = vmul.f32 %v2416, %v86
    %v2418 = vadd.f32 %v2415, %v2417
    %v2419 = vld [vmem:[#allocation3] sm:$0x1]
    %v2420 = vadd.f32 %v2418, %v2419
    %v2421 = vxor.u32 %v2420, 2147483648
    %v2422 = vmul.f32 %v2421, 1.442695
    %v2423 = vpow.pop %v2422
    %v2424 = vadd.f32 %v2423, 1.0
    %v2425 = vrcp.pop %v2424
    %v2426 = vmul.f32 1.0, %v2425
    %v2427 = vmul.f32 %v2426, 2.0
    %v2428 = vsub.f32 %v2427, 1.0
    %v2429 = vld [vmem:[#allocation2] sm:$0x1]
    %v2431 = vlaneseq
    %v2432 = vshrl.u32 %v2431, 7
    %v2433 = vsub.s32 0, %v2432
    %v2434 = vrot.slane %v2429, %v2433
    %2435 = vrot.lane.b32.xlu0 %v2434, 32
    %v2436 = vpop.permute.xlu0 %2435
    %v2438 = vmul.f32 %v2426, %v2436
    %2440 = vrot.lane.b32.xlu0 %v2428, 64
    %v2441 = vpop.permute.xlu0 %2440
    %v2443 = vmul.f32 %v2426, %v2441
    %2445 = vrot.lane.b32.xlu0 %v2443, 32
    %v2446 = vpop.permute.xlu0 %2445
    %v2448 = vadd.f32 %v2438, %v2446
    %v2449 = vtanh.pop %v2448
    %2451 = vrot.lane.b32.xlu0 %v2449, 64
    %v2452 = vpop.permute.xlu0 %2451
    %v2454 = vmul.f32 %v2426, %v2452
    %2456 = vrot.lane.b32.xlu0 %v2448, 96
    %v2457 = vpop.permute.xlu0 %2456
    %2459 = vst.msk [vmem:[#allocation2] sm:$0x1] %vm69, %v2457
    %v2460 = vpack.c.bf16 %v2454, %v2454
    %2462 = vrot.lane.b32.xlu0 %v2460, 32
    %v2463 = vpop.permute.xlu0 %2462
    %v2465 = vsel %vm109, %v2463, 0
    %2467 = vmatprep.subr.bf16.mxu0 %v102
    %2468 = vmatpush1.bf16.msra.mxu0 %v101
    %2469 = vmatprep.subr.bf16.mxu0 %v104
    %2470 = vmatpush1.bf16.msra.mxu0 %v103
    %2471 = vmatprep.subr.bf16.mxu0 0
    %2472 = vmatpush1.bf16.msra.mxu0 0
    %2473 = vmatprep.subr.bf16.mxu0 0
    %2474 = vmatpush1.bf16.msra.mxu0 0
    %2475 = vmatprep.subr.bf16.mxu0 0
    %2476 = vmatpush1.bf16.msra.mxu0 0
    %2477 = vmatprep.subr.bf16.mxu0 0
    %2478 = vmatpush1.bf16.msra.mxu0 0
    %2479 = vmatprep.subr.bf16.mxu0 0
    %2480 = vmatpush1.bf16.msra.mxu0 0
    %2481 = vmatprep.subr.bf16.mxu0 0
    %2482 = vmatpush1.bf16.msra.mxu0 0
    %2483 = vmatprep.subr.bf16.mxu0 0
    %2484 = vmatpush1.bf16.msra.mxu0 0
    %2485 = vmatprep.subr.bf16.mxu0 0
    %2486 = vmatpush1.bf16.msra.mxu0 0
    %2487 = vmatprep.subr.bf16.mxu0 0
    %2488 = vmatpush1.bf16.msra.mxu0 0
    %2489 = vmatprep.subr.bf16.mxu0 0
    %2490 = vmatpush1.bf16.msra.mxu0 0
    %2491 = vmatprep.subr.bf16.mxu0 0
    %2492 = vmatpush1.bf16.msra.mxu0 0
    %2493 = vmatprep.subr.bf16.mxu0 0
    %2494 = vmatpush1.bf16.msra.mxu0 0
    %2495 = vmatprep.subr.bf16.mxu0 0
    %2496 = vmatpush1.bf16.msra.mxu0 0
    %2497 = vmatprep.subr.bf16.mxu0 0
    %2498 = vmatpush1.bf16.msra.mxu0 0
    %2499 = vmatprep.mubr.bf16.mxu0 0
    %2500 = vmatmul.mubr.bf16.gmra.mrb[0].mxu0 %v2465
    %v2501 = vpop.f32.mrb[0].mxu0
    %v2502 = vadd.f32 0.0, %v2501
    %v2503 = vpop.f32.mrb[0].mxu0
    %v2504 = vadd.f32 0.0, %v2503
    %v2505 = vpop.f32.mrb[0].mxu0
    %v2506 = vpop.f32.mrb[0].mxu0
    %2507 = vdwg.mxu0
    %2508 = vmatprep.subr.bf16.mxu0 0
    %2509 = vmatpush1.bf16.msra.mxu0 %v230
    %2510 = vmatprep.subr.bf16.mxu0 0
    %2511 = vmatpush1.bf16.msra.mxu0 %v231
    %2512 = vmatprep.subr.bf16.mxu0 0
    %2513 = vmatpush1.bf16.msra.mxu0 0
    %2514 = vmatprep.subr.bf16.mxu0 0
    %2515 = vmatpush1.bf16.msra.mxu0 0
    %2516 = vmatprep.subr.bf16.mxu0 0
    %2517 = vmatpush1.bf16.msra.mxu0 0
    %2518 = vmatprep.subr.bf16.mxu0 0
    %2519 = vmatpush1.bf16.msra.mxu0 0
    %2520 = vmatprep.subr.bf16.mxu0 0
    %2521 = vmatpush1.bf16.msra.mxu0 0
    %2522 = vmatprep.subr.bf16.mxu0 0
    %2523 = vmatpush1.bf16.msra.mxu0 0
    %2524 = vmatprep.subr.bf16.mxu0 0
    %2525 = vmatpush1.bf16.msra.mxu0 0
    %2526 = vmatprep.subr.bf16.mxu0 0
    %2527 = vmatpush1.bf16.msra.mxu0 0
    %2528 = vmatprep.subr.bf16.mxu0 0
    %2529 = vmatpush1.bf16.msra.mxu0 0
    %2530 = vmatprep.subr.bf16.mxu0 0
    %2531 = vmatpush1.bf16.msra.mxu0 0
    %2532 = vmatprep.subr.bf16.mxu0 0
    %2533 = vmatpush1.bf16.msra.mxu0 0
    %2534 = vmatprep.subr.bf16.mxu0 0
    %2535 = vmatpush1.bf16.msra.mxu0 0
    %2536 = vmatprep.subr.bf16.mxu0 0
    %2537 = vmatpush1.bf16.msra.mxu0 0
    %2538 = vmatprep.subr.bf16.mxu0 0
    %2539 = vmatpush1.bf16.msra.mxu0 0
    %2540 = vmatprep.mubr.bf16.mxu0 0
    %2541 = vmatmul.mubr.bf16.gmra.mrb[0].mxu0 %v2465
    %v2542 = vpop.f32.mrb[0].mxu0
    %v2543 = vadd.f32 0.0, %v2542
    %v2544 = vpop.f32.mrb[0].mxu0
    %v2545 = vpop.f32.mrb[0].mxu0
    %v2546 = vpop.f32.mrb[0].mxu0
    %2547 = vdwg.mxu0
    %2548 = vst [vmem:[#allocation3] sm:$0x1] %v2502
    %v2549 = vsel %vm71, %v2504, -inf
    %2550 = vmax.xlane.f32.xlu0 %v2549
    %v2551 = vpop.xlane.xlu0 %2550
    %v2552 = vsub.f32 %v2504, %v2551
    %v2553 = vmul.f32 %v2552, 1.442695
    %v2554 = vpow.pop %v2553
    %v2555 = vsel %vm71, %v2554, 0.0
    %2556 = vadd.xlane.f32.xlu0 %v2555
    %v2557 = vpop.xlane.xlu0 %2556
    %v2558 = vrcp.pop %v2557
    %v2559 = vmul.f32 %v2554, %v2558
    %v2560 = vpack.c.bf16 %v2559, %v2559
    %v2562 = vsel %vm331, %v2560, 0
    %2564 = vmatprep.subr.bf16.mxu0 0
    %2565 = vmatpush1.bf16.msra.mxu0 %v337
    %2566 = vmatprep.subr.bf16.mxu0 0
    %2567 = vmatpush1.bf16.msra.mxu0 0
    %2568 = vmatprep.subr.bf16.mxu0 0
    %2569 = vmatpush1.bf16.msra.mxu0 0
    %2570 = vmatprep.subr.bf16.mxu0 0
    %2571 = vmatpush1.bf16.msra.mxu0 0
    %2572 = vmatprep.subr.bf16.mxu0 0
    %2573 = vmatpush1.bf16.msra.mxu0 0
    %2574 = vmatprep.subr.bf16.mxu0 0
    %2575 = vmatpush1.bf16.msra.mxu0 0
    %2576 = vmatprep.subr.bf16.mxu0 0
    %2577 = vmatpush1.bf16.msra.mxu0 0
    %2578 = vmatprep.subr.bf16.mxu0 0
    %2579 = vmatpush1.bf16.msra.mxu0 0
    %2580 = vmatprep.subr.bf16.mxu0 0
    %2581 = vmatpush1.bf16.msra.mxu0 0
    %2582 = vmatprep.subr.bf16.mxu0 0
    %2583 = vmatpush1.bf16.msra.mxu0 0
    %2584 = vmatprep.subr.bf16.mxu0 0
    %2585 = vmatpush1.bf16.msra.mxu0 0
    %2586 = vmatprep.subr.bf16.mxu0 0
    %2587 = vmatpush1.bf16.msra.mxu0 0
    %2588 = vmatprep.subr.bf16.mxu0 0
    %2589 = vmatpush1.bf16.msra.mxu0 0
    %2590 = vmatprep.subr.bf16.mxu0 0
    %2591 = vmatpush1.bf16.msra.mxu0 0
    %2592 = vmatprep.subr.bf16.mxu0 0
    %2593 = vmatpush1.bf16.msra.mxu0 0
    %2594 = vmatprep.subr.bf16.mxu0 0
    %2595 = vmatpush1.bf16.msra.mxu0 0
    %2596 = vmatprep.mubr.bf16.mxu0 0
    %2597 = vmatmul.mubr.bf16.gmra.mrb[0].mxu0 %v2562
    %v2598 = vpop.f32.mrb[0].mxu0
    %v2599 = vadd.f32 0.0, %v2598
    %v2600 = vpop.f32.mrb[0].mxu0
    %v2601 = vpop.f32.mrb[0].mxu0
    %v2602 = vpop.f32.mrb[0].mxu0
    %2603 = vdwg.mxu0
    %v2604 = vpack.c.bf16 %v2599, %v2599
    %v2606 = vsel %vm109, %v2604, 0
    %2608 = vmatprep.subr.bf16.mxu0 0
    %2609 = vmatpush1.bf16.msra.mxu0 %v388
    %2610 = vmatprep.subr.bf16.mxu0 0
    %2611 = vmatpush1.bf16.msra.mxu0 %v389
    %2612 = vmatprep.subr.bf16.mxu0 0
    %2613 = vmatpush1.bf16.msra.mxu0 0
    %2614 = vmatprep.subr.bf16.mxu0 0
    %2615 = vmatpush1.bf16.msra.mxu0 0
    %2616 = vmatprep.subr.bf16.mxu0 0
    %2617 = vmatpush1.bf16.msra.mxu0 0
    %2618 = vmatprep.subr.bf16.mxu0 0
    %2619 = vmatpush1.bf16.msra.mxu0 0
    %2620 = vmatprep.subr.bf16.mxu0 0
    %2621 = vmatpush1.bf16.msra.mxu0 0
    %2622 = vmatprep.subr.bf16.mxu0 0
    %2623 = vmatpush1.bf16.msra.mxu0 0
    %2624 = vmatprep.subr.bf16.mxu0 0
    %2625 = vmatpush1.bf16.msra.mxu0 0
    %2626 = vmatprep.subr.bf16.mxu0 0
    %2627 = vmatpush1.bf16.msra.mxu0 0
    %2628 = vmatprep.subr.bf16.mxu0 0
    %2629 = vmatpush1.bf16.msra.mxu0 0
    %2630 = vmatprep.subr.bf16.mxu0 0
    %2631 = vmatpush1.bf16.msra.mxu0 0
    %2632 = vmatprep.subr.bf16.mxu0 0
    %2633 = vmatpush1.bf16.msra.mxu0 0
    %2634 = vmatprep.subr.bf16.mxu0 0
    %2635 = vmatpush1.bf16.msra.mxu0 0
    %2636 = vmatprep.subr.bf16.mxu0 0
    %2637 = vmatpush1.bf16.msra.mxu0 0
    %2638 = vmatprep.subr.bf16.mxu0 0
    %2639 = vmatpush1.bf16.msra.mxu0 0
    %2640 = vmatprep.mubr.bf16.mxu0 0
    %2641 = vmatmul.mubr.bf16.gmra.mrb[0].mxu0 %v2606
    %v2642 = vpop.f32.mrb[0].mxu0
    %v2643 = vadd.f32 0.0, %v2642
    %v2644 = vpop.f32.mrb[0].mxu0
    %v2645 = vpop.f32.mrb[0].mxu0
    %v2646 = vpop.f32.mrb[0].mxu0
    %2647 = vdwg.mxu0
    %v2648 = vadd.f32 %v2543, %v2643
    %v2649 = vtanh.pop %v2648
    %v2650 = vmul.f32 %v2649, 10.0
    %v2651 = vmul.f32 %v2650, 1.442695
    %v2652 = vpow.pop %v2651
    %v2653 = vsel %vm440, %v2652, 0.0
    %2654 = vadd.xlane.f32.xlu0 %v2653
    %v2655 = vpop.xlane.xlu0 %2654
    %v2656 = vlog2.pop %v2655
    %v2657 = vmul.f32 %v2656, 0.6931472
    %v2658 = vsub.f32 %v2650, %v2657
    %v2659 = vld [vmem:[%s10 + $0x7] sm:$0x1]
    %v2660 = vadd.f32 %v2650, %v2659
    %v2661 = vsel %vm440, %v2660, -inf
    %2662 = vmax.xlane.f32.xlu0 %v2661
    %v2663 = vpop.xlane.xlu0 %2662
    %vm2664 = vcmp.ge.f32.partialorder %v2660, %v2663
    %v2665 = vsel %vm2664, %v155, 4
    %v2666 = vsel %vm440, %v2665, 2147483647
    %v2667 = vand.u32 %v2666, 65535
    %v2668 = vshra.s32 %v2666, 16
    %v2669 = vcvt.s32.f32 %v2667
    %v2670 = vcvt.s32.f32 %v2668
    %2671 = vmin.xlane.f32.xlu0 %v2670
    %v2672 = vpop.xlane.xlu0 %2671
    %vm2673 = vcmp.eq.f32.partialorder %v2670, %v2672
    %v2674 = vsel %vm2673, %v2669, inf
    %2675 = vmin.xlane.f32.xlu0 %v2674
    %v2676 = vpop.xlane.xlu0 %2675
    %v2677 = vcvt.f32.s32 %v2676
    %v2678 = vcvt.f32.s32 %v2672
    %v2679 = vshll.u32 %v2678, 16
    %v2680 = vadd.s32 %v2679, %v2677
    %v2681 = vrot.slane %v2680, 4
    %vm2682 = vcmp.lt.s32.totalorder %v2680, %v2681
    %v2683 = vsel %vm2682, %v2680, %v2681
    %v2684 = vrot.slane %v2683, 2
    %vm2685 = vcmp.lt.s32.totalorder %v2683, %v2684
    %v2686 = vsel %vm2685, %v2683, %v2684
    %v2687 = vrot.slane %v2686, 1
    %vm2688 = vcmp.lt.s32.totalorder %v2686, %v2687
    %v2689 = vsel %vm2688, %v2686, %v2687
    %s2690 = vtos %v2689
    %v2691 = vstv %s2690
    %vm2692 = vcmp.eq.s32.totalorder %v155, %v2691
    %v2693 = vsel %vm2692, %v2658, 0.0
    %v2694 = vsel %vm440, %v2693, 0.0
    %2695 = vadd.xlane.f32.xlu0 %v2694
    %v2696 = vpop.xlane.xlu0 %2695
    %v2697 = vrot.slane %v2696, 4
    %v2698 = vadd.f32 %v2696, %v2697
    %v2699 = vrot.slane %v2698, 2
    %v2700 = vadd.f32 %v2698, %v2699
    %v2701 = vrot.slane %v2700, 1
    %v2702 = vadd.f32 %v2700, %v2701
    %s2703 = vtos %v2702
    %vm2704 = vcmp.eq.s32.totalorder %v155, 7
    %s2705 = sld [smem:[#allocation8 + %s2690]]
    %v2706 = vld [vmem:[#allocation4] sm:$0x1]
    %v2707 = vstv %s2705
    %v2708 = vsel %vm2704, %v2707, %v2706
    %2709 = vst.msk [vmem:[#allocation4] sm:$0x1] %vm71, %v2708
    %s2710 = scalar_lea.smem [#allocation10], 7
    %2711 = sst [smem:[%s2710]] %s2690
    %s2712 = scalar_lea.smem [#allocation11], 7
    %2713 = sst [smem:[%s2712]] %s2703
    // Predicated region
    $region54: #{policy_net_forward.1} parent=1 // pred_check
      _
    $region55: #{policy_net_forward.1} parent=1 // pred_check_branch
      %2715 = sbr.rel (0) target = $region57
    $region56: #{policy_net_forward.1} parent=1 // pred_region
      %s2717 = ssub.s32 16, 16
      %2718 = vsyncadd [#allocation6], %s2717
      %2721 = dma.smem_to_hbm [#allocation10], 16, %s11, [#allocation6]
    $region57: #{policy_net_forward.1} parent=1 // pred_fallthru
      _
    // Predicated region
    $region58: #{policy_net_forward.1} parent=1 // pred_check
      _
    $region59: #{policy_net_forward.1} parent=1 // pred_check_branch
      %2723 = sbr.rel (0) target = $region61
    $region60: #{policy_net_forward.1} parent=1 // pred_region
      %s2725 = ssub.s32 16, 16
      %2726 = vsyncadd [#allocation12], %s2725
      %2729 = dma.smem_to_hbm [#allocation11], 16, %s12, [#allocation12]
    $region61: #{policy_net_forward.1} parent=1 // pred_fallthru
      _
    // Predicated region
    $region62: #{policy_net_forward.1} parent=1 // pred_check
      _
    $region63: #{policy_net_forward.1} parent=1 // pred_check_branch
      %2731 = sbr.rel (0) target = $region65
    $region64: #{policy_net_forward.1} parent=1 // pred_region
      %2732 = dma.done [#allocation6], 16
    $region65: #{policy_net_forward.1} parent=1 // pred_fallthru
      _
    // Predicated region
    $region66: #{policy_net_forward.1} parent=1 // pred_check
      _
    $region67: #{policy_net_forward.1} parent=1 // pred_check_branch
      %2734 = sbr.rel (0) target = $region69
    $region68: #{policy_net_forward.1} parent=1 // pred_region
      %2735 = dma.done [#allocation12], 16
    $region69: #{policy_net_forward.1} parent=1 // pred_fallthru
      _
    %2736 = sfence
    %2737 = vsyncpa [#allocation6], 1
    %2738 = vsyncpa [#allocation12], 1
    %2739 = vsyncpa [#allocation7], 1
    %2740 = vsyncpa [#allocation9], 1

</llo_original>
